<compile_context>
chip_gen: v7x
topology: tpu7x:2x2x1
jax: 0.10.0
libtpu: 0.0.40
codegen_flags: <defaults>
</compile_context>

<pallas_src>
import math

import jax
import jax.numpy as jnp
from jax.experimental import pallas as pl
from jax.experimental.pallas import tpu as pltpu

# ---------------- model hyper-params (small, consistent with the module) ----------------
S = 257              # tokens (dap_downsample is Linear(257, 1))
B = 2                # batch
C = 32               # d_model
D = 8                # bottleneck (only used by init; folded out of the kernel)
R = S * B            # folded row count
SCALE_ATT = 0.1      # adapter_scalar = '0.1'
SCALE_OBJ = 0.1
LN_EPS = 1e-6        # dap_norm_att / dap_norm_obj eps


# ---------------- Pallas kernel: whole AdapterAO forward in one invocation --------------
def adapter_ao_kernel(x_ref, slab_ref, wsel_ref, out_ref, prompt_ref):
    # x_ref:      (R, C)      flattened (S, B, C), row = s*B + b
    # slab_ref:   (C+8, 2C)   rows 0:C   = w_eff = w_down @ [w_up_att | w_up_obj]
    #                         row  C     = b_eff = b_down @ [w_up_att|w_up_obj] + [b_up_att|b_up_obj]
    #                         row  C+1   = [gamma_att | gamma_obj]
    #                         row  C+2   = [(Σw_da)*beta_att + b_da | (Σw_do)*beta_obj + b_do]
    #                         rows C+3.. = zero padding (sublane alignment)
    # wsel_ref:   (2B, R)     rows 0:B  = att token-weight/selection matrix
    #                         rows B:2B = obj token-weight/selection matrix
    # out_ref:    (R, C)      adapter output (residual added)
    # prompt_ref: (2B, C)     rows 0:B = prompt_att, rows B:2B = prompt_obj
    R_, C_ = x_ref.shape
    B_ = prompt_ref.shape[0] // 2

    x = x_ref[...]                                    # (R, C)
    slab = slab_ref[...]                              # (C+8, 2C)
    W = wsel_ref[...]                                 # (2B, R)

    w_eff = slab[0:C_, :]                             # (C, 2C)
    b_eff = slab[C_:C_ + 1, :]                        # (1, 2C)
    gamma = slab[C_ + 1:C_ + 2, :]                    # (1, 2C)
    p_bias = slab[C_ + 2:C_ + 3, :]                   # (1, 2C)

    # fused down_proj -> {up_proj_att, up_proj_obj}   (module never applies its ReLU)
    up = jnp.dot(x, w_eff, preferred_element_type=jnp.float32) + b_eff   # (R, 2C)
    up_att = up[:, 0:C_]
    up_obj = up[:, C_:2 * C_]

    # output = residual + scale_att*up_att + scale_obj*up_obj
    out_ref[...] = (x + SCALE_ATT * up_att + SCALE_OBJ * up_obj).astype(out_ref.dtype)

    # dap_norm_{att,obj}: LayerNorm over channels, gamma/beta deferred past downsample
    def _norm(z):
        mu = jnp.mean(z, axis=-1, keepdims=True)
        zc = z - mu
        var = jnp.mean(zc * zc, axis=-1, keepdims=True)
        return zc * jax.lax.rsqrt(var + LN_EPS)

    nrm = jnp.concatenate([_norm(up_att), _norm(up_obj)], axis=-1)       # (R, 2C)

    # dap_downsample_{att,obj}: one fused (2B, R) @ (R, 2C) MXU matmul; take the two
    # diagonal blocks, then apply gamma and the folded (Σw)*beta + bias term.
    pr = jnp.dot(W, nrm, preferred_element_type=jnp.float32)             # (2B, 2C)
    p_att = pr[0:B_, 0:C_] * gamma[:, 0:C_] + p_bias[:, 0:C_]            # (B, C)
    p_obj = pr[B_:2 * B_, C_:2 * C_] * gamma[:, C_:2 * C_] + p_bias[:, C_:2 * C_]
    prompt_ref[...] = jnp.concatenate([p_att, p_obj], axis=0).astype(prompt_ref.dtype)


# ---------------- wrapper: parameter folding/packing + pallas_call ----------------------
@jax.jit
def adapter_ao_forward(x, params):
    """x: (S, B, C) f32. Returns (output, adapter_prompt, prompt_att_sq, prompt_obj_sq)."""
    (w_down, b_down, w_up_att, b_up_att, w_up_obj, b_up_obj,
     g_att, be_att, g_obj, be_obj, w_da, b_da, w_do, b_do) = params

    S_, B_, C_ = x.shape
    R_ = S_ * B_
    x2 = x.reshape(R_, C_)                            # row = s*B + b

    # --- fold the linear chain: down_proj -> up_proj_{att,obj} ---------------------------
    w_up = jnp.concatenate([w_up_att, w_up_obj], axis=1)      # (D, 2C)
    b_up = jnp.concatenate([b_up_att, b_up_obj])              # (2C,)
    w_eff = w_down @ w_up                                     # (C, 2C)
    b_eff = b_down @ w_up + b_up                              # (2C,)

    # --- dap token weights, with the module's token-drop branch (keep 0 and 3:) ----------
    def full_token_weights(w):                                # w: (257,) -> (S,)
        if S_ == 257:
            return w
        wf = jnp.zeros((S_,), jnp.float32)
        wf = wf.at[0].set(w[0])
        wf = wf.at[3:].set(w[1:])
        return wf

    w_da_full = full_token_weights(w_da)
    w_do_full = full_token_weights(w_do)

    # fold LayerNorm beta + downsample bias: (Σ_s w[s]) * beta + b_dap
    pb_att = jnp.sum(w_da_full) * be_att + b_da               # (C,)
    pb_obj = jnp.sum(w_do_full) * be_obj + b_do               # (C,)

    slab = jnp.zeros((C_ + 8, 2 * C_), jnp.float32)
    slab = slab.at[0:C_, :].set(w_eff)
    slab = slab.at[C_, :].set(b_eff)
    slab = slab.at[C_ + 1, :].set(jnp.concatenate([g_att, g_obj]))
    slab = slab.at[C_ + 2, :].set(jnp.concatenate([pb_att, pb_obj]))

    # selection/weight matrices: [b', s*B + b] = w[s] * (b == b')
    eye_b = jnp.eye(B_, dtype=jnp.float32)

    def sel(wf):                                              # (S,) -> (B, R)
        return (wf[None, :, None] * eye_b[:, None, :]).reshape(B_, R_)

    wsel = jnp.concatenate([sel(w_da_full), sel(w_do_full)], axis=0)     # (2B, R)

    vmem = pl.BlockSpec(memory_space=pltpu.MemorySpace.VMEM)
    out2, prompts = pl.pallas_call(
        adapter_ao_kernel,
        out_shape=(jax.ShapeDtypeStruct((R_, C_), jnp.float32),
                   jax.ShapeDtypeStruct((2 * B_, C_), jnp.float32)),
        in_specs=[vmem, vmem, vmem],
        out_specs=(vmem, vmem),
    )(x2, slab, wsel)

    output = out2.reshape(S_, B_, C_)
    adapter_prompt = prompts.reshape(2, B_, C_)       # cat([att (1,B,C), obj (1,B,C)], dim=0)
    prompt_att_sq = adapter_prompt[0]                 # proj_out_att = Identity; squeeze -> (B, C)
    prompt_obj_sq = adapter_prompt[1]
    return output, adapter_prompt, prompt_att_sq, prompt_obj_sq


# ---------------- pure-JAX reference (mirrors the PyTorch forward) ----------------------
def reference_forward(x, params):
    (w_down, b_down, w_up_att, b_up_att, w_up_obj, b_up_obj,
     g_att, be_att, g_obj, be_obj, w_da, b_da, w_do, b_do) = params

    down = x @ w_down + b_down
    up_att = down @ w_up_att + b_up_att
    up_obj = down @ w_up_obj + b_up_obj
    up = up_att * SCALE_ATT + up_obj * SCALE_OBJ
    output = up + x                                   # residual = x

    if x.shape[0] == 257:
        ua, uo = up_att, up_obj
    else:
        ua = jnp.concatenate([up_att[:1], up_att[3:]], axis=0)
        uo = jnp.concatenate([up_obj[:1], up_obj[3:]], axis=0)

    def ln(z, g, b):
        mu = jnp.mean(z, -1, keepdims=True)
        var = jnp.mean((z - mu) ** 2, -1, keepdims=True)
        return (z - mu) / jnp.sqrt(var + LN_EPS) * g + b

    ta = ln(ua, g_att, be_att).transpose(1, 2, 0)     # (B, C, 257)
    to = ln(uo, g_obj, be_obj).transpose(1, 2, 0)
    pa = ta @ w_da + b_da                             # (B, C)
    po = to @ w_do + b_do
    adapter_prompt = jnp.concatenate([pa[None], po[None]], axis=0)   # (2, B, C)
    return output, adapter_prompt, pa, po


# ---------------- deterministic parameter init ------------------------------------------
def init_params(key):
    # NOTE: the module zero-inits up_proj_* and dap_downsample_att ('lora' init); random
    # values are used here so the numerical check is non-trivial. Forward semantics are
    # independent of the init values.
    def u(k, shape, fan_in):
        bound = 1.0 / math.sqrt(fan_in)
        return jax.random.uniform(k, shape, jnp.float32, -bound, bound)

    ks = jax.random.split(key, 14)
    w_down = u(ks[0], (C, D), C)
    b_down = u(ks[1], (D,), C)
    w_up_att = u(ks[2], (D, C), D)
    b_up_att = u(ks[3], (C,), D)
    w_up_obj = u(ks[4], (D, C), D)
    b_up_obj = u(ks[5], (C,), D)
    g_att = 1.0 + 0.02 * jax.random.normal(ks[6], (C,), jnp.float32)
    be_att = 0.02 * jax.random.normal(ks[7], (C,), jnp.float32)
    g_obj = 1.0 + 0.02 * jax.random.normal(ks[8], (C,), jnp.float32)
    be_obj = 0.02 * jax.random.normal(ks[9], (C,), jnp.float32)
    w_da = u(ks[10], (257,), 257)
    b_da = u(ks[11], (), 257)
    w_do = u(ks[12], (257,), 257)
    b_do = u(ks[13], (), 257)
    return (w_down, b_down, w_up_att, b_up_att, w_up_obj, b_up_obj,
            g_att, be_att, g_obj, be_obj, w_da, b_da, w_do, b_do)


if __name__ == "__main__":
    key = jax.random.PRNGKey(0)
    kx, kp = jax.random.split(key)
    x = jax.random.normal(kx, (S, B, C), jnp.float32)
    params = init_params(kp)

    outs = adapter_ao_forward(x, params)
    outs = jax.block_until_ready(outs)

    refs = reference_forward(x, params)
    names = ["output", "adapter_prompt", "prompt_att", "prompt_obj"]
    for o, r, nm in zip(outs, refs, names):
        assert o.shape == r.shape, f"{nm}: shape {o.shape} vs {r.shape}"
        err = jnp.max(jnp.abs(o - r))
        assert jnp.allclose(o, r, atol=1e-3, rtol=1e-3), f"{nm}: max abs err {err}"
    print("KERNEL_OK")
</pallas_src>

<mosaic_0001>
module attributes {stable_mosaic.version = 11 : i64} {
  func.func @adapter_ao_kernel(%arg0: memref<514x32xf32, #tpu.memory_space<vmem>>, %arg1: memref<40x64xf32, #tpu.memory_space<vmem>>, %arg2: memref<4x514xf32, #tpu.memory_space<vmem>>, %arg3: memref<514x32xf32, #tpu.memory_space<vmem>>, %arg4: memref<4x32xf32, #tpu.memory_space<vmem>>) attributes {dimension_semantics = [], scalar_prefetch = 0 : i64, scratch_operands = 0 : i64, tpu.core_type = #tpu.core_type<tc>} {
    %c0 = arith.constant 0 : index
    %c0_0 = arith.constant 0 : index
    %0 = vector.load %arg0[%c0, %c0_0] : memref<514x32xf32, #tpu.memory_space<vmem>>, vector<514x32xf32>
    %c0_1 = arith.constant 0 : index
    %c0_2 = arith.constant 0 : index
    %1 = vector.load %arg1[%c0_1, %c0_2] : memref<40x64xf32, #tpu.memory_space<vmem>>, vector<40x64xf32>
    %c0_3 = arith.constant 0 : index
    %c0_4 = arith.constant 0 : index
    %2 = vector.load %arg2[%c0_3, %c0_4] : memref<4x514xf32, #tpu.memory_space<vmem>>, vector<4x514xf32>
    %3 = vector.extract_strided_slice %1 {offsets = [0, 0], sizes = [32, 64], strides = [1, 1]} : vector<40x64xf32> to vector<32x64xf32>
    %4 = vector.extract_strided_slice %1 {offsets = [32, 0], sizes = [1, 64], strides = [1, 1]} : vector<40x64xf32> to vector<1x64xf32>
    %5 = vector.extract_strided_slice %1 {offsets = [33, 0], sizes = [1, 64], strides = [1, 1]} : vector<40x64xf32> to vector<1x64xf32>
    %6 = vector.extract_strided_slice %1 {offsets = [34, 0], sizes = [1, 64], strides = [1, 1]} : vector<40x64xf32> to vector<1x64xf32>
    %cst = arith.constant dense<0.000000e+00> : vector<514x64xf32>
    %7 = tpu.matmul %0, %3, %cst {dimension_numbers = #tpu.dot_dimension_numbers<[1], [0], [0], [1], [0, 0, 1, 1], [], []>} : vector<514x32xf32>, vector<32x64xf32>, vector<514x64xf32> -> vector<514x64xf32>
    %8 = vector.broadcast %4 : vector<1x64xf32> to vector<514x64xf32>
    %9 = arith.addf %7, %8 : vector<514x64xf32>
    %10 = vector.extract_strided_slice %9 {offsets = [0, 0], sizes = [514, 32], strides = [1, 1]} : vector<514x64xf32> to vector<514x32xf32>
    %11 = vector.extract_strided_slice %9 {offsets = [0, 32], sizes = [514, 32], strides = [1, 1]} : vector<514x64xf32> to vector<514x32xf32>
    %cst_5 = arith.constant 1.000000e-01 : f32
    %12 = vector.broadcast %cst_5 : f32 to vector<514x32xf32>
    %13 = arith.mulf %12, %10 : vector<514x32xf32>
    %14 = arith.addf %0, %13 : vector<514x32xf32>
    %cst_6 = arith.constant 1.000000e-01 : f32
    %15 = vector.broadcast %cst_6 : f32 to vector<514x32xf32>
    %16 = arith.mulf %15, %11 : vector<514x32xf32>
    %17 = arith.addf %14, %16 : vector<514x32xf32>
    %c0_7 = arith.constant 0 : index
    %c0_8 = arith.constant 0 : index
    %18 = vector.load %arg3[%c0_7, %c0_8] : memref<514x32xf32, #tpu.memory_space<vmem>>, vector<514x32xf32>
    tpu.vector_store %arg3[%c0_7, %c0_8], %17 {strides = array<i32>} : memref<514x32xf32, #tpu.memory_space<vmem>>, vector<514x32xf32>,
    %cst_9 = arith.constant dense<0.000000e+00> : vector<514xf32>
    %19 = vector.multi_reduction <add>, %10, %cst_9 [1] : vector<514x32xf32> to vector<514xf32>
    %20 = vector.shape_cast %19 : vector<514xf32> to vector<514x1xf32>
    %cst_10 = arith.constant 3.200000e+01 : f32
    %21 = vector.broadcast %cst_10 : f32 to vector<514x1xf32>
    %22 = arith.divf %20, %21 : vector<514x1xf32>
    %23 = vector.broadcast %22 : vector<514x1xf32> to vector<514x32xf32>
    %24 = arith.subf %10, %23 : vector<514x32xf32>
    %25 = arith.mulf %24, %24 : vector<514x32xf32>
    %cst_11 = arith.constant dense<0.000000e+00> : vector<514xf32>
    %26 = vector.multi_reduction <add>, %25, %cst_11 [1] : vector<514x32xf32> to vector<514xf32>
    %27 = vector.shape_cast %26 : vector<514xf32> to vector<514x1xf32>
    %cst_12 = arith.constant 3.200000e+01 : f32
    %28 = vector.broadcast %cst_12 : f32 to vector<514x1xf32>
    %29 = arith.divf %27, %28 : vector<514x1xf32>
    %cst_13 = arith.constant 9.99999997E-7 : f32
    %30 = vector.broadcast %cst_13 : f32 to vector<514x1xf32>
    %31 = arith.addf %29, %30 : vector<514x1xf32>
    %32 = math.rsqrt %31 : vector<514x1xf32>
    %33 = vector.broadcast %32 : vector<514x1xf32> to vector<514x32xf32>
    %34 = arith.mulf %24, %33 : vector<514x32xf32>
    %cst_14 = arith.constant dense<0.000000e+00> : vector<514xf32>
    %35 = vector.multi_reduction <add>, %11, %cst_14 [1] : vector<514x32xf32> to vector<514xf32>
    %36 = vector.shape_cast %35 : vector<514xf32> to vector<514x1xf32>
    %cst_15 = arith.constant 3.200000e+01 : f32
    %37 = vector.broadcast %cst_15 : f32 to vector<514x1xf32>
    %38 = arith.divf %36, %37 : vector<514x1xf32>
    %39 = vector.broadcast %38 : vector<514x1xf32> to vector<514x32xf32>
    %40 = arith.subf %11, %39 : vector<514x32xf32>
    %41 = arith.mulf %40, %40 : vector<514x32xf32>
    %cst_16 = arith.constant dense<0.000000e+00> : vector<514xf32>
    %42 = vector.multi_reduction <add>, %41, %cst_16 [1] : vector<514x32xf32> to vector<514xf32>
    %43 = vector.shape_cast %42 : vector<514xf32> to vector<514x1xf32>
    %cst_17 = arith.constant 3.200000e+01 : f32
    %44 = vector.broadcast %cst_17 : f32 to vector<514x1xf32>
    %45 = arith.divf %43, %44 : vector<514x1xf32>
    %cst_18 = arith.constant 9.99999997E-7 : f32
    %46 = vector.broadcast %cst_18 : f32 to vector<514x1xf32>
    %47 = arith.addf %45, %46 : vector<514x1xf32>
    %48 = math.rsqrt %47 : vector<514x1xf32>
    %49 = vector.broadcast %48 : vector<514x1xf32> to vector<514x32xf32>
    %50 = arith.mulf %40, %49 : vector<514x32xf32>
    %51 = tpu.concatenate %34, %50 in 1 : vector<514x32xf32>, vector<514x32xf32> -> vector<514x64xf32>
    %cst_19 = arith.constant dense<0.000000e+00> : vector<4x64xf32>
    %52 = tpu.matmul %2, %51, %cst_19 {dimension_numbers = #tpu.dot_dimension_numbers<[1], [0], [0], [1], [0, 0, 1, 1], [], []>} : vector<4x514xf32>, vector<514x64xf32>, vector<4x64xf32> -> vector<4x64xf32>
    %53 = vector.extract_strided_slice %52 {offsets = [0, 0], sizes = [2, 32], strides = [1, 1]} : vector<4x64xf32> to vector<2x32xf32>
    %54 = vector.extract_strided_slice %5 {offsets = [0, 0], sizes = [1, 32], strides = [1, 1]} : vector<1x64xf32> to vector<1x32xf32>
    %55 = vector.broadcast %54 : vector<1x32xf32> to vector<2x32xf32>
    %56 = arith.mulf %53, %55 : vector<2x32xf32>
    %57 = vector.extract_strided_slice %6 {offsets = [0, 0], sizes = [1, 32], strides = [1, 1]} : vector<1x64xf32> to vector<1x32xf32>
    %58 = vector.broadcast %57 : vector<1x32xf32> to vector<2x32xf32>
    %59 = arith.addf %56, %58 : vector<2x32xf32>
    %60 = vector.extract_strided_slice %52 {offsets = [2, 32], sizes = [2, 32], strides = [1, 1]} : vector<4x64xf32> to vector<2x32xf32>
    %61 = vector.extract_strided_slice %5 {offsets = [0, 32], sizes = [1, 32], strides = [1, 1]} : vector<1x64xf32> to vector<1x32xf32>
    %62 = vector.broadcast %61 : vector<1x32xf32> to vector<2x32xf32>
    %63 = arith.mulf %60, %62 : vector<2x32xf32>
    %64 = vector.extract_strided_slice %6 {offsets = [0, 32], sizes = [1, 32], strides = [1, 1]} : vector<1x64xf32> to vector<1x32xf32>
    %65 = vector.broadcast %64 : vector<1x32xf32> to vector<2x32xf32>
    %66 = arith.addf %63, %65 : vector<2x32xf32>
    %67 = tpu.concatenate %59, %66 in 0 : vector<2x32xf32>, vector<2x32xf32> -> vector<4x32xf32>
    %c0_20 = arith.constant 0 : index
    %c0_21 = arith.constant 0 : index
    %68 = vector.load %arg4[%c0_20, %c0_21] : memref<4x32xf32, #tpu.memory_space<vmem>>, vector<4x32xf32>
    tpu.vector_store %arg4[%c0_20, %c0_21], %67 {strides = array<i32>} : memref<4x32xf32, #tpu.memory_space<vmem>>, vector<4x32xf32>,
    return
  }
}

</mosaic_0001>

<llo_original>
// kernel: adapter_ao_forward.1
$region0: #{adapter_ao_forward.1}
  #allocation0 [shape = 'u32[]', space=smem, size = 0x4, offset = 0x4, fixed_abs, tag = 'smem constant byte address 0x4 - core index']
  #allocation1 [shape = 'u32[144,128]{1,0:T(1,128)}', space=vmem, size = 0x12000, scoped, tag = 'internal scratch']
  %s0 = inlined_call_operand.vmem [shape: f32[514,32], index: 0, kind: input, shape index: {}]
  %s1 = inlined_call_operand.vmem [shape: f32[40,64], index: 1, kind: input, shape index: {}]
  %s2 = inlined_call_operand.vmem [shape: f32[4,514], index: 2, kind: input, shape index: {}]
  %s3 = inlined_call_operand.vmem [shape: f32[514,32], index: 3, kind: output, shape index: {0}]
  %s4 = inlined_call_operand.vmem [shape: f32[4,32], index: 4, kind: output, shape index: {1}]
  %5 = xla_tuple %s3, %s4
  %s6 = sld [smem:[#allocation0]]
  $region30: #{adapter_ao_forward.1} parent=0
    _
  %s8 = ssub.s32 1, %s6
  %s9 = scalar_select 0, %s8, %s6
  // Predicated region
  $region2: #{adapter_ao_forward.1} parent=0 // pred_check
    _
  $region3: #{adapter_ao_forward.1} parent=0 // pred_check_branch
    %11 = sbr.rel (0) target = $region5
  $region4: #{adapter_ao_forward.1} parent=0 // pred_region
    _
  $region5: #{adapter_ao_forward.1} parent=0 // pred_fallthru
    _
  // Predicated region
  $region6: #{adapter_ao_forward.1} parent=0 // pred_check
    _
  $region7: #{adapter_ao_forward.1} parent=0 // pred_check_branch
    %13 = sbr.rel (0) target = $region9
  $region8: #{adapter_ao_forward.1} parent=0 // pred_region
    _
  $region9: #{adapter_ao_forward.1} parent=0 // pred_fallthru
    _
  // Predicated region
  $region10: #{adapter_ao_forward.1} parent=0 // pred_check
    _
  $region11: #{adapter_ao_forward.1} parent=0 // pred_check_branch
    %15 = sbr.rel (0) target = $region13
  $region12: #{adapter_ao_forward.1} parent=0 // pred_region
    _
  $region13: #{adapter_ao_forward.1} parent=0 // pred_fallthru
    _
  %v16 = vld [vmem:[%s0] sm:$0xff]
  %v17 = vld [vmem:[%s0 + $0x8] sm:$0xff]
  %v18 = vld [vmem:[%s0 + $0x10] sm:$0xff]
  %v19 = vld [vmem:[%s0 + $0x18] sm:$0xff]
  %v20 = vld [vmem:[%s0 + $0x20] sm:$0xff]
  %v21 = vld [vmem:[%s0 + $0x28] sm:$0xff]
  %v22 = vld [vmem:[%s0 + $0x30] sm:$0xff]
  %v23 = vld [vmem:[%s0 + $0x38] sm:$0xff]
  %v24 = vld [vmem:[%s0 + $0x40] sm:$0xff]
  %v25 = vld [vmem:[%s0 + $0x48] sm:$0xff]
  %v26 = vld [vmem:[%s0 + $0x50] sm:$0xff]
  %v27 = vld [vmem:[%s0 + $0x58] sm:$0xff]
  %v28 = vld [vmem:[%s0 + $0x60] sm:$0xff]
  %v29 = vld [vmem:[%s0 + $0x68] sm:$0xff]
  %v30 = vld [vmem:[%s0 + $0x70] sm:$0xff]
  %v31 = vld [vmem:[%s0 + $0x78] sm:$0xff]
  %v32 = vld [vmem:[%s0 + $0x80] sm:$0xff]
  %v33 = vld [vmem:[%s0 + $0x88] sm:$0xff]
  %v34 = vld [vmem:[%s0 + $0x90] sm:$0xff]
  %v35 = vld [vmem:[%s0 + $0x98] sm:$0xff]
  %v36 = vld [vmem:[%s0 + $0xa0] sm:$0xff]
  %v37 = vld [vmem:[%s0 + $0xa8] sm:$0xff]
  %v38 = vld [vmem:[%s0 + $0xb0] sm:$0xff]
  %v39 = vld [vmem:[%s0 + $0xb8] sm:$0xff]
  %v40 = vld [vmem:[%s0 + $0xc0] sm:$0xff]
  %v41 = vld [vmem:[%s0 + $0xc8] sm:$0xff]
  %v42 = vld [vmem:[%s0 + $0xd0] sm:$0xff]
  %v43 = vld [vmem:[%s0 + $0xd8] sm:$0xff]
  %v44 = vld [vmem:[%s0 + $0xe0] sm:$0xff]
  %v45 = vld [vmem:[%s0 + $0xe8] sm:$0xff]
  %v46 = vld [vmem:[%s0 + $0xf0] sm:$0xff]
  %v47 = vld [vmem:[%s0 + $0xf8] sm:$0xff]
  %v48 = vld [vmem:[%s0 + $0x100] sm:$0xff]
  %v49 = vld [vmem:[%s0 + $0x108] sm:$0xff]
  %v50 = vld [vmem:[%s0 + $0x110] sm:$0xff]
  %v51 = vld [vmem:[%s0 + $0x118] sm:$0xff]
  %v52 = vld [vmem:[%s0 + $0x120] sm:$0xff]
  %v53 = vld [vmem:[%s0 + $0x128] sm:$0xff]
  %v54 = vld [vmem:[%s0 + $0x130] sm:$0xff]
  %v55 = vld [vmem:[%s0 + $0x138] sm:$0xff]
  %v56 = vld [vmem:[%s0 + $0x140] sm:$0xff]
  %v57 = vld [vmem:[%s0 + $0x148] sm:$0xff]
  %v58 = vld [vmem:[%s0 + $0x150] sm:$0xff]
  %v59 = vld [vmem:[%s0 + $0x158] sm:$0xff]
  %v60 = vld [vmem:[%s0 + $0x160] sm:$0xff]
  %v61 = vld [vmem:[%s0 + $0x168] sm:$0xff]
  %v62 = vld [vmem:[%s0 + $0x170] sm:$0xff]
  %v63 = vld [vmem:[%s0 + $0x178] sm:$0xff]
  %v64 = vld [vmem:[%s0 + $0x180] sm:$0xff]
  %v65 = vld [vmem:[%s0 + $0x188] sm:$0xff]
  %v66 = vld [vmem:[%s0 + $0x190] sm:$0xff]
  %v67 = vld [vmem:[%s0 + $0x198] sm:$0xff]
  %v68 = vld [vmem:[%s0 + $0x1a0] sm:$0xff]
  %v69 = vld [vmem:[%s0 + $0x1a8] sm:$0xff]
  %v70 = vld [vmem:[%s0 + $0x1b0] sm:$0xff]
  %v71 = vld [vmem:[%s0 + $0x1b8] sm:$0xff]
  %v72 = vld [vmem:[%s0 + $0x1c0] sm:$0xff]
  %v73 = vld [vmem:[%s0 + $0x1c8] sm:$0xff]
  %v74 = vld [vmem:[%s0 + $0x1d0] sm:$0xff]
  %v75 = vld [vmem:[%s0 + $0x1d8] sm:$0xff]
  %v76 = vld [vmem:[%s0 + $0x1e0] sm:$0xff]
  %v77 = vld [vmem:[%s0 + $0x1e8] sm:$0xff]
  %v78 = vld [vmem:[%s0 + $0x1f0] sm:$0xff]
  %v79 = vld [vmem:[%s0 + $0x1f8] sm:$0xff]
  %v80 = vld [vmem:[%s0 + $0x200] sm:$0x3]
  %v81 = vld [vmem:[%s1] sm:$0xff]
  %v82 = vld [vmem:[%s1 + $0x8] sm:$0xff]
  %v83 = vld [vmem:[%s1 + $0x10] sm:$0xff]
  %v84 = vld [vmem:[%s1 + $0x18] sm:$0xff]
  %v85 = vld [vmem:[%s1 + $0x20] sm:$0xff]
  %v86 = vld [vmem:[%s2] sm:$0xff]
  %v87 = vld [vmem:[%s2 + $0x8] sm:$0xff]
  %v88 = vld [vmem:[%s2 + $0x10] sm:$0xf]
  %v89 = vlaneseq
  %v90 = vshrl.u32 %v89, 7
  %v91 = vsub.s32 0, %v90
  %v92 = vrot.slane %v85, %v91
  %vm93 = vcmask 261120
  %v95 = vsel %vm93, %v16, 0
  %v98 = vsel %vm93, %v17, 0
  %v101 = vsel %vm93, %v18, 0
  %v104 = vsel %vm93, %v19, 0
  %v107 = vsel %vm93, %v20, 0
  %v110 = vsel %vm93, %v21, 0
  %v113 = vsel %vm93, %v22, 0
  %v116 = vsel %vm93, %v23, 0
  %v119 = vsel %vm93, %v24, 0
  %v122 = vsel %vm93, %v25, 0
  %v125 = vsel %vm93, %v26, 0
  %v128 = vsel %vm93, %v27, 0
  %v131 = vsel %vm93, %v28, 0
  %v134 = vsel %vm93, %v29, 0
  %v137 = vsel %vm93, %v30, 0
  %v140 = vsel %vm93, %v31, 0
  %v143 = vsel %vm93, %v32, 0
  %v146 = vsel %vm93, %v33, 0
  %v149 = vsel %vm93, %v34, 0
  %v152 = vsel %vm93, %v35, 0
  %v155 = vsel %vm93, %v36, 0
  %v158 = vsel %vm93, %v37, 0
  %v161 = vsel %vm93, %v38, 0
  %v164 = vsel %vm93, %v39, 0
  %v167 = vsel %vm93, %v40, 0
  %v170 = vsel %vm93, %v41, 0
  %v173 = vsel %vm93, %v42, 0
  %v176 = vsel %vm93, %v43, 0
  %v179 = vsel %vm93, %v44, 0
  %v182 = vsel %vm93, %v45, 0
  %v185 = vsel %vm93, %v46, 0
  %v188 = vsel %vm93, %v47, 0
  %v191 = vsel %vm93, %v48, 0
  %v194 = vsel %vm93, %v49, 0
  %v197 = vsel %vm93, %v50, 0
  %v200 = vsel %vm93, %v51, 0
  %v203 = vsel %vm93, %v52, 0
  %v206 = vsel %vm93, %v53, 0
  %v209 = vsel %vm93, %v54, 0
  %v212 = vsel %vm93, %v55, 0
  %v215 = vsel %vm93, %v56, 0
  %v218 = vsel %vm93, %v57, 0
  %v221 = vsel %vm93, %v58, 0
  %v224 = vsel %vm93, %v59, 0
  %v227 = vsel %vm93, %v60, 0
  %v230 = vsel %vm93, %v61, 0
  %v233 = vsel %vm93, %v62, 0
  %v236 = vsel %vm93, %v63, 0
  %v239 = vsel %vm93, %v64, 0
  %v242 = vsel %vm93, %v65, 0
  %v245 = vsel %vm93, %v66, 0
  %v248 = vsel %vm93, %v67, 0
  %v251 = vsel %vm93, %v68, 0
  %v254 = vsel %vm93, %v69, 0
  %v257 = vsel %vm93, %v70, 0
  %v260 = vsel %vm93, %v71, 0
  %v263 = vsel %vm93, %v72, 0
  %v266 = vsel %vm93, %v73, 0
  %v269 = vsel %vm93, %v74, 0
  %v272 = vsel %vm93, %v75, 0
  %v275 = vsel %vm93, %v76, 0
  %v278 = vsel %vm93, %v77, 0
  %v281 = vsel %vm93, %v78, 0
  %v284 = vsel %vm93, %v79, 0
  %v287 = vsel %vm93, %v80, 0
  %289 = vmatprep.subr.mxu0 0.0
  %290 = vmatpush1.msra.mxu0 %v81
  %291 = vmatprep.subr.mxu0 0.0
  %292 = vmatpush1.msra.mxu0 %v82
  %293 = vmatprep.subr.mxu0 0.0
  %294 = vmatpush1.msra.mxu0 %v83
  %295 = vmatprep.subr.mxu0 0.0
  %296 = vmatpush1.msra.mxu0 %v84
  %297 = vmatprep.subr.mxu0 0.0
  %298 = vmatpush1.msra.mxu0 0.0
  %299 = vmatprep.subr.mxu0 0.0
  %300 = vmatpush1.msra.mxu0 0.0
  %301 = vmatprep.subr.mxu0 0.0
  %302 = vmatpush1.msra.mxu0 0.0
  %303 = vmatprep.subr.mxu0 0.0
  %304 = vmatpush1.msra.mxu0 0.0
  %305 = vmatprep.subr.mxu0 0.0
  %306 = vmatpush1.msra.mxu0 0.0
  %307 = vmatprep.subr.mxu0 0.0
  %308 = vmatpush1.msra.mxu0 0.0
  %309 = vmatprep.subr.mxu0 0.0
  %310 = vmatpush1.msra.mxu0 0.0
  %311 = vmatprep.subr.mxu0 0.0
  %312 = vmatpush1.msra.mxu0 0.0
  %313 = vmatprep.subr.mxu0 0.0
  %314 = vmatpush1.msra.mxu0 0.0
  %315 = vmatprep.subr.mxu0 0.0
  %316 = vmatpush1.msra.mxu0 0.0
  %317 = vmatprep.subr.mxu0 0.0
  %318 = vmatpush1.msra.mxu0 0.0
  %319 = vmatprep.subr.mxu0 0.0
  %320 = vmatpush1.msra.mxu0 0.0
  %321 = vmatprep.subr.mxu0 0.0
  %322 = vmatpush1.msra.mxu0 0.0
  %323 = vmatprep.subr.mxu0 0.0
  %324 = vmatpush1.msra.mxu0 0.0
  %325 = vmatprep.subr.mxu0 0.0
  %326 = vmatpush1.msra.mxu0 0.0
  %327 = vmatprep.subr.mxu0 0.0
  %328 = vmatpush1.msra.mxu0 0.0
  %329 = vmatprep.subr.mxu0 0.0
  %330 = vmatpush1.msra.mxu0 0.0
  %331 = vmatprep.subr.mxu0 0.0
  %332 = vmatpush1.msra.mxu0 0.0
  %333 = vmatprep.subr.mxu0 0.0
  %334 = vmatpush1.msra.mxu0 0.0
  %335 = vmatprep.subr.mxu0 0.0
  %336 = vmatpush1.msra.mxu0 0.0
  %337 = vmatprep.subr.mxu0 0.0
  %338 = vmatpush1.msra.mxu0 0.0
  %339 = vmatprep.subr.mxu0 0.0
  %340 = vmatpush1.msra.mxu0 0.0
  %341 = vmatprep.subr.mxu0 0.0
  %342 = vmatpush1.msra.mxu0 0.0
  %343 = vmatprep.subr.mxu0 0.0
  %344 = vmatpush1.msra.mxu0 0.0
  %345 = vmatprep.subr.mxu0 0.0
  %346 = vmatpush1.msra.mxu0 0.0
  %347 = vmatprep.subr.mxu0 0.0
  %348 = vmatpush1.msra.mxu0 0.0
  %349 = vmatprep.subr.mxu0 0.0
  %350 = vmatpush1.msra.mxu0 0.0
  %351 = vmatprep.subr.mxu0 0.0
  %352 = vmatpush1.msra.mxu0 0.0
  %353 = vmatprep.mubr.f32.mxu0 0.0
  %354 = vmatmul.mubr.f32.gmra.mrb[0].mxu0 %v95
  %v355 = vpop.f32.mrb[0].mxu0
  %v356 = vadd.f32 %v92, %v355
  %v357 = vpop.f32.mrb[0].mxu0
  %358 = vmatprep.mubr.f32.mxu0 0.0
  %359 = vmatmul.mubr.f32.gmra.mrb[0].mxu0 %v98
  %v360 = vpop.f32.mrb[0].mxu0
  %v361 = vadd.f32 %v92, %v360
  %v362 = vpop.f32.mrb[0].mxu0
  %363 = vmatprep.mubr.f32.mxu0 0.0
  %364 = vmatmul.mubr.f32.gmra.mrb[0].mxu0 %v101
  %v365 = vpop.f32.mrb[0].mxu0
  %v366 = vadd.f32 %v92, %v365
  %v367 = vpop.f32.mrb[0].mxu0
  %368 = vmatprep.mubr.f32.mxu0 0.0
  %369 = vmatmul.mubr.f32.gmra.mrb[0].mxu0 %v104
  %v370 = vpop.f32.mrb[0].mxu0
  %v371 = vadd.f32 %v92, %v370
  %v372 = vpop.f32.mrb[0].mxu0
  %373 = vmatprep.mubr.f32.mxu0 0.0
  %374 = vmatmul.mubr.f32.gmra.mrb[0].mxu0 %v107
  %v375 = vpop.f32.mrb[0].mxu0
  %v376 = vadd.f32 %v92, %v375
  %v377 = vpop.f32.mrb[0].mxu0
  %378 = vmatprep.mubr.f32.mxu0 0.0
  %379 = vmatmul.mubr.f32.gmra.mrb[0].mxu0 %v110
  %v380 = vpop.f32.mrb[0].mxu0
  %v381 = vadd.f32 %v92, %v380
  %v382 = vpop.f32.mrb[0].mxu0
  %383 = vmatprep.mubr.f32.mxu0 0.0
  %384 = vmatmul.mubr.f32.gmra.mrb[0].mxu0 %v113
  %v385 = vpop.f32.mrb[0].mxu0
  %v386 = vadd.f32 %v92, %v385
  %v387 = vpop.f32.mrb[0].mxu0
  %388 = vmatprep.mubr.f32.mxu0 0.0
  %389 = vmatmul.mubr.f32.gmra.mrb[0].mxu0 %v116
  %v390 = vpop.f32.mrb[0].mxu0
  %v391 = vadd.f32 %v92, %v390
  %v392 = vpop.f32.mrb[0].mxu0
  %393 = vmatprep.mubr.f32.mxu0 0.0
  %394 = vmatmul.mubr.f32.gmra.mrb[0].mxu0 %v119
  %v395 = vpop.f32.mrb[0].mxu0
  %v396 = vadd.f32 %v92, %v395
  %v397 = vpop.f32.mrb[0].mxu0
  %398 = vmatprep.mubr.f32.mxu0 0.0
  %399 = vmatmul.mubr.f32.gmra.mrb[0].mxu0 %v122
  %v400 = vpop.f32.mrb[0].mxu0
  %v401 = vadd.f32 %v92, %v400
  %v402 = vpop.f32.mrb[0].mxu0
  %403 = vmatprep.mubr.f32.mxu0 0.0
  %404 = vmatmul.mubr.f32.gmra.mrb[0].mxu0 %v125
  %v405 = vpop.f32.mrb[0].mxu0
  %v406 = vadd.f32 %v92, %v405
  %v407 = vpop.f32.mrb[0].mxu0
  %408 = vmatprep.mubr.f32.mxu0 0.0
  %409 = vmatmul.mubr.f32.gmra.mrb[0].mxu0 %v128
  %v410 = vpop.f32.mrb[0].mxu0
  %v411 = vadd.f32 %v92, %v410
  %v412 = vpop.f32.mrb[0].mxu0
  %413 = vmatprep.mubr.f32.mxu0 0.0
  %414 = vmatmul.mubr.f32.gmra.mrb[0].mxu0 %v131
  %v415 = vpop.f32.mrb[0].mxu0
  %v416 = vadd.f32 %v92, %v415
  %v417 = vpop.f32.mrb[0].mxu0
  %418 = vmatprep.mubr.f32.mxu0 0.0
  %419 = vmatmul.mubr.f32.gmra.mrb[0].mxu0 %v134
  %v420 = vpop.f32.mrb[0].mxu0
  %v421 = vadd.f32 %v92, %v420
  %v422 = vpop.f32.mrb[0].mxu0
  %423 = vmatprep.mubr.f32.mxu0 0.0
  %424 = vmatmul.mubr.f32.gmra.mrb[0].mxu0 %v137
  %v425 = vpop.f32.mrb[0].mxu0
  %v426 = vadd.f32 %v92, %v425
  %v427 = vpop.f32.mrb[0].mxu0
  %428 = vmatprep.mubr.f32.mxu0 0.0
  %429 = vmatmul.mubr.f32.gmra.mrb[0].mxu0 %v140
  %v430 = vpop.f32.mrb[0].mxu0
  %v431 = vadd.f32 %v92, %v430
  %v432 = vpop.f32.mrb[0].mxu0
  %433 = vmatprep.mubr.f32.mxu0 0.0
  %434 = vmatmul.mubr.f32.gmra.mrb[0].mxu0 %v143
  %v435 = vpop.f32.mrb[0].mxu0
  %v436 = vadd.f32 %v92, %v435
  %v437 = vpop.f32.mrb[0].mxu0
  %438 = vmatprep.mubr.f32.mxu0 0.0
  %439 = vmatmul.mubr.f32.gmra.mrb[0].mxu0 %v146
  %v440 = vpop.f32.mrb[0].mxu0
  %v441 = vadd.f32 %v92, %v440
  %v442 = vpop.f32.mrb[0].mxu0
  %443 = vmatprep.mubr.f32.mxu0 0.0
  %444 = vmatmul.mubr.f32.gmra.mrb[0].mxu0 %v149
  %v445 = vpop.f32.mrb[0].mxu0
  %v446 = vadd.f32 %v92, %v445
  %v447 = vpop.f32.mrb[0].mxu0
  %448 = vmatprep.mubr.f32.mxu0 0.0
  %449 = vmatmul.mubr.f32.gmra.mrb[0].mxu0 %v152
  %v450 = vpop.f32.mrb[0].mxu0
  %v451 = vadd.f32 %v92, %v450
  %v452 = vpop.f32.mrb[0].mxu0
  %453 = vmatprep.mubr.f32.mxu0 0.0
  %454 = vmatmul.mubr.f32.gmra.mrb[0].mxu0 %v155
  %v455 = vpop.f32.mrb[0].mxu0
  %v456 = vadd.f32 %v92, %v455
  %v457 = vpop.f32.mrb[0].mxu0
  %458 = vmatprep.mubr.f32.mxu0 0.0
  %459 = vmatmul.mubr.f32.gmra.mrb[0].mxu0 %v158
  %v460 = vpop.f32.mrb[0].mxu0
  %v461 = vadd.f32 %v92, %v460
  %v462 = vpop.f32.mrb[0].mxu0
  %463 = vmatprep.mubr.f32.mxu0 0.0
  %464 = vmatmul.mubr.f32.gmra.mrb[0].mxu0 %v161
  %v465 = vpop.f32.mrb[0].mxu0
  %v466 = vadd.f32 %v92, %v465
  %v467 = vpop.f32.mrb[0].mxu0
  %468 = vmatprep.mubr.f32.mxu0 0.0
  %469 = vmatmul.mubr.f32.gmra.mrb[0].mxu0 %v164
  %v470 = vpop.f32.mrb[0].mxu0
  %v471 = vadd.f32 %v92, %v470
  %v472 = vpop.f32.mrb[0].mxu0
  %473 = vmatprep.mubr.f32.mxu0 0.0
  %474 = vmatmul.mubr.f32.gmra.mrb[0].mxu0 %v167
  %v475 = vpop.f32.mrb[0].mxu0
  %v476 = vadd.f32 %v92, %v475
  %v477 = vpop.f32.mrb[0].mxu0
  %478 = vmatprep.mubr.f32.mxu0 0.0
  %479 = vmatmul.mubr.f32.gmra.mrb[0].mxu0 %v170
  %v480 = vpop.f32.mrb[0].mxu0
  %v481 = vadd.f32 %v92, %v480
  %v482 = vpop.f32.mrb[0].mxu0
  %483 = vmatprep.mubr.f32.mxu0 0.0
  %484 = vmatmul.mubr.f32.gmra.mrb[0].mxu0 %v173
  %v485 = vpop.f32.mrb[0].mxu0
  %v486 = vadd.f32 %v92, %v485
  %v487 = vpop.f32.mrb[0].mxu0
  %488 = vmatprep.mubr.f32.mxu0 0.0
  %489 = vmatmul.mubr.f32.gmra.mrb[0].mxu0 %v176
  %v490 = vpop.f32.mrb[0].mxu0
  %v491 = vadd.f32 %v92, %v490
  %v492 = vpop.f32.mrb[0].mxu0
  %493 = vmatprep.mubr.f32.mxu0 0.0
  %494 = vmatmul.mubr.f32.gmra.mrb[0].mxu0 %v179
  %v495 = vpop.f32.mrb[0].mxu0
  %v496 = vadd.f32 %v92, %v495
  %v497 = vpop.f32.mrb[0].mxu0
  %498 = vmatprep.mubr.f32.mxu0 0.0
  %499 = vmatmul.mubr.f32.gmra.mrb[0].mxu0 %v182
  %v500 = vpop.f32.mrb[0].mxu0
  %v501 = vadd.f32 %v92, %v500
  %v502 = vpop.f32.mrb[0].mxu0
  %503 = vmatprep.mubr.f32.mxu0 0.0
  %504 = vmatmul.mubr.f32.gmra.mrb[0].mxu0 %v185
  %v505 = vpop.f32.mrb[0].mxu0
  %v506 = vadd.f32 %v92, %v505
  %v507 = vpop.f32.mrb[0].mxu0
  %508 = vmatprep.mubr.f32.mxu0 0.0
  %509 = vmatmul.mubr.f32.gmra.mrb[0].mxu0 %v188
  %v510 = vpop.f32.mrb[0].mxu0
  %v511 = vadd.f32 %v92, %v510
  %v512 = vpop.f32.mrb[0].mxu0
  %513 = vmatprep.mubr.f32.mxu0 0.0
  %514 = vmatmul.mubr.f32.gmra.mrb[0].mxu0 %v191
  %v515 = vpop.f32.mrb[0].mxu0
  %v516 = vadd.f32 %v92, %v515
  %v517 = vpop.f32.mrb[0].mxu0
  %518 = vmatprep.mubr.f32.mxu0 0.0
  %519 = vmatmul.mubr.f32.gmra.mrb[0].mxu0 %v194
  %v520 = vpop.f32.mrb[0].mxu0
  %v521 = vadd.f32 %v92, %v520
  %v522 = vpop.f32.mrb[0].mxu0
  %523 = vmatprep.mubr.f32.mxu0 0.0
  %524 = vmatmul.mubr.f32.gmra.mrb[0].mxu0 %v197
  %v525 = vpop.f32.mrb[0].mxu0
  %v526 = vadd.f32 %v92, %v525
  %v527 = vpop.f32.mrb[0].mxu0
  %528 = vmatprep.mubr.f32.mxu0 0.0
  %529 = vmatmul.mubr.f32.gmra.mrb[0].mxu0 %v200
  %v530 = vpop.f32.mrb[0].mxu0
  %v531 = vadd.f32 %v92, %v530
  %v532 = vpop.f32.mrb[0].mxu0
  %533 = vmatprep.mubr.f32.mxu0 0.0
  %534 = vmatmul.mubr.f32.gmra.mrb[0].mxu0 %v203
  %v535 = vpop.f32.mrb[0].mxu0
  %v536 = vadd.f32 %v92, %v535
  %v537 = vpop.f32.mrb[0].mxu0
  %538 = vmatprep.mubr.f32.mxu0 0.0
  %539 = vmatmul.mubr.f32.gmra.mrb[0].mxu0 %v206
  %v540 = vpop.f32.mrb[0].mxu0
  %v541 = vadd.f32 %v92, %v540
  %v542 = vpop.f32.mrb[0].mxu0
  %543 = vmatprep.mubr.f32.mxu0 0.0
  %544 = vmatmul.mubr.f32.gmra.mrb[0].mxu0 %v209
  %v545 = vpop.f32.mrb[0].mxu0
  %v546 = vadd.f32 %v92, %v545
  %v547 = vpop.f32.mrb[0].mxu0
  %548 = vmatprep.mubr.f32.mxu0 0.0
  %549 = vmatmul.mubr.f32.gmra.mrb[0].mxu0 %v212
  %v550 = vpop.f32.mrb[0].mxu0
  %v551 = vadd.f32 %v92, %v550
  %v552 = vpop.f32.mrb[0].mxu0
  %553 = vmatprep.mubr.f32.mxu0 0.0
  %554 = vmatmul.mubr.f32.gmra.mrb[0].mxu0 %v215
  %v555 = vpop.f32.mrb[0].mxu0
  %v556 = vadd.f32 %v92, %v555
  %v557 = vpop.f32.mrb[0].mxu0
  %558 = vmatprep.mubr.f32.mxu0 0.0
  %559 = vmatmul.mubr.f32.gmra.mrb[0].mxu0 %v218
  %v560 = vpop.f32.mrb[0].mxu0
  %v561 = vadd.f32 %v92, %v560
  %v562 = vpop.f32.mrb[0].mxu0
  %563 = vmatprep.mubr.f32.mxu0 0.0
  %564 = vmatmul.mubr.f32.gmra.mrb[0].mxu0 %v221
  %v565 = vpop.f32.mrb[0].mxu0
  %v566 = vadd.f32 %v92, %v565
  %v567 = vpop.f32.mrb[0].mxu0
  %568 = vmatprep.mubr.f32.mxu0 0.0
  %569 = vmatmul.mubr.f32.gmra.mrb[0].mxu0 %v224
  %v570 = vpop.f32.mrb[0].mxu0
  %v571 = vadd.f32 %v92, %v570
  %v572 = vpop.f32.mrb[0].mxu0
  %573 = vmatprep.mubr.f32.mxu0 0.0
  %574 = vmatmul.mubr.f32.gmra.mrb[0].mxu0 %v227
  %v575 = vpop.f32.mrb[0].mxu0
  %v576 = vadd.f32 %v92, %v575
  %v577 = vpop.f32.mrb[0].mxu0
  %578 = vmatprep.mubr.f32.mxu0 0.0
  %579 = vmatmul.mubr.f32.gmra.mrb[0].mxu0 %v230
  %v580 = vpop.f32.mrb[0].mxu0
  %v581 = vadd.f32 %v92, %v580
  %v582 = vpop.f32.mrb[0].mxu0
  %583 = vmatprep.mubr.f32.mxu0 0.0
  %584 = vmatmul.mubr.f32.gmra.mrb[0].mxu0 %v233
  %v585 = vpop.f32.mrb[0].mxu0
  %v586 = vadd.f32 %v92, %v585
  %v587 = vpop.f32.mrb[0].mxu0
  %588 = vmatprep.mubr.f32.mxu0 0.0
  %589 = vmatmul.mubr.f32.gmra.mrb[0].mxu0 %v236
  %v590 = vpop.f32.mrb[0].mxu0
  %v591 = vadd.f32 %v92, %v590
  %v592 = vpop.f32.mrb[0].mxu0
  %593 = vmatprep.mubr.f32.mxu0 0.0
  %594 = vmatmul.mubr.f32.gmra.mrb[0].mxu0 %v239
  %v595 = vpop.f32.mrb[0].mxu0
  %v596 = vadd.f32 %v92, %v595
  %v597 = vpop.f32.mrb[0].mxu0
  %598 = vmatprep.mubr.f32.mxu0 0.0
  %599 = vmatmul.mubr.f32.gmra.mrb[0].mxu0 %v242
  %v600 = vpop.f32.mrb[0].mxu0
  %v601 = vadd.f32 %v92, %v600
  %v602 = vpop.f32.mrb[0].mxu0
  %603 = vmatprep.mubr.f32.mxu0 0.0
  %604 = vmatmul.mubr.f32.gmra.mrb[0].mxu0 %v245
  %v605 = vpop.f32.mrb[0].mxu0
  %v606 = vadd.f32 %v92, %v605
  %v607 = vpop.f32.mrb[0].mxu0
  %608 = vmatprep.mubr.f32.mxu0 0.0
  %609 = vmatmul.mubr.f32.gmra.mrb[0].mxu0 %v248
  %v610 = vpop.f32.mrb[0].mxu0
  %v611 = vadd.f32 %v92, %v610
  %v612 = vpop.f32.mrb[0].mxu0
  %613 = vmatprep.mubr.f32.mxu0 0.0
  %614 = vmatmul.mubr.f32.gmra.mrb[0].mxu0 %v251
  %v615 = vpop.f32.mrb[0].mxu0
  %v616 = vadd.f32 %v92, %v615
  %v617 = vpop.f32.mrb[0].mxu0
  %618 = vmatprep.mubr.f32.mxu0 0.0
  %619 = vmatmul.mubr.f32.gmra.mrb[0].mxu0 %v254
  %v620 = vpop.f32.mrb[0].mxu0
  %v621 = vadd.f32 %v92, %v620
  %v622 = vpop.f32.mrb[0].mxu0
  %623 = vmatprep.mubr.f32.mxu0 0.0
  %624 = vmatmul.mubr.f32.gmra.mrb[0].mxu0 %v257
  %v625 = vpop.f32.mrb[0].mxu0
  %v626 = vadd.f32 %v92, %v625
  %v627 = vpop.f32.mrb[0].mxu0
  %628 = vmatprep.mubr.f32.mxu0 0.0
  %629 = vmatmul.mubr.f32.gmra.mrb[0].mxu0 %v260
  %v630 = vpop.f32.mrb[0].mxu0
  %v631 = vadd.f32 %v92, %v630
  %v632 = vpop.f32.mrb[0].mxu0
  %633 = vmatprep.mubr.f32.mxu0 0.0
  %634 = vmatmul.mubr.f32.gmra.mrb[0].mxu0 %v263
  %v635 = vpop.f32.mrb[0].mxu0
  %v636 = vadd.f32 %v92, %v635
  %v637 = vpop.f32.mrb[0].mxu0
  %638 = vmatprep.mubr.f32.mxu0 0.0
  %639 = vmatmul.mubr.f32.gmra.mrb[0].mxu0 %v266
  %v640 = vpop.f32.mrb[0].mxu0
  %v641 = vadd.f32 %v92, %v640
  %v642 = vpop.f32.mrb[0].mxu0
  %643 = vmatprep.mubr.f32.mxu0 0.0
  %644 = vmatmul.mubr.f32.gmra.mrb[0].mxu0 %v269
  %v645 = vpop.f32.mrb[0].mxu0
  %v646 = vadd.f32 %v92, %v645
  %v647 = vpop.f32.mrb[0].mxu0
  %648 = vmatprep.mubr.f32.mxu0 0.0
  %649 = vmatmul.mubr.f32.gmra.mrb[0].mxu0 %v272
  %v650 = vpop.f32.mrb[0].mxu0
  %v651 = vadd.f32 %v92, %v650
  %v652 = vpop.f32.mrb[0].mxu0
  %653 = vmatprep.mubr.f32.mxu0 0.0
  %654 = vmatmul.mubr.f32.gmra.mrb[0].mxu0 %v275
  %v655 = vpop.f32.mrb[0].mxu0
  %v656 = vadd.f32 %v92, %v655
  %v657 = vpop.f32.mrb[0].mxu0
  %658 = vmatprep.mubr.f32.mxu0 0.0
  %659 = vmatmul.mubr.f32.gmra.mrb[0].mxu0 %v278
  %v660 = vpop.f32.mrb[0].mxu0
  %v661 = vadd.f32 %v92, %v660
  %v662 = vpop.f32.mrb[0].mxu0
  %663 = vmatprep.mubr.f32.mxu0 0.0
  %664 = vmatmul.mubr.f32.gmra.mrb[0].mxu0 %v281
  %v665 = vpop.f32.mrb[0].mxu0
  %v666 = vadd.f32 %v92, %v665
  %v667 = vpop.f32.mrb[0].mxu0
  %668 = vmatprep.mubr.f32.mxu0 0.0
  %669 = vmatmul.mubr.f32.gmra.mrb[0].mxu0 %v284
  %v670 = vpop.f32.mrb[0].mxu0
  %v671 = vadd.f32 %v92, %v670
  %v672 = vpop.f32.mrb[0].mxu0
  %673 = vmatprep.mubr.f32.mxu0 0.0
  %674 = vmatmul.mubr.f32.gmra.mrb[0].mxu0 %v287
  %v675 = vpop.f32.mrb[0].mxu0
  %v676 = vadd.f32 %v92, %v675
  %v677 = vpop.f32.mrb[0].mxu0
  %678 = vdwg.mxu0
  %v679 = vmul.f32 %v356, 0.1
  %v680 = vmul.f32 %v361, 0.1
  %v681 = vmul.f32 %v366, 0.1
  %v682 = vmul.f32 %v371, 0.1
  %v683 = vmul.f32 %v376, 0.1
  %v684 = vmul.f32 %v381, 0.1
  %v685 = vmul.f32 %v386, 0.1
  %v686 = vmul.f32 %v391, 0.1
  %v687 = vmul.f32 %v396, 0.1
  %v688 = vmul.f32 %v401, 0.1
  %v689 = vmul.f32 %v406, 0.1
  %v690 = vmul.f32 %v411, 0.1
  %v691 = vmul.f32 %v416, 0.1
  %v692 = vmul.f32 %v421, 0.1
  %v693 = vmul.f32 %v426, 0.1
  %v694 = vmul.f32 %v431, 0.1
  %v695 = vmul.f32 %v436, 0.1
  %v696 = vmul.f32 %v441, 0.1
  %v697 = vmul.f32 %v446, 0.1
  %v698 = vmul.f32 %v451, 0.1
  %v699 = vmul.f32 %v456, 0.1
  %v700 = vmul.f32 %v461, 0.1
  %v701 = vmul.f32 %v466, 0.1
  %v702 = vmul.f32 %v471, 0.1
  %v703 = vmul.f32 %v476, 0.1
  %v704 = vmul.f32 %v481, 0.1
  %v705 = vmul.f32 %v486, 0.1
  %v706 = vmul.f32 %v491, 0.1
  %v707 = vmul.f32 %v496, 0.1
  %v708 = vmul.f32 %v501, 0.1
  %v709 = vmul.f32 %v506, 0.1
  %v710 = vmul.f32 %v511, 0.1
  %v711 = vmul.f32 %v516, 0.1
  %v712 = vmul.f32 %v521, 0.1
  %v713 = vmul.f32 %v526, 0.1
  %v714 = vmul.f32 %v531, 0.1
  %v715 = vmul.f32 %v536, 0.1
  %v716 = vmul.f32 %v541, 0.1
  %v717 = vmul.f32 %v546, 0.1
  %v718 = vmul.f32 %v551, 0.1
  %v719 = vmul.f32 %v556, 0.1
  %v720 = vmul.f32 %v561, 0.1
  %v721 = vmul.f32 %v566, 0.1
  %v722 = vmul.f32 %v571, 0.1
  %v723 = vmul.f32 %v576, 0.1
  %v724 = vmul.f32 %v581, 0.1
  %v725 = vmul.f32 %v586, 0.1
  %v726 = vmul.f32 %v591, 0.1
  %v727 = vmul.f32 %v596, 0.1
  %v728 = vmul.f32 %v601, 0.1
  %v729 = vmul.f32 %v606, 0.1
  %v730 = vmul.f32 %v611, 0.1
  %v731 = vmul.f32 %v616, 0.1
  %v732 = vmul.f32 %v621, 0.1
  %v733 = vmul.f32 %v626, 0.1
  %v734 = vmul.f32 %v631, 0.1
  %v735 = vmul.f32 %v636, 0.1
  %v736 = vmul.f32 %v641, 0.1
  %v737 = vmul.f32 %v646, 0.1
  %v738 = vmul.f32 %v651, 0.1
  %v739 = vmul.f32 %v656, 0.1
  %v740 = vmul.f32 %v661, 0.1
  %v741 = vmul.f32 %v666, 0.1
  %v742 = vmul.f32 %v671, 0.1
  %v743 = vmul.f32 %v676, 0.1
  %v744 = vadd.f32 %v16, %v679
  %v745 = vadd.f32 %v17, %v680
  %v746 = vadd.f32 %v18, %v681
  %v747 = vadd.f32 %v19, %v682
  %v748 = vadd.f32 %v20, %v683
  %v749 = vadd.f32 %v21, %v684
  %v750 = vadd.f32 %v22, %v685
  %v751 = vadd.f32 %v23, %v686
  %v752 = vadd.f32 %v24, %v687
  %v753 = vadd.f32 %v25, %v688
  %v754 = vadd.f32 %v26, %v689
  %v755 = vadd.f32 %v27, %v690
  %v756 = vadd.f32 %v28, %v691
  %v757 = vadd.f32 %v29, %v692
  %v758 = vadd.f32 %v30, %v693
  %v759 = vadd.f32 %v31, %v694
  %v760 = vadd.f32 %v32, %v695
  %v761 = vadd.f32 %v33, %v696
  %v762 = vadd.f32 %v34, %v697
  %v763 = vadd.f32 %v35, %v698
  %v764 = vadd.f32 %v36, %v699
  %v765 = vadd.f32 %v37, %v700
  %v766 = vadd.f32 %v38, %v701
  %v767 = vadd.f32 %v39, %v702
  %v768 = vadd.f32 %v40, %v703
  %v769 = vadd.f32 %v41, %v704
  %v770 = vadd.f32 %v42, %v705
  %v771 = vadd.f32 %v43, %v706
  %v772 = vadd.f32 %v44, %v707
  %v773 = vadd.f32 %v45, %v708
  %v774 = vadd.f32 %v46, %v709
  %v775 = vadd.f32 %v47, %v710
  %v776 = vadd.f32 %v48, %v711
  %v777 = vadd.f32 %v49, %v712
  %v778 = vadd.f32 %v50, %v713
  %v779 = vadd.f32 %v51, %v714
  %v780 = vadd.f32 %v52, %v715
  %v781 = vadd.f32 %v53, %v716
  %v782 = vadd.f32 %v54, %v717
  %v783 = vadd.f32 %v55, %v718
  %v784 = vadd.f32 %v56, %v719
  %v785 = vadd.f32 %v57, %v720
  %v786 = vadd.f32 %v58, %v721
  %v787 = vadd.f32 %v59, %v722
  %v788 = vadd.f32 %v60, %v723
  %v789 = vadd.f32 %v61, %v724
  %v790 = vadd.f32 %v62, %v725
  %v791 = vadd.f32 %v63, %v726
  %v792 = vadd.f32 %v64, %v727
  %v793 = vadd.f32 %v65, %v728
  %v794 = vadd.f32 %v66, %v729
  %v795 = vadd.f32 %v67, %v730
  %v796 = vadd.f32 %v68, %v731
  %v797 = vadd.f32 %v69, %v732
  %v798 = vadd.f32 %v70, %v733
  %v799 = vadd.f32 %v71, %v734
  %v800 = vadd.f32 %v72, %v735
  %v801 = vadd.f32 %v73, %v736
  %v802 = vadd.f32 %v74, %v737
  %v803 = vadd.f32 %v75, %v738
  %v804 = vadd.f32 %v76, %v739
  %v805 = vadd.f32 %v77, %v740
  %v806 = vadd.f32 %v78, %v741
  %v807 = vadd.f32 %v79, %v742
  %v808 = vadd.f32 %v80, %v743
  %874 = vrot.lane.b32.xlu0 %v679, 96
  %v875 = vpop.permute.xlu0 %874
  %876 = vrot.lane.b32.xlu0 %v680, 96
  %v877 = vpop.permute.xlu0 %876
  %878 = vrot.lane.b32.xlu0 %v681, 96
  %v879 = vpop.permute.xlu0 %878
  %880 = vrot.lane.b32.xlu0 %v682, 96
  %v881 = vpop.permute.xlu0 %880
  %882 = vrot.lane.b32.xlu0 %v683, 96
  %v883 = vpop.permute.xlu0 %882
  %884 = vrot.lane.b32.xlu0 %v684, 96
  %v885 = vpop.permute.xlu0 %884
  %886 = vrot.lane.b32.xlu0 %v685, 96
  %v887 = vpop.permute.xlu0 %886
  %888 = vrot.lane.b32.xlu0 %v686, 96
  %v889 = vpop.permute.xlu0 %888
  %890 = vrot.lane.b32.xlu0 %v687, 96
  %v891 = vpop.permute.xlu0 %890
  %892 = vrot.lane.b32.xlu0 %v688, 96
  %v893 = vpop.permute.xlu0 %892
  %894 = vrot.lane.b32.xlu0 %v689, 96
  %v895 = vpop.permute.xlu0 %894
  %896 = vrot.lane.b32.xlu0 %v690, 96
  %v897 = vpop.permute.xlu0 %896
  %898 = vrot.lane.b32.xlu0 %v691, 96
  %v899 = vpop.permute.xlu0 %898
  %900 = vrot.lane.b32.xlu0 %v692, 96
  %v901 = vpop.permute.xlu0 %900
  %902 = vrot.lane.b32.xlu0 %v693, 96
  %v903 = vpop.permute.xlu0 %902
  %904 = vrot.lane.b32.xlu0 %v694, 96
  %v905 = vpop.permute.xlu0 %904
  %906 = vrot.lane.b32.xlu0 %v695, 96
  %v907 = vpop.permute.xlu0 %906
  %908 = vrot.lane.b32.xlu0 %v696, 96
  %v909 = vpop.permute.xlu0 %908
  %910 = vrot.lane.b32.xlu0 %v697, 96
  %v911 = vpop.permute.xlu0 %910
  %912 = vrot.lane.b32.xlu0 %v698, 96
  %v913 = vpop.permute.xlu0 %912
  %914 = vrot.lane.b32.xlu0 %v699, 96
  %v915 = vpop.permute.xlu0 %914
  %916 = vrot.lane.b32.xlu0 %v700, 96
  %v917 = vpop.permute.xlu0 %916
  %918 = vrot.lane.b32.xlu0 %v701, 96
  %v919 = vpop.permute.xlu0 %918
  %920 = vrot.lane.b32.xlu0 %v702, 96
  %v921 = vpop.permute.xlu0 %920
  %922 = vrot.lane.b32.xlu0 %v703, 96
  %v923 = vpop.permute.xlu0 %922
  %924 = vrot.lane.b32.xlu0 %v704, 96
  %v925 = vpop.permute.xlu0 %924
  %926 = vrot.lane.b32.xlu0 %v705, 96
  %v927 = vpop.permute.xlu0 %926
  %928 = vrot.lane.b32.xlu0 %v706, 96
  %v929 = vpop.permute.xlu0 %928
  %930 = vrot.lane.b32.xlu0 %v707, 96
  %v931 = vpop.permute.xlu0 %930
  %932 = vrot.lane.b32.xlu0 %v708, 96
  %v933 = vpop.permute.xlu0 %932
  %934 = vrot.lane.b32.xlu0 %v709, 96
  %v935 = vpop.permute.xlu0 %934
  %936 = vrot.lane.b32.xlu0 %v710, 96
  %v937 = vpop.permute.xlu0 %936
  %938 = vrot.lane.b32.xlu0 %v711, 96
  %v939 = vpop.permute.xlu0 %938
  %940 = vrot.lane.b32.xlu0 %v712, 96
  %v941 = vpop.permute.xlu0 %940
  %942 = vrot.lane.b32.xlu0 %v713, 96
  %v943 = vpop.permute.xlu0 %942
  %944 = vrot.lane.b32.xlu0 %v714, 96
  %v945 = vpop.permute.xlu0 %944
  %946 = vrot.lane.b32.xlu0 %v715, 96
  %v947 = vpop.permute.xlu0 %946
  %948 = vrot.lane.b32.xlu0 %v716, 96
  %v949 = vpop.permute.xlu0 %948
  %950 = vrot.lane.b32.xlu0 %v717, 96
  %v951 = vpop.permute.xlu0 %950
  %952 = vrot.lane.b32.xlu0 %v718, 96
  %v953 = vpop.permute.xlu0 %952
  %954 = vrot.lane.b32.xlu0 %v719, 96
  %v955 = vpop.permute.xlu0 %954
  %956 = vrot.lane.b32.xlu0 %v720, 96
  %v957 = vpop.permute.xlu0 %956
  %958 = vrot.lane.b32.xlu0 %v721, 96
  %v959 = vpop.permute.xlu0 %958
  %960 = vrot.lane.b32.xlu0 %v722, 96
  %v961 = vpop.permute.xlu0 %960
  %962 = vrot.lane.b32.xlu0 %v723, 96
  %v963 = vpop.permute.xlu0 %962
  %964 = vrot.lane.b32.xlu0 %v724, 96
  %v965 = vpop.permute.xlu0 %964
  %966 = vrot.lane.b32.xlu0 %v725, 96
  %v967 = vpop.permute.xlu0 %966
  %968 = vrot.lane.b32.xlu0 %v726, 96
  %v969 = vpop.permute.xlu0 %968
  %970 = vrot.lane.b32.xlu0 %v727, 96
  %v971 = vpop.permute.xlu0 %970
  %972 = vrot.lane.b32.xlu0 %v728, 96
  %v973 = vpop.permute.xlu0 %972
  %974 = vrot.lane.b32.xlu0 %v729, 96
  %v975 = vpop.permute.xlu0 %974
  %976 = vrot.lane.b32.xlu0 %v730, 96
  %v977 = vpop.permute.xlu0 %976
  %978 = vrot.lane.b32.xlu0 %v731, 96
  %v979 = vpop.permute.xlu0 %978
  %980 = vrot.lane.b32.xlu0 %v732, 96
  %v981 = vpop.permute.xlu0 %980
  %982 = vrot.lane.b32.xlu0 %v733, 96
  %v983 = vpop.permute.xlu0 %982
  %984 = vrot.lane.b32.xlu0 %v734, 96
  %v985 = vpop.permute.xlu0 %984
  %986 = vrot.lane.b32.xlu0 %v735, 96
  %v987 = vpop.permute.xlu0 %986
  %988 = vrot.lane.b32.xlu0 %v736, 96
  %v989 = vpop.permute.xlu0 %988
  %990 = vrot.lane.b32.xlu0 %v737, 96
  %v991 = vpop.permute.xlu0 %990
  %992 = vrot.lane.b32.xlu0 %v738, 96
  %v993 = vpop.permute.xlu0 %992
  %994 = vrot.lane.b32.xlu0 %v739, 96
  %v995 = vpop.permute.xlu0 %994
  %996 = vrot.lane.b32.xlu0 %v740, 96
  %v997 = vpop.permute.xlu0 %996
  %998 = vrot.lane.b32.xlu0 %v741, 96
  %v999 = vpop.permute.xlu0 %998
  %1000 = vrot.lane.b32.xlu0 %v742, 96
  %v1001 = vpop.permute.xlu0 %1000
  %1002 = vrot.lane.b32.xlu0 %v743, 96
  %v1003 = vpop.permute.xlu0 %1002
  %v1069 = vadd.f32 %v744, %v875
  %v1070 = vadd.f32 %v745, %v877
  %v1071 = vadd.f32 %v746, %v879
  %v1072 = vadd.f32 %v747, %v881
  %v1073 = vadd.f32 %v748, %v883
  %v1074 = vadd.f32 %v749, %v885
  %v1075 = vadd.f32 %v750, %v887
  %v1076 = vadd.f32 %v751, %v889
  %v1077 = vadd.f32 %v752, %v891
  %v1078 = vadd.f32 %v753, %v893
  %v1079 = vadd.f32 %v754, %v895
  %v1080 = vadd.f32 %v755, %v897
  %v1081 = vadd.f32 %v756, %v899
  %v1082 = vadd.f32 %v757, %v901
  %v1083 = vadd.f32 %v758, %v903
  %v1084 = vadd.f32 %v759, %v905
  %v1085 = vadd.f32 %v760, %v907
  %v1086 = vadd.f32 %v761, %v909
  %v1087 = vadd.f32 %v762, %v911
  %v1088 = vadd.f32 %v763, %v913
  %v1089 = vadd.f32 %v764, %v915
  %v1090 = vadd.f32 %v765, %v917
  %v1091 = vadd.f32 %v766, %v919
  %v1092 = vadd.f32 %v767, %v921
  %v1093 = vadd.f32 %v768, %v923
  %v1094 = vadd.f32 %v769, %v925
  %v1095 = vadd.f32 %v770, %v927
  %v1096 = vadd.f32 %v771, %v929
  %v1097 = vadd.f32 %v772, %v931
  %v1098 = vadd.f32 %v773, %v933
  %v1099 = vadd.f32 %v774, %v935
  %v1100 = vadd.f32 %v775, %v937
  %v1101 = vadd.f32 %v776, %v939
  %v1102 = vadd.f32 %v777, %v941
  %v1103 = vadd.f32 %v778, %v943
  %v1104 = vadd.f32 %v779, %v945
  %v1105 = vadd.f32 %v780, %v947
  %v1106 = vadd.f32 %v781, %v949
  %v1107 = vadd.f32 %v782, %v951
  %v1108 = vadd.f32 %v783, %v953
  %v1109 = vadd.f32 %v784, %v955
  %v1110 = vadd.f32 %v785, %v957
  %v1111 = vadd.f32 %v786, %v959
  %v1112 = vadd.f32 %v787, %v961
  %v1113 = vadd.f32 %v788, %v963
  %v1114 = vadd.f32 %v789, %v965
  %v1115 = vadd.f32 %v790, %v967
  %v1116 = vadd.f32 %v791, %v969
  %v1117 = vadd.f32 %v792, %v971
  %v1118 = vadd.f32 %v793, %v973
  %v1119 = vadd.f32 %v794, %v975
  %v1120 = vadd.f32 %v795, %v977
  %v1121 = vadd.f32 %v796, %v979
  %v1122 = vadd.f32 %v797, %v981
  %v1123 = vadd.f32 %v798, %v983
  %v1124 = vadd.f32 %v799, %v985
  %v1125 = vadd.f32 %v800, %v987
  %v1126 = vadd.f32 %v801, %v989
  %v1127 = vadd.f32 %v802, %v991
  %v1128 = vadd.f32 %v803, %v993
  %v1129 = vadd.f32 %v804, %v995
  %v1130 = vadd.f32 %v805, %v997
  %v1131 = vadd.f32 %v806, %v999
  %v1132 = vadd.f32 %v807, %v1001
  %v1133 = vadd.f32 %v808, %v1003
  %1134 = vst.msk [vmem:[%s3] sm:$0xff] %vm93, %v1069
  %1135 = vst.msk [vmem:[%s3 + $0x8] sm:$0xff] %vm93, %v1070
  %1136 = vst.msk [vmem:[%s3 + $0x10] sm:$0xff] %vm93, %v1071
  %1137 = vst.msk [vmem:[%s3 + $0x18] sm:$0xff] %vm93, %v1072
  %1138 = vst.msk [vmem:[%s3 + $0x20] sm:$0xff] %vm93, %v1073
  %1139 = vst.msk [vmem:[%s3 + $0x28] sm:$0xff] %vm93, %v1074
  %1140 = vst.msk [vmem:[%s3 + $0x30] sm:$0xff] %vm93, %v1075
  %1141 = vst.msk [vmem:[%s3 + $0x38] sm:$0xff] %vm93, %v1076
  %1142 = vst.msk [vmem:[%s3 + $0x40] sm:$0xff] %vm93, %v1077
  %1143 = vst.msk [vmem:[%s3 + $0x48] sm:$0xff] %vm93, %v1078
  %1144 = vst.msk [vmem:[%s3 + $0x50] sm:$0xff] %vm93, %v1079
  %1145 = vst.msk [vmem:[%s3 + $0x58] sm:$0xff] %vm93, %v1080
  %1146 = vst.msk [vmem:[%s3 + $0x60] sm:$0xff] %vm93, %v1081
  %1147 = vst.msk [vmem:[%s3 + $0x68] sm:$0xff] %vm93, %v1082
  %1148 = vst.msk [vmem:[%s3 + $0x70] sm:$0xff] %vm93, %v1083
  %1149 = vst.msk [vmem:[%s3 + $0x78] sm:$0xff] %vm93, %v1084
  %1150 = vst.msk [vmem:[%s3 + $0x80] sm:$0xff] %vm93, %v1085
  %1151 = vst.msk [vmem:[%s3 + $0x88] sm:$0xff] %vm93, %v1086
  %1152 = vst.msk [vmem:[%s3 + $0x90] sm:$0xff] %vm93, %v1087
  %1153 = vst.msk [vmem:[%s3 + $0x98] sm:$0xff] %vm93, %v1088
  %1154 = vst.msk [vmem:[%s3 + $0xa0] sm:$0xff] %vm93, %v1089
  %1155 = vst.msk [vmem:[%s3 + $0xa8] sm:$0xff] %vm93, %v1090
  %1156 = vst.msk [vmem:[%s3 + $0xb0] sm:$0xff] %vm93, %v1091
  %1157 = vst.msk [vmem:[%s3 + $0xb8] sm:$0xff] %vm93, %v1092
  %1158 = vst.msk [vmem:[%s3 + $0xc0] sm:$0xff] %vm93, %v1093
  %1159 = vst.msk [vmem:[%s3 + $0xc8] sm:$0xff] %vm93, %v1094
  %1160 = vst.msk [vmem:[%s3 + $0xd0] sm:$0xff] %vm93, %v1095
  %1161 = vst.msk [vmem:[%s3 + $0xd8] sm:$0xff] %vm93, %v1096
  %1162 = vst.msk [vmem:[%s3 + $0xe0] sm:$0xff] %vm93, %v1097
  %1163 = vst.msk [vmem:[%s3 + $0xe8] sm:$0xff] %vm93, %v1098
  %1164 = vst.msk [vmem:[%s3 + $0xf0] sm:$0xff] %vm93, %v1099
  %1165 = vst.msk [vmem:[%s3 + $0xf8] sm:$0xff] %vm93, %v1100
  %1166 = vst.msk [vmem:[%s3 + $0x100] sm:$0xff] %vm93, %v1101
  %1167 = vst.msk [vmem:[%s3 + $0x108] sm:$0xff] %vm93, %v1102
  %1168 = vst.msk [vmem:[%s3 + $0x110] sm:$0xff] %vm93, %v1103
  %1169 = vst.msk [vmem:[%s3 + $0x118] sm:$0xff] %vm93, %v1104
  %1170 = vst.msk [vmem:[%s3 + $0x120] sm:$0xff] %vm93, %v1105
  %1171 = vst.msk [vmem:[%s3 + $0x128] sm:$0xff] %vm93, %v1106
  %1172 = vst.msk [vmem:[%s3 + $0x130] sm:$0xff] %vm93, %v1107
  %1173 = vst.msk [vmem:[%s3 + $0x138] sm:$0xff] %vm93, %v1108
  %1174 = vst.msk [vmem:[%s3 + $0x140] sm:$0xff] %vm93, %v1109
  %1175 = vst.msk [vmem:[%s3 + $0x148] sm:$0xff] %vm93, %v1110
  %1176 = vst.msk [vmem:[%s3 + $0x150] sm:$0xff] %vm93, %v1111
  %1177 = vst.msk [vmem:[%s3 + $0x158] sm:$0xff] %vm93, %v1112
  %1178 = vst.msk [vmem:[%s3 + $0x160] sm:$0xff] %vm93, %v1113
  %1179 = vst.msk [vmem:[%s3 + $0x168] sm:$0xff] %vm93, %v1114
  %1180 = vst.msk [vmem:[%s3 + $0x170] sm:$0xff] %vm93, %v1115
  %1181 = vst.msk [vmem:[%s3 + $0x178] sm:$0xff] %vm93, %v1116
  %1182 = vst.msk [vmem:[%s3 + $0x180] sm:$0xff] %vm93, %v1117
  %1183 = vst.msk [vmem:[%s3 + $0x188] sm:$0xff] %vm93, %v1118
  %1184 = vst.msk [vmem:[%s3 + $0x190] sm:$0xff] %vm93, %v1119
  %1185 = vst.msk [vmem:[%s3 + $0x198] sm:$0xff] %vm93, %v1120
  %1186 = vst.msk [vmem:[%s3 + $0x1a0] sm:$0xff] %vm93, %v1121
  %1187 = vst.msk [vmem:[%s3 + $0x1a8] sm:$0xff] %vm93, %v1122
  %1188 = vst.msk [vmem:[%s3 + $0x1b0] sm:$0xff] %vm93, %v1123
  %1189 = vst.msk [vmem:[%s3 + $0x1b8] sm:$0xff] %vm93, %v1124
  %1190 = vst.msk [vmem:[%s3 + $0x1c0] sm:$0xff] %vm93, %v1125
  %1191 = vst.msk [vmem:[%s3 + $0x1c8] sm:$0xff] %vm93, %v1126
  %1192 = vst.msk [vmem:[%s3 + $0x1d0] sm:$0xff] %vm93, %v1127
  %1193 = vst.msk [vmem:[%s3 + $0x1d8] sm:$0xff] %vm93, %v1128
  %1194 = vst.msk [vmem:[%s3 + $0x1e0] sm:$0xff] %vm93, %v1129
  %1195 = vst.msk [vmem:[%s3 + $0x1e8] sm:$0xff] %vm93, %v1130
  %1196 = vst.msk [vmem:[%s3 + $0x1f0] sm:$0xff] %vm93, %v1131
  %1197 = vst.msk [vmem:[%s3 + $0x1f8] sm:$0xff] %vm93, %v1132
  %vm1198 = vcmask 254976
  %1199 = vst.msk [vmem:[%s3 + $0x200] sm:$0x3] %vm1198, %v1133
  %v1200 = vsel %vm93, %v356, 0.0
  %1201 = vadd.xlane.f32.xlu0 %v1200
  %v1202 = vpop.xlane.xlu0 %1201
  %v1203 = vsel %vm93, %v361, 0.0
  %1204 = vadd.xlane.f32.xlu0 %v1203
  %v1205 = vpop.xlane.xlu0 %1204
  %v1206 = vsel %vm93, %v366, 0.0
  %1207 = vadd.xlane.f32.xlu0 %v1206
  %v1208 = vpop.xlane.xlu0 %1207
  %v1209 = vsel %vm93, %v371, 0.0
  %1210 = vadd.xlane.f32.xlu0 %v1209
  %v1211 = vpop.xlane.xlu0 %1210
  %v1212 = vsel %vm93, %v376, 0.0
  %1213 = vadd.xlane.f32.xlu0 %v1212
  %v1214 = vpop.xlane.xlu0 %1213
  %v1215 = vsel %vm93, %v381, 0.0
  %1216 = vadd.xlane.f32.xlu0 %v1215
  %v1217 = vpop.xlane.xlu0 %1216
  %v1218 = vsel %vm93, %v386, 0.0
  %1219 = vadd.xlane.f32.xlu0 %v1218
  %v1220 = vpop.xlane.xlu0 %1219
  %v1221 = vsel %vm93, %v391, 0.0
  %1222 = vadd.xlane.f32.xlu0 %v1221
  %v1223 = vpop.xlane.xlu0 %1222
  %v1224 = vsel %vm93, %v396, 0.0
  %1225 = vadd.xlane.f32.xlu0 %v1224
  %v1226 = vpop.xlane.xlu0 %1225
  %v1227 = vsel %vm93, %v401, 0.0
  %1228 = vadd.xlane.f32.xlu0 %v1227
  %v1229 = vpop.xlane.xlu0 %1228
  %v1230 = vsel %vm93, %v406, 0.0
  %1231 = vadd.xlane.f32.xlu0 %v1230
  %v1232 = vpop.xlane.xlu0 %1231
  %v1233 = vsel %vm93, %v411, 0.0
  %1234 = vadd.xlane.f32.xlu0 %v1233
  %v1235 = vpop.xlane.xlu0 %1234
  %v1236 = vsel %vm93, %v416, 0.0
  %1237 = vadd.xlane.f32.xlu0 %v1236
  %v1238 = vpop.xlane.xlu0 %1237
  %v1239 = vsel %vm93, %v421, 0.0
  %1240 = vadd.xlane.f32.xlu0 %v1239
  %v1241 = vpop.xlane.xlu0 %1240
  %v1242 = vsel %vm93, %v426, 0.0
  %1243 = vadd.xlane.f32.xlu0 %v1242
  %v1244 = vpop.xlane.xlu0 %1243
  %v1245 = vsel %vm93, %v431, 0.0
  %1246 = vadd.xlane.f32.xlu0 %v1245
  %v1247 = vpop.xlane.xlu0 %1246
  %v1248 = vsel %vm93, %v436, 0.0
  %1249 = vadd.xlane.f32.xlu0 %v1248
  %v1250 = vpop.xlane.xlu0 %1249
  %v1251 = vsel %vm93, %v441, 0.0
  %1252 = vadd.xlane.f32.xlu0 %v1251
  %v1253 = vpop.xlane.xlu0 %1252
  %v1254 = vsel %vm93, %v446, 0.0
  %1255 = vadd.xlane.f32.xlu0 %v1254
  %v1256 = vpop.xlane.xlu0 %1255
  %v1257 = vsel %vm93, %v451, 0.0
  %1258 = vadd.xlane.f32.xlu0 %v1257
  %v1259 = vpop.xlane.xlu0 %1258
  %v1260 = vsel %vm93, %v456, 0.0
  %1261 = vadd.xlane.f32.xlu0 %v1260
  %v1262 = vpop.xlane.xlu0 %1261
  %v1263 = vsel %vm93, %v461, 0.0
  %1264 = vadd.xlane.f32.xlu0 %v1263
  %v1265 = vpop.xlane.xlu0 %1264
  %v1266 = vsel %vm93, %v466, 0.0
  %1267 = vadd.xlane.f32.xlu0 %v1266
  %v1268 = vpop.xlane.xlu0 %1267
  %v1269 = vsel %vm93, %v471, 0.0
  %1270 = vadd.xlane.f32.xlu0 %v1269
  %v1271 = vpop.xlane.xlu0 %1270
  %v1272 = vsel %vm93, %v476, 0.0
  %1273 = vadd.xlane.f32.xlu0 %v1272
  %v1274 = vpop.xlane.xlu0 %1273
  %v1275 = vsel %vm93, %v481, 0.0
  %1276 = vadd.xlane.f32.xlu0 %v1275
  %v1277 = vpop.xlane.xlu0 %1276
  %v1278 = vsel %vm93, %v486, 0.0
  %1279 = vadd.xlane.f32.xlu0 %v1278
  %v1280 = vpop.xlane.xlu0 %1279
  %v1281 = vsel %vm93, %v491, 0.0
  %1282 = vadd.xlane.f32.xlu0 %v1281
  %v1283 = vpop.xlane.xlu0 %1282
  %v1284 = vsel %vm93, %v496, 0.0
  %1285 = vadd.xlane.f32.xlu0 %v1284
  %v1286 = vpop.xlane.xlu0 %1285
  %v1287 = vsel %vm93, %v501, 0.0
  %1288 = vadd.xlane.f32.xlu0 %v1287
  %v1289 = vpop.xlane.xlu0 %1288
  %v1290 = vsel %vm93, %v506, 0.0
  %1291 = vadd.xlane.f32.xlu0 %v1290
  %v1292 = vpop.xlane.xlu0 %1291
  %v1293 = vsel %vm93, %v511, 0.0
  %1294 = vadd.xlane.f32.xlu0 %v1293
  %v1295 = vpop.xlane.xlu0 %1294
  %v1296 = vsel %vm93, %v516, 0.0
  %1297 = vadd.xlane.f32.xlu0 %v1296
  %v1298 = vpop.xlane.xlu0 %1297
  %v1299 = vsel %vm93, %v521, 0.0
  %1300 = vadd.xlane.f32.xlu0 %v1299
  %v1301 = vpop.xlane.xlu0 %1300
  %v1302 = vsel %vm93, %v526, 0.0
  %1303 = vadd.xlane.f32.xlu0 %v1302
  %v1304 = vpop.xlane.xlu0 %1303
  %v1305 = vsel %vm93, %v531, 0.0
  %1306 = vadd.xlane.f32.xlu0 %v1305
  %v1307 = vpop.xlane.xlu0 %1306
  %v1308 = vsel %vm93, %v536, 0.0
  %1309 = vadd.xlane.f32.xlu0 %v1308
  %v1310 = vpop.xlane.xlu0 %1309
  %v1311 = vsel %vm93, %v541, 0.0
  %1312 = vadd.xlane.f32.xlu0 %v1311
  %v1313 = vpop.xlane.xlu0 %1312
  %v1314 = vsel %vm93, %v546, 0.0
  %1315 = vadd.xlane.f32.xlu0 %v1314
  %v1316 = vpop.xlane.xlu0 %1315
  %v1317 = vsel %vm93, %v551, 0.0
  %1318 = vadd.xlane.f32.xlu0 %v1317
  %v1319 = vpop.xlane.xlu0 %1318
  %v1320 = vsel %vm93, %v556, 0.0
  %1321 = vadd.xlane.f32.xlu0 %v1320
  %v1322 = vpop.xlane.xlu0 %1321
  %v1323 = vsel %vm93, %v561, 0.0
  %1324 = vadd.xlane.f32.xlu0 %v1323
  %v1325 = vpop.xlane.xlu0 %1324
  %v1326 = vsel %vm93, %v566, 0.0
  %1327 = vadd.xlane.f32.xlu0 %v1326
  %v1328 = vpop.xlane.xlu0 %1327
  %v1329 = vsel %vm93, %v571, 0.0
  %1330 = vadd.xlane.f32.xlu0 %v1329
  %v1331 = vpop.xlane.xlu0 %1330
  %v1332 = vsel %vm93, %v576, 0.0
  %1333 = vadd.xlane.f32.xlu0 %v1332
  %v1334 = vpop.xlane.xlu0 %1333
  %v1335 = vsel %vm93, %v581, 0.0
  %1336 = vadd.xlane.f32.xlu0 %v1335
  %v1337 = vpop.xlane.xlu0 %1336
  %v1338 = vsel %vm93, %v586, 0.0
  %1339 = vadd.xlane.f32.xlu0 %v1338
  %v1340 = vpop.xlane.xlu0 %1339
  %v1341 = vsel %vm93, %v591, 0.0
  %1342 = vadd.xlane.f32.xlu0 %v1341
  %v1343 = vpop.xlane.xlu0 %1342
  %v1344 = vsel %vm93, %v596, 0.0
  %1345 = vadd.xlane.f32.xlu0 %v1344
  %v1346 = vpop.xlane.xlu0 %1345
  %v1347 = vsel %vm93, %v601, 0.0
  %1348 = vadd.xlane.f32.xlu0 %v1347
  %v1349 = vpop.xlane.xlu0 %1348
  %v1350 = vsel %vm93, %v606, 0.0
  %1351 = vadd.xlane.f32.xlu0 %v1350
  %v1352 = vpop.xlane.xlu0 %1351
  %v1353 = vsel %vm93, %v611, 0.0
  %1354 = vadd.xlane.f32.xlu0 %v1353
  %v1355 = vpop.xlane.xlu0 %1354
  %v1356 = vsel %vm93, %v616, 0.0
  %1357 = vadd.xlane.f32.xlu0 %v1356
  %v1358 = vpop.xlane.xlu0 %1357
  %v1359 = vsel %vm93, %v621, 0.0
  %1360 = vadd.xlane.f32.xlu0 %v1359
  %v1361 = vpop.xlane.xlu0 %1360
  %v1362 = vsel %vm93, %v626, 0.0
  %1363 = vadd.xlane.f32.xlu0 %v1362
  %v1364 = vpop.xlane.xlu0 %1363
  %v1365 = vsel %vm93, %v631, 0.0
  %1366 = vadd.xlane.f32.xlu0 %v1365
  %v1367 = vpop.xlane.xlu0 %1366
  %v1368 = vsel %vm93, %v636, 0.0
  %1369 = vadd.xlane.f32.xlu0 %v1368
  %v1370 = vpop.xlane.xlu0 %1369
  %v1371 = vsel %vm93, %v641, 0.0
  %1372 = vadd.xlane.f32.xlu0 %v1371
  %v1373 = vpop.xlane.xlu0 %1372
  %v1374 = vsel %vm93, %v646, 0.0
  %1375 = vadd.xlane.f32.xlu0 %v1374
  %v1376 = vpop.xlane.xlu0 %1375
  %v1377 = vsel %vm93, %v651, 0.0
  %1378 = vadd.xlane.f32.xlu0 %v1377
  %v1379 = vpop.xlane.xlu0 %1378
  %v1380 = vsel %vm93, %v656, 0.0
  %1381 = vadd.xlane.f32.xlu0 %v1380
  %v1382 = vpop.xlane.xlu0 %1381
  %v1383 = vsel %vm93, %v661, 0.0
  %1384 = vadd.xlane.f32.xlu0 %v1383
  %v1385 = vpop.xlane.xlu0 %1384
  %v1386 = vsel %vm93, %v666, 0.0
  %1387 = vadd.xlane.f32.xlu0 %v1386
  %v1388 = vpop.xlane.xlu0 %1387
  %v1389 = vsel %vm93, %v671, 0.0
  %1390 = vadd.xlane.f32.xlu0 %v1389
  %v1391 = vpop.xlane.xlu0 %1390
  %v1392 = vsel %vm1198, %v676, 0.0
  %1393 = vadd.xlane.f32.xlu0 %v1392
  %v1394 = vpop.xlane.xlu0 %1393
  %v1395 = vrcp.pop 32.0
  %v1396 = vmul.f32 %v1202, %v1395
  %v1397 = vmul.f32 %v1205, %v1395
  %v1398 = vmul.f32 %v1208, %v1395
  %v1399 = vmul.f32 %v1211, %v1395
  %v1400 = vmul.f32 %v1214, %v1395
  %v1401 = vmul.f32 %v1217, %v1395
  %v1402 = vmul.f32 %v1220, %v1395
  %v1403 = vmul.f32 %v1223, %v1395
  %v1404 = vmul.f32 %v1226, %v1395
  %v1405 = vmul.f32 %v1229, %v1395
  %v1406 = vmul.f32 %v1232, %v1395
  %v1407 = vmul.f32 %v1235, %v1395
  %v1408 = vmul.f32 %v1238, %v1395
  %v1409 = vmul.f32 %v1241, %v1395
  %v1410 = vmul.f32 %v1244, %v1395
  %v1411 = vmul.f32 %v1247, %v1395
  %v1412 = vmul.f32 %v1250, %v1395
  %v1413 = vmul.f32 %v1253, %v1395
  %v1414 = vmul.f32 %v1256, %v1395
  %v1415 = vmul.f32 %v1259, %v1395
  %v1416 = vmul.f32 %v1262, %v1395
  %v1417 = vmul.f32 %v1265, %v1395
  %v1418 = vmul.f32 %v1268, %v1395
  %v1419 = vmul.f32 %v1271, %v1395
  %v1420 = vmul.f32 %v1274, %v1395
  %v1421 = vmul.f32 %v1277, %v1395
  %v1422 = vmul.f32 %v1280, %v1395
  %v1423 = vmul.f32 %v1283, %v1395
  %v1424 = vmul.f32 %v1286, %v1395
  %v1425 = vmul.f32 %v1289, %v1395
  %v1426 = vmul.f32 %v1292, %v1395
  %v1427 = vmul.f32 %v1295, %v1395
  %v1428 = vmul.f32 %v1298, %v1395
  %v1429 = vmul.f32 %v1301, %v1395
  %v1430 = vmul.f32 %v1304, %v1395
  %v1431 = vmul.f32 %v1307, %v1395
  %v1432 = vmul.f32 %v1310, %v1395
  %v1433 = vmul.f32 %v1313, %v1395
  %v1434 = vmul.f32 %v1316, %v1395
  %v1435 = vmul.f32 %v1319, %v1395
  %v1436 = vmul.f32 %v1322, %v1395
  %v1437 = vmul.f32 %v1325, %v1395
  %v1438 = vmul.f32 %v1328, %v1395
  %v1439 = vmul.f32 %v1331, %v1395
  %v1440 = vmul.f32 %v1334, %v1395
  %v1441 = vmul.f32 %v1337, %v1395
  %v1442 = vmul.f32 %v1340, %v1395
  %v1443 = vmul.f32 %v1343, %v1395
  %v1444 = vmul.f32 %v1346, %v1395
  %v1445 = vmul.f32 %v1349, %v1395
  %v1446 = vmul.f32 %v1352, %v1395
  %v1447 = vmul.f32 %v1355, %v1395
  %v1448 = vmul.f32 %v1358, %v1395
  %v1449 = vmul.f32 %v1361, %v1395
  %v1450 = vmul.f32 %v1364, %v1395
  %v1451 = vmul.f32 %v1367, %v1395
  %v1452 = vmul.f32 %v1370, %v1395
  %v1453 = vmul.f32 %v1373, %v1395
  %v1454 = vmul.f32 %v1376, %v1395
  %v1455 = vmul.f32 %v1379, %v1395
  %v1456 = vmul.f32 %v1382, %v1395
  %v1457 = vmul.f32 %v1385, %v1395
  %v1458 = vmul.f32 %v1388, %v1395
  %v1459 = vmul.f32 %v1391, %v1395
  %v1460 = vmul.f32 %v1394, %v1395
  %v1461 = vsub.f32 %v356, %v1396
  %v1462 = vsub.f32 %v361, %v1397
  %v1463 = vsub.f32 %v366, %v1398
  %v1464 = vsub.f32 %v371, %v1399
  %v1465 = vsub.f32 %v376, %v1400
  %v1466 = vsub.f32 %v381, %v1401
  %v1467 = vsub.f32 %v386, %v1402
  %v1468 = vsub.f32 %v391, %v1403
  %v1469 = vsub.f32 %v396, %v1404
  %v1470 = vsub.f32 %v401, %v1405
  %v1471 = vsub.f32 %v406, %v1406
  %v1472 = vsub.f32 %v411, %v1407
  %v1473 = vsub.f32 %v416, %v1408
  %v1474 = vsub.f32 %v421, %v1409
  %v1475 = vsub.f32 %v426, %v1410
  %v1476 = vsub.f32 %v431, %v1411
  %v1477 = vsub.f32 %v436, %v1412
  %v1478 = vsub.f32 %v441, %v1413
  %v1479 = vsub.f32 %v446, %v1414
  %v1480 = vsub.f32 %v451, %v1415
  %v1481 = vsub.f32 %v456, %v1416
  %v1482 = vsub.f32 %v461, %v1417
  %v1483 = vsub.f32 %v466, %v1418
  %v1484 = vsub.f32 %v471, %v1419
  %v1485 = vsub.f32 %v476, %v1420
  %v1486 = vsub.f32 %v481, %v1421
  %v1487 = vsub.f32 %v486, %v1422
  %v1488 = vsub.f32 %v491, %v1423
  %v1489 = vsub.f32 %v496, %v1424
  %v1490 = vsub.f32 %v501, %v1425
  %v1491 = vsub.f32 %v506, %v1426
  %v1492 = vsub.f32 %v511, %v1427
  %v1493 = vsub.f32 %v516, %v1428
  %v1494 = vsub.f32 %v521, %v1429
  %v1495 = vsub.f32 %v526, %v1430
  %v1496 = vsub.f32 %v531, %v1431
  %v1497 = vsub.f32 %v536, %v1432
  %v1498 = vsub.f32 %v541, %v1433
  %v1499 = vsub.f32 %v546, %v1434
  %v1500 = vsub.f32 %v551, %v1435
  %v1501 = vsub.f32 %v556, %v1436
  %v1502 = vsub.f32 %v561, %v1437
  %v1503 = vsub.f32 %v566, %v1438
  %v1504 = vsub.f32 %v571, %v1439
  %v1505 = vsub.f32 %v576, %v1440
  %v1506 = vsub.f32 %v581, %v1441
  %v1507 = vsub.f32 %v586, %v1442
  %v1508 = vsub.f32 %v591, %v1443
  %v1509 = vsub.f32 %v596, %v1444
  %v1510 = vsub.f32 %v601, %v1445
  %v1511 = vsub.f32 %v606, %v1446
  %v1512 = vsub.f32 %v611, %v1447
  %v1513 = vsub.f32 %v616, %v1448
  %v1514 = vsub.f32 %v621, %v1449
  %v1515 = vsub.f32 %v626, %v1450
  %v1516 = vsub.f32 %v631, %v1451
  %v1517 = vsub.f32 %v636, %v1452
  %v1518 = vsub.f32 %v641, %v1453
  %v1519 = vsub.f32 %v646, %v1454
  %v1520 = vsub.f32 %v651, %v1455
  %v1521 = vsub.f32 %v656, %v1456
  %v1522 = vsub.f32 %v661, %v1457
  %v1523 = vsub.f32 %v666, %v1458
  %v1524 = vsub.f32 %v671, %v1459
  %v1525 = vsub.f32 %v676, %v1460
  %v1526 = vmul.f32 %v1461, %v1461
  %v1527 = vmul.f32 %v1462, %v1462
  %v1528 = vmul.f32 %v1463, %v1463
  %v1529 = vmul.f32 %v1464, %v1464
  %v1530 = vmul.f32 %v1465, %v1465
  %v1531 = vmul.f32 %v1466, %v1466
  %v1532 = vmul.f32 %v1467, %v1467
  %v1533 = vmul.f32 %v1468, %v1468
  %v1534 = vmul.f32 %v1469, %v1469
  %v1535 = vmul.f32 %v1470, %v1470
  %v1536 = vmul.f32 %v1471, %v1471
  %v1537 = vmul.f32 %v1472, %v1472
  %v1538 = vmul.f32 %v1473, %v1473
  %v1539 = vmul.f32 %v1474, %v1474
  %v1540 = vmul.f32 %v1475, %v1475
  %v1541 = vmul.f32 %v1476, %v1476
  %v1542 = vmul.f32 %v1477, %v1477
  %v1543 = vmul.f32 %v1478, %v1478
  %v1544 = vmul.f32 %v1479, %v1479
  %v1545 = vmul.f32 %v1480, %v1480
  %v1546 = vmul.f32 %v1481, %v1481
  %v1547 = vmul.f32 %v1482, %v1482
  %v1548 = vmul.f32 %v1483, %v1483
  %v1549 = vmul.f32 %v1484, %v1484
  %v1550 = vmul.f32 %v1485, %v1485
  %v1551 = vmul.f32 %v1486, %v1486
  %v1552 = vmul.f32 %v1487, %v1487
  %v1553 = vmul.f32 %v1488, %v1488
  %v1554 = vmul.f32 %v1489, %v1489
  %v1555 = vmul.f32 %v1490, %v1490
  %v1556 = vmul.f32 %v1491, %v1491
  %v1557 = vmul.f32 %v1492, %v1492
  %v1558 = vmul.f32 %v1493, %v1493
  %v1559 = vmul.f32 %v1494, %v1494
  %v1560 = vmul.f32 %v1495, %v1495
  %v1561 = vmul.f32 %v1496, %v1496
  %v1562 = vmul.f32 %v1497, %v1497
  %v1563 = vmul.f32 %v1498, %v1498
  %v1564 = vmul.f32 %v1499, %v1499
  %v1565 = vmul.f32 %v1500, %v1500
  %v1566 = vmul.f32 %v1501, %v1501
  %v1567 = vmul.f32 %v1502, %v1502
  %v1568 = vmul.f32 %v1503, %v1503
  %v1569 = vmul.f32 %v1504, %v1504
  %v1570 = vmul.f32 %v1505, %v1505
  %v1571 = vmul.f32 %v1506, %v1506
  %v1572 = vmul.f32 %v1507, %v1507
  %v1573 = vmul.f32 %v1508, %v1508
  %v1574 = vmul.f32 %v1509, %v1509
  %v1575 = vmul.f32 %v1510, %v1510
  %v1576 = vmul.f32 %v1511, %v1511
  %v1577 = vmul.f32 %v1512, %v1512
  %v1578 = vmul.f32 %v1513, %v1513
  %v1579 = vmul.f32 %v1514, %v1514
  %v1580 = vmul.f32 %v1515, %v1515
  %v1581 = vmul.f32 %v1516, %v1516
  %v1582 = vmul.f32 %v1517, %v1517
  %v1583 = vmul.f32 %v1518, %v1518
  %v1584 = vmul.f32 %v1519, %v1519
  %v1585 = vmul.f32 %v1520, %v1520
  %v1586 = vmul.f32 %v1521, %v1521
  %v1587 = vmul.f32 %v1522, %v1522
  %v1588 = vmul.f32 %v1523, %v1523
  %v1589 = vmul.f32 %v1524, %v1524
  %v1590 = vmul.f32 %v1525, %v1525
  %v1591 = vsel %vm93, %v1526, 0.0
  %1592 = vadd.xlane.f32.xlu0 %v1591
  %v1593 = vpop.xlane.xlu0 %1592
  %v1594 = vsel %vm93, %v1527, 0.0
  %1595 = vadd.xlane.f32.xlu0 %v1594
  %v1596 = vpop.xlane.xlu0 %1595
  %v1597 = vsel %vm93, %v1528, 0.0
  %1598 = vadd.xlane.f32.xlu0 %v1597
  %v1599 = vpop.xlane.xlu0 %1598
  %v1600 = vsel %vm93, %v1529, 0.0
  %1601 = vadd.xlane.f32.xlu0 %v1600
  %v1602 = vpop.xlane.xlu0 %1601
  %v1603 = vsel %vm93, %v1530, 0.0
  %1604 = vadd.xlane.f32.xlu0 %v1603
  %v1605 = vpop.xlane.xlu0 %1604
  %v1606 = vsel %vm93, %v1531, 0.0
  %1607 = vadd.xlane.f32.xlu0 %v1606
  %v1608 = vpop.xlane.xlu0 %1607
  %v1609 = vsel %vm93, %v1532, 0.0
  %1610 = vadd.xlane.f32.xlu0 %v1609
  %v1611 = vpop.xlane.xlu0 %1610
  %v1612 = vsel %vm93, %v1533, 0.0
  %1613 = vadd.xlane.f32.xlu0 %v1612
  %v1614 = vpop.xlane.xlu0 %1613
  %v1615 = vsel %vm93, %v1534, 0.0
  %1616 = vadd.xlane.f32.xlu0 %v1615
  %v1617 = vpop.xlane.xlu0 %1616
  %v1618 = vsel %vm93, %v1535, 0.0
  %1619 = vadd.xlane.f32.xlu0 %v1618
  %v1620 = vpop.xlane.xlu0 %1619
  %v1621 = vsel %vm93, %v1536, 0.0
  %1622 = vadd.xlane.f32.xlu0 %v1621
  %v1623 = vpop.xlane.xlu0 %1622
  %v1624 = vsel %vm93, %v1537, 0.0
  %1625 = vadd.xlane.f32.xlu0 %v1624
  %v1626 = vpop.xlane.xlu0 %1625
  %v1627 = vsel %vm93, %v1538, 0.0
  %1628 = vadd.xlane.f32.xlu0 %v1627
  %v1629 = vpop.xlane.xlu0 %1628
  %v1630 = vsel %vm93, %v1539, 0.0
  %1631 = vadd.xlane.f32.xlu0 %v1630
  %v1632 = vpop.xlane.xlu0 %1631
  %v1633 = vsel %vm93, %v1540, 0.0
  %1634 = vadd.xlane.f32.xlu0 %v1633
  %v1635 = vpop.xlane.xlu0 %1634
  %v1636 = vsel %vm93, %v1541, 0.0
  %1637 = vadd.xlane.f32.xlu0 %v1636
  %v1638 = vpop.xlane.xlu0 %1637
  %v1639 = vsel %vm93, %v1542, 0.0
  %1640 = vadd.xlane.f32.xlu0 %v1639
  %v1641 = vpop.xlane.xlu0 %1640
  %v1642 = vsel %vm93, %v1543, 0.0
  %1643 = vadd.xlane.f32.xlu0 %v1642
  %v1644 = vpop.xlane.xlu0 %1643
  %v1645 = vsel %vm93, %v1544, 0.0
  %1646 = vadd.xlane.f32.xlu0 %v1645
  %v1647 = vpop.xlane.xlu0 %1646
  %v1648 = vsel %vm93, %v1545, 0.0
  %1649 = vadd.xlane.f32.xlu0 %v1648
  %v1650 = vpop.xlane.xlu0 %1649
  %v1651 = vsel %vm93, %v1546, 0.0
  %1652 = vadd.xlane.f32.xlu0 %v1651
  %v1653 = vpop.xlane.xlu0 %1652
  %v1654 = vsel %vm93, %v1547, 0.0
  %1655 = vadd.xlane.f32.xlu0 %v1654
  %v1656 = vpop.xlane.xlu0 %1655
  %v1657 = vsel %vm93, %v1548, 0.0
  %1658 = vadd.xlane.f32.xlu0 %v1657
  %v1659 = vpop.xlane.xlu0 %1658
  %v1660 = vsel %vm93, %v1549, 0.0
  %1661 = vadd.xlane.f32.xlu0 %v1660
  %v1662 = vpop.xlane.xlu0 %1661
  %v1663 = vsel %vm93, %v1550, 0.0
  %1664 = vadd.xlane.f32.xlu0 %v1663
  %v1665 = vpop.xlane.xlu0 %1664
  %v1666 = vsel %vm93, %v1551, 0.0
  %1667 = vadd.xlane.f32.xlu0 %v1666
  %v1668 = vpop.xlane.xlu0 %1667
  %v1669 = vsel %vm93, %v1552, 0.0
  %1670 = vadd.xlane.f32.xlu0 %v1669
  %v1671 = vpop.xlane.xlu0 %1670
  %v1672 = vsel %vm93, %v1553, 0.0
  %1673 = vadd.xlane.f32.xlu0 %v1672
  %v1674 = vpop.xlane.xlu0 %1673
  %v1675 = vsel %vm93, %v1554, 0.0
  %1676 = vadd.xlane.f32.xlu0 %v1675
  %v1677 = vpop.xlane.xlu0 %1676
  %v1678 = vsel %vm93, %v1555, 0.0
  %1679 = vadd.xlane.f32.xlu0 %v1678
  %v1680 = vpop.xlane.xlu0 %1679
  %v1681 = vsel %vm93, %v1556, 0.0
  %1682 = vadd.xlane.f32.xlu0 %v1681
  %v1683 = vpop.xlane.xlu0 %1682
  %v1684 = vsel %vm93, %v1557, 0.0
  %1685 = vadd.xlane.f32.xlu0 %v1684
  %v1686 = vpop.xlane.xlu0 %1685
  %v1687 = vsel %vm93, %v1558, 0.0
  %1688 = vadd.xlane.f32.xlu0 %v1687
  %v1689 = vpop.xlane.xlu0 %1688
  %v1690 = vsel %vm93, %v1559, 0.0
  %1691 = vadd.xlane.f32.xlu0 %v1690
  %v1692 = vpop.xlane.xlu0 %1691
  %v1693 = vsel %vm93, %v1560, 0.0
  %1694 = vadd.xlane.f32.xlu0 %v1693
  %v1695 = vpop.xlane.xlu0 %1694
  %v1696 = vsel %vm93, %v1561, 0.0
  %1697 = vadd.xlane.f32.xlu0 %v1696
  %v1698 = vpop.xlane.xlu0 %1697
  %v1699 = vsel %vm93, %v1562, 0.0
  %1700 = vadd.xlane.f32.xlu0 %v1699
  %v1701 = vpop.xlane.xlu0 %1700
  %v1702 = vsel %vm93, %v1563, 0.0
  %1703 = vadd.xlane.f32.xlu0 %v1702
  %v1704 = vpop.xlane.xlu0 %1703
  %v1705 = vsel %vm93, %v1564, 0.0
  %1706 = vadd.xlane.f32.xlu0 %v1705
  %v1707 = vpop.xlane.xlu0 %1706
  %v1708 = vsel %vm93, %v1565, 0.0
  %1709 = vadd.xlane.f32.xlu0 %v1708
  %v1710 = vpop.xlane.xlu0 %1709
  %v1711 = vsel %vm93, %v1566, 0.0
  %1712 = vadd.xlane.f32.xlu0 %v1711
  %v1713 = vpop.xlane.xlu0 %1712
  %v1714 = vsel %vm93, %v1567, 0.0
  %1715 = vadd.xlane.f32.xlu0 %v1714
  %v1716 = vpop.xlane.xlu0 %1715
  %v1717 = vsel %vm93, %v1568, 0.0
  %1718 = vadd.xlane.f32.xlu0 %v1717
  %v1719 = vpop.xlane.xlu0 %1718
  %v1720 = vsel %vm93, %v1569, 0.0
  %1721 = vadd.xlane.f32.xlu0 %v1720
  %v1722 = vpop.xlane.xlu0 %1721
  %v1723 = vsel %vm93, %v1570, 0.0
  %1724 = vadd.xlane.f32.xlu0 %v1723
  %v1725 = vpop.xlane.xlu0 %1724
  %v1726 = vsel %vm93, %v1571, 0.0
  %1727 = vadd.xlane.f32.xlu0 %v1726
  %v1728 = vpop.xlane.xlu0 %1727
  %v1729 = vsel %vm93, %v1572, 0.0
  %1730 = vadd.xlane.f32.xlu0 %v1729
  %v1731 = vpop.xlane.xlu0 %1730
  %v1732 = vsel %vm93, %v1573, 0.0
  %1733 = vadd.xlane.f32.xlu0 %v1732
  %v1734 = vpop.xlane.xlu0 %1733
  %v1735 = vsel %vm93, %v1574, 0.0
  %1736 = vadd.xlane.f32.xlu0 %v1735
  %v1737 = vpop.xlane.xlu0 %1736
  %v1738 = vsel %vm93, %v1575, 0.0
  %1739 = vadd.xlane.f32.xlu0 %v1738
  %v1740 = vpop.xlane.xlu0 %1739
  %v1741 = vsel %vm93, %v1576, 0.0
  %1742 = vadd.xlane.f32.xlu0 %v1741
  %v1743 = vpop.xlane.xlu0 %1742
  %v1744 = vsel %vm93, %v1577, 0.0
  %1745 = vadd.xlane.f32.xlu0 %v1744
  %v1746 = vpop.xlane.xlu0 %1745
  %v1747 = vsel %vm93, %v1578, 0.0
  %1748 = vadd.xlane.f32.xlu0 %v1747
  %v1749 = vpop.xlane.xlu0 %1748
  %v1750 = vsel %vm93, %v1579, 0.0
  %1751 = vadd.xlane.f32.xlu0 %v1750
  %v1752 = vpop.xlane.xlu0 %1751
  %v1753 = vsel %vm93, %v1580, 0.0
  %1754 = vadd.xlane.f32.xlu0 %v1753
  %v1755 = vpop.xlane.xlu0 %1754
  %v1756 = vsel %vm93, %v1581, 0.0
  %1757 = vadd.xlane.f32.xlu0 %v1756
  %v1758 = vpop.xlane.xlu0 %1757
  %v1759 = vsel %vm93, %v1582, 0.0
  %1760 = vadd.xlane.f32.xlu0 %v1759
  %v1761 = vpop.xlane.xlu0 %1760
  %v1762 = vsel %vm93, %v1583, 0.0
  %1763 = vadd.xlane.f32.xlu0 %v1762
  %v1764 = vpop.xlane.xlu0 %1763
  %v1765 = vsel %vm93, %v1584, 0.0
  %1766 = vadd.xlane.f32.xlu0 %v1765
  %v1767 = vpop.xlane.xlu0 %1766
  %v1768 = vsel %vm93, %v1585, 0.0
  %1769 = vadd.xlane.f32.xlu0 %v1768
  %v1770 = vpop.xlane.xlu0 %1769
  %v1771 = vsel %vm93, %v1586, 0.0
  %1772 = vadd.xlane.f32.xlu0 %v1771
  %v1773 = vpop.xlane.xlu0 %1772
  %v1774 = vsel %vm93, %v1587, 0.0
  %1775 = vadd.xlane.f32.xlu0 %v1774
  %v1776 = vpop.xlane.xlu0 %1775
  %v1777 = vsel %vm93, %v1588, 0.0
  %1778 = vadd.xlane.f32.xlu0 %v1777
  %v1779 = vpop.xlane.xlu0 %1778
  %v1780 = vsel %vm93, %v1589, 0.0
  %1781 = vadd.xlane.f32.xlu0 %v1780
  %v1782 = vpop.xlane.xlu0 %1781
  %v1783 = vsel %vm1198, %v1590, 0.0
  %1784 = vadd.xlane.f32.xlu0 %v1783
  %v1785 = vpop.xlane.xlu0 %1784
  %v1786 = vmul.f32 %v1593, %v1395
  %v1787 = vmul.f32 %v1596, %v1395
  %v1788 = vmul.f32 %v1599, %v1395
  %v1789 = vmul.f32 %v1602, %v1395
  %v1790 = vmul.f32 %v1605, %v1395
  %v1791 = vmul.f32 %v1608, %v1395
  %v1792 = vmul.f32 %v1611, %v1395
  %v1793 = vmul.f32 %v1614, %v1395
  %v1794 = vmul.f32 %v1617, %v1395
  %v1795 = vmul.f32 %v1620, %v1395
  %v1796 = vmul.f32 %v1623, %v1395
  %v1797 = vmul.f32 %v1626, %v1395
  %v1798 = vmul.f32 %v1629, %v1395
  %v1799 = vmul.f32 %v1632, %v1395
  %v1800 = vmul.f32 %v1635, %v1395
  %v1801 = vmul.f32 %v1638, %v1395
  %v1802 = vmul.f32 %v1641, %v1395
  %v1803 = vmul.f32 %v1644, %v1395
  %v1804 = vmul.f32 %v1647, %v1395
  %v1805 = vmul.f32 %v1650, %v1395
  %v1806 = vmul.f32 %v1653, %v1395
  %v1807 = vmul.f32 %v1656, %v1395
  %v1808 = vmul.f32 %v1659, %v1395
  %v1809 = vmul.f32 %v1662, %v1395
  %v1810 = vmul.f32 %v1665, %v1395
  %v1811 = vmul.f32 %v1668, %v1395
  %v1812 = vmul.f32 %v1671, %v1395
  %v1813 = vmul.f32 %v1674, %v1395
  %v1814 = vmul.f32 %v1677, %v1395
  %v1815 = vmul.f32 %v1680, %v1395
  %v1816 = vmul.f32 %v1683, %v1395
  %v1817 = vmul.f32 %v1686, %v1395
  %v1818 = vmul.f32 %v1689, %v1395
  %v1819 = vmul.f32 %v1692, %v1395
  %v1820 = vmul.f32 %v1695, %v1395
  %v1821 = vmul.f32 %v1698, %v1395
  %v1822 = vmul.f32 %v1701, %v1395
  %v1823 = vmul.f32 %v1704, %v1395
  %v1824 = vmul.f32 %v1707, %v1395
  %v1825 = vmul.f32 %v1710, %v1395
  %v1826 = vmul.f32 %v1713, %v1395
  %v1827 = vmul.f32 %v1716, %v1395
  %v1828 = vmul.f32 %v1719, %v1395
  %v1829 = vmul.f32 %v1722, %v1395
  %v1830 = vmul.f32 %v1725, %v1395
  %v1831 = vmul.f32 %v1728, %v1395
  %v1832 = vmul.f32 %v1731, %v1395
  %v1833 = vmul.f32 %v1734, %v1395
  %v1834 = vmul.f32 %v1737, %v1395
  %v1835 = vmul.f32 %v1740, %v1395
  %v1836 = vmul.f32 %v1743, %v1395
  %v1837 = vmul.f32 %v1746, %v1395
  %v1838 = vmul.f32 %v1749, %v1395
  %v1839 = vmul.f32 %v1752, %v1395
  %v1840 = vmul.f32 %v1755, %v1395
  %v1841 = vmul.f32 %v1758, %v1395
  %v1842 = vmul.f32 %v1761, %v1395
  %v1843 = vmul.f32 %v1764, %v1395
  %v1844 = vmul.f32 %v1767, %v1395
  %v1845 = vmul.f32 %v1770, %v1395
  %v1846 = vmul.f32 %v1773, %v1395
  %v1847 = vmul.f32 %v1776, %v1395
  %v1848 = vmul.f32 %v1779, %v1395
  %v1849 = vmul.f32 %v1782, %v1395
  %v1850 = vmul.f32 %v1785, %v1395
  %v1851 = vadd.f32 %v1786, 1e-06
  %v1852 = vadd.f32 %v1787, 1e-06
  %v1853 = vadd.f32 %v1788, 1e-06
  %v1854 = vadd.f32 %v1789, 1e-06
  %v1855 = vadd.f32 %v1790, 1e-06
  %v1856 = vadd.f32 %v1791, 1e-06
  %v1857 = vadd.f32 %v1792, 1e-06
  %v1858 = vadd.f32 %v1793, 1e-06
  %v1859 = vadd.f32 %v1794, 1e-06
  %v1860 = vadd.f32 %v1795, 1e-06
  %v1861 = vadd.f32 %v1796, 1e-06
  %v1862 = vadd.f32 %v1797, 1e-06
  %v1863 = vadd.f32 %v1798, 1e-06
  %v1864 = vadd.f32 %v1799, 1e-06
  %v1865 = vadd.f32 %v1800, 1e-06
  %v1866 = vadd.f32 %v1801, 1e-06
  %v1867 = vadd.f32 %v1802, 1e-06
  %v1868 = vadd.f32 %v1803, 1e-06
  %v1869 = vadd.f32 %v1804, 1e-06
  %v1870 = vadd.f32 %v1805, 1e-06
  %v1871 = vadd.f32 %v1806, 1e-06
  %v1872 = vadd.f32 %v1807, 1e-06
  %v1873 = vadd.f32 %v1808, 1e-06
  %v1874 = vadd.f32 %v1809, 1e-06
  %v1875 = vadd.f32 %v1810, 1e-06
  %v1876 = vadd.f32 %v1811, 1e-06
  %v1877 = vadd.f32 %v1812, 1e-06
  %v1878 = vadd.f32 %v1813, 1e-06
  %v1879 = vadd.f32 %v1814, 1e-06
  %v1880 = vadd.f32 %v1815, 1e-06
  %v1881 = vadd.f32 %v1816, 1e-06
  %v1882 = vadd.f32 %v1817, 1e-06
  %v1883 = vadd.f32 %v1818, 1e-06
  %v1884 = vadd.f32 %v1819, 1e-06
  %v1885 = vadd.f32 %v1820, 1e-06
  %v1886 = vadd.f32 %v1821, 1e-06
  %v1887 = vadd.f32 %v1822, 1e-06
  %v1888 = vadd.f32 %v1823, 1e-06
  %v1889 = vadd.f32 %v1824, 1e-06
  %v1890 = vadd.f32 %v1825, 1e-06
  %v1891 = vadd.f32 %v1826, 1e-06
  %v1892 = vadd.f32 %v1827, 1e-06
  %v1893 = vadd.f32 %v1828, 1e-06
  %v1894 = vadd.f32 %v1829, 1e-06
  %v1895 = vadd.f32 %v1830, 1e-06
  %v1896 = vadd.f32 %v1831, 1e-06
  %v1897 = vadd.f32 %v1832, 1e-06
  %v1898 = vadd.f32 %v1833, 1e-06
  %v1899 = vadd.f32 %v1834, 1e-06
  %v1900 = vadd.f32 %v1835, 1e-06
  %v1901 = vadd.f32 %v1836, 1e-06
  %v1902 = vadd.f32 %v1837, 1e-06
  %v1903 = vadd.f32 %v1838, 1e-06
  %v1904 = vadd.f32 %v1839, 1e-06
  %v1905 = vadd.f32 %v1840, 1e-06
  %v1906 = vadd.f32 %v1841, 1e-06
  %v1907 = vadd.f32 %v1842, 1e-06
  %v1908 = vadd.f32 %v1843, 1e-06
  %v1909 = vadd.f32 %v1844, 1e-06
  %v1910 = vadd.f32 %v1845, 1e-06
  %v1911 = vadd.f32 %v1846, 1e-06
  %v1912 = vadd.f32 %v1847, 1e-06
  %v1913 = vadd.f32 %v1848, 1e-06
  %v1914 = vadd.f32 %v1849, 1e-06
  %v1915 = vadd.f32 %v1850, 1e-06
  %v1916 = vrsqrt.pop %v1851
  %v1917 = vrsqrt.pop %v1852
  %v1918 = vrsqrt.pop %v1853
  %v1919 = vrsqrt.pop %v1854
  %v1920 = vrsqrt.pop %v1855
  %v1921 = vrsqrt.pop %v1856
  %v1922 = vrsqrt.pop %v1857
  %v1923 = vrsqrt.pop %v1858
  %v1924 = vrsqrt.pop %v1859
  %v1925 = vrsqrt.pop %v1860
  %v1926 = vrsqrt.pop %v1861
  %v1927 = vrsqrt.pop %v1862
  %v1928 = vrsqrt.pop %v1863
  %v1929 = vrsqrt.pop %v1864
  %v1930 = vrsqrt.pop %v1865
  %v1931 = vrsqrt.pop %v1866
  %v1932 = vrsqrt.pop %v1867
  %v1933 = vrsqrt.pop %v1868
  %v1934 = vrsqrt.pop %v1869
  %v1935 = vrsqrt.pop %v1870
  %v1936 = vrsqrt.pop %v1871
  %v1937 = vrsqrt.pop %v1872
  %v1938 = vrsqrt.pop %v1873
  %v1939 = vrsqrt.pop %v1874
  %v1940 = vrsqrt.pop %v1875
  %v1941 = vrsqrt.pop %v1876
  %v1942 = vrsqrt.pop %v1877
  %v1943 = vrsqrt.pop %v1878
  %v1944 = vrsqrt.pop %v1879
  %v1945 = vrsqrt.pop %v1880
  %v1946 = vrsqrt.pop %v1881
  %v1947 = vrsqrt.pop %v1882
  %v1948 = vrsqrt.pop %v1883
  %v1949 = vrsqrt.pop %v1884
  %v1950 = vrsqrt.pop %v1885
  %v1951 = vrsqrt.pop %v1886
  %v1952 = vrsqrt.pop %v1887
  %v1953 = vrsqrt.pop %v1888
  %v1954 = vrsqrt.pop %v1889
  %v1955 = vrsqrt.pop %v1890
  %v1956 = vrsqrt.pop %v1891
  %v1957 = vrsqrt.pop %v1892
  %v1958 = vrsqrt.pop %v1893
  %v1959 = vrsqrt.pop %v1894
  %v1960 = vrsqrt.pop %v1895
  %v1961 = vrsqrt.pop %v1896
  %v1962 = vrsqrt.pop %v1897
  %v1963 = vrsqrt.pop %v1898
  %v1964 = vrsqrt.pop %v1899
  %v1965 = vrsqrt.pop %v1900
  %v1966 = vrsqrt.pop %v1901
  %v1967 = vrsqrt.pop %v1902
  %v1968 = vrsqrt.pop %v1903
  %v1969 = vrsqrt.pop %v1904
  %v1970 = vrsqrt.pop %v1905
  %v1971 = vrsqrt.pop %v1906
  %v1972 = vrsqrt.pop %v1907
  %v1973 = vrsqrt.pop %v1908
  %v1974 = vrsqrt.pop %v1909
  %v1975 = vrsqrt.pop %v1910
  %v1976 = vrsqrt.pop %v1911
  %v1977 = vrsqrt.pop %v1912
  %v1978 = vrsqrt.pop %v1913
  %v1979 = vrsqrt.pop %v1914
  %v1980 = vrsqrt.pop %v1915
  %v1981 = vmul.f32 %v1461, %v1916
  %v1982 = vmul.f32 %v1462, %v1917
  %v1983 = vmul.f32 %v1463, %v1918
  %v1984 = vmul.f32 %v1464, %v1919
  %v1985 = vmul.f32 %v1465, %v1920
  %v1986 = vmul.f32 %v1466, %v1921
  %v1987 = vmul.f32 %v1467, %v1922
  %v1988 = vmul.f32 %v1468, %v1923
  %v1989 = vmul.f32 %v1469, %v1924
  %v1990 = vmul.f32 %v1470, %v1925
  %v1991 = vmul.f32 %v1471, %v1926
  %v1992 = vmul.f32 %v1472, %v1927
  %v1993 = vmul.f32 %v1473, %v1928
  %v1994 = vmul.f32 %v1474, %v1929
  %v1995 = vmul.f32 %v1475, %v1930
  %v1996 = vmul.f32 %v1476, %v1931
  %v1997 = vmul.f32 %v1477, %v1932
  %v1998 = vmul.f32 %v1478, %v1933
  %v1999 = vmul.f32 %v1479, %v1934
  %v2000 = vmul.f32 %v1480, %v1935
  %v2001 = vmul.f32 %v1481, %v1936
  %v2002 = vmul.f32 %v1482, %v1937
  %v2003 = vmul.f32 %v1483, %v1938
  %v2004 = vmul.f32 %v1484, %v1939
  %v2005 = vmul.f32 %v1485, %v1940
  %v2006 = vmul.f32 %v1486, %v1941
  %v2007 = vmul.f32 %v1487, %v1942
  %v2008 = vmul.f32 %v1488, %v1943
  %v2009 = vmul.f32 %v1489, %v1944
  %v2010 = vmul.f32 %v1490, %v1945
  %v2011 = vmul.f32 %v1491, %v1946
  %v2012 = vmul.f32 %v1492, %v1947
  %v2013 = vmul.f32 %v1493, %v1948
  %v2014 = vmul.f32 %v1494, %v1949
  %v2015 = vmul.f32 %v1495, %v1950
  %v2016 = vmul.f32 %v1496, %v1951
  %v2017 = vmul.f32 %v1497, %v1952
  %v2018 = vmul.f32 %v1498, %v1953
  %v2019 = vmul.f32 %v1499, %v1954
  %v2020 = vmul.f32 %v1500, %v1955
  %v2021 = vmul.f32 %v1501, %v1956
  %v2022 = vmul.f32 %v1502, %v1957
  %v2023 = vmul.f32 %v1503, %v1958
  %v2024 = vmul.f32 %v1504, %v1959
  %v2025 = vmul.f32 %v1505, %v1960
  %v2026 = vmul.f32 %v1506, %v1961
  %v2027 = vmul.f32 %v1507, %v1962
  %v2028 = vmul.f32 %v1508, %v1963
  %v2029 = vmul.f32 %v1509, %v1964
  %v2030 = vmul.f32 %v1510, %v1965
  %v2031 = vmul.f32 %v1511, %v1966
  %v2032 = vmul.f32 %v1512, %v1967
  %v2033 = vmul.f32 %v1513, %v1968
  %v2034 = vmul.f32 %v1514, %v1969
  %v2035 = vmul.f32 %v1515, %v1970
  %v2036 = vmul.f32 %v1516, %v1971
  %v2037 = vmul.f32 %v1517, %v1972
  %v2038 = vmul.f32 %v1518, %v1973
  %v2039 = vmul.f32 %v1519, %v1974
  %v2040 = vmul.f32 %v1520, %v1975
  %v2041 = vmul.f32 %v1521, %v1976
  %v2042 = vmul.f32 %v1522, %v1977
  %v2043 = vmul.f32 %v1523, %v1978
  %v2044 = vmul.f32 %v1524, %v1979
  %v2045 = vmul.f32 %v1525, %v1980
  %2111 = vrot.lane.b32.xlu0 %v356, 96
  %v2112 = vpop.permute.xlu0 %2111
  %2113 = vrot.lane.b32.xlu0 %v361, 96
  %v2114 = vpop.permute.xlu0 %2113
  %2115 = vrot.lane.b32.xlu0 %v366, 96
  %v2116 = vpop.permute.xlu0 %2115
  %2117 = vrot.lane.b32.xlu0 %v371, 96
  %v2118 = vpop.permute.xlu0 %2117
  %2119 = vrot.lane.b32.xlu0 %v376, 96
  %v2120 = vpop.permute.xlu0 %2119
  %2121 = vrot.lane.b32.xlu0 %v381, 96
  %v2122 = vpop.permute.xlu0 %2121
  %2123 = vrot.lane.b32.xlu0 %v386, 96
  %v2124 = vpop.permute.xlu0 %2123
  %2125 = vrot.lane.b32.xlu0 %v391, 96
  %v2126 = vpop.permute.xlu0 %2125
  %2127 = vrot.lane.b32.xlu0 %v396, 96
  %v2128 = vpop.permute.xlu0 %2127
  %2129 = vrot.lane.b32.xlu0 %v401, 96
  %v2130 = vpop.permute.xlu0 %2129
  %2131 = vrot.lane.b32.xlu0 %v406, 96
  %v2132 = vpop.permute.xlu0 %2131
  %2133 = vrot.lane.b32.xlu0 %v411, 96
  %v2134 = vpop.permute.xlu0 %2133
  %2135 = vrot.lane.b32.xlu0 %v416, 96
  %v2136 = vpop.permute.xlu0 %2135
  %2137 = vrot.lane.b32.xlu0 %v421, 96
  %v2138 = vpop.permute.xlu0 %2137
  %2139 = vrot.lane.b32.xlu0 %v426, 96
  %v2140 = vpop.permute.xlu0 %2139
  %2141 = vrot.lane.b32.xlu0 %v431, 96
  %v2142 = vpop.permute.xlu0 %2141
  %2143 = vrot.lane.b32.xlu0 %v436, 96
  %v2144 = vpop.permute.xlu0 %2143
  %2145 = vrot.lane.b32.xlu0 %v441, 96
  %v2146 = vpop.permute.xlu0 %2145
  %2147 = vrot.lane.b32.xlu0 %v446, 96
  %v2148 = vpop.permute.xlu0 %2147
  %2149 = vrot.lane.b32.xlu0 %v451, 96
  %v2150 = vpop.permute.xlu0 %2149
  %2151 = vrot.lane.b32.xlu0 %v456, 96
  %v2152 = vpop.permute.xlu0 %2151
  %2153 = vrot.lane.b32.xlu0 %v461, 96
  %v2154 = vpop.permute.xlu0 %2153
  %2155 = vrot.lane.b32.xlu0 %v466, 96
  %v2156 = vpop.permute.xlu0 %2155
  %2157 = vrot.lane.b32.xlu0 %v471, 96
  %v2158 = vpop.permute.xlu0 %2157
  %2159 = vrot.lane.b32.xlu0 %v476, 96
  %v2160 = vpop.permute.xlu0 %2159
  %2161 = vrot.lane.b32.xlu0 %v481, 96
  %v2162 = vpop.permute.xlu0 %2161
  %2163 = vrot.lane.b32.xlu0 %v486, 96
  %v2164 = vpop.permute.xlu0 %2163
  %2165 = vrot.lane.b32.xlu0 %v491, 96
  %v2166 = vpop.permute.xlu0 %2165
  %2167 = vrot.lane.b32.xlu0 %v496, 96
  %v2168 = vpop.permute.xlu0 %2167
  %2169 = vrot.lane.b32.xlu0 %v501, 96
  %v2170 = vpop.permute.xlu0 %2169
  %2171 = vrot.lane.b32.xlu0 %v506, 96
  %v2172 = vpop.permute.xlu0 %2171
  %2173 = vrot.lane.b32.xlu0 %v511, 96
  %v2174 = vpop.permute.xlu0 %2173
  %2175 = vrot.lane.b32.xlu0 %v516, 96
  %v2176 = vpop.permute.xlu0 %2175
  %2177 = vrot.lane.b32.xlu0 %v521, 96
  %v2178 = vpop.permute.xlu0 %2177
  %2179 = vrot.lane.b32.xlu0 %v526, 96
  %v2180 = vpop.permute.xlu0 %2179
  %2181 = vrot.lane.b32.xlu0 %v531, 96
  %v2182 = vpop.permute.xlu0 %2181
  %2183 = vrot.lane.b32.xlu0 %v536, 96
  %v2184 = vpop.permute.xlu0 %2183
  %2185 = vrot.lane.b32.xlu0 %v541, 96
  %v2186 = vpop.permute.xlu0 %2185
  %2187 = vrot.lane.b32.xlu0 %v546, 96
  %v2188 = vpop.permute.xlu0 %2187
  %2189 = vrot.lane.b32.xlu0 %v551, 96
  %v2190 = vpop.permute.xlu0 %2189
  %2191 = vrot.lane.b32.xlu0 %v556, 96
  %v2192 = vpop.permute.xlu0 %2191
  %2193 = vrot.lane.b32.xlu0 %v561, 96
  %v2194 = vpop.permute.xlu0 %2193
  %2195 = vrot.lane.b32.xlu0 %v566, 96
  %v2196 = vpop.permute.xlu0 %2195
  %2197 = vrot.lane.b32.xlu0 %v571, 96
  %v2198 = vpop.permute.xlu0 %2197
  %2199 = vrot.lane.b32.xlu0 %v576, 96
  %v2200 = vpop.permute.xlu0 %2199
  %2201 = vrot.lane.b32.xlu0 %v581, 96
  %v2202 = vpop.permute.xlu0 %2201
  %2203 = vrot.lane.b32.xlu0 %v586, 96
  %v2204 = vpop.permute.xlu0 %2203
  %2205 = vrot.lane.b32.xlu0 %v591, 96
  %v2206 = vpop.permute.xlu0 %2205
  %2207 = vrot.lane.b32.xlu0 %v596, 96
  %v2208 = vpop.permute.xlu0 %2207
  %2209 = vrot.lane.b32.xlu0 %v601, 96
  %v2210 = vpop.permute.xlu0 %2209
  %2211 = vrot.lane.b32.xlu0 %v606, 96
  %v2212 = vpop.permute.xlu0 %2211
  %2213 = vrot.lane.b32.xlu0 %v611, 96
  %v2214 = vpop.permute.xlu0 %2213
  %2215 = vrot.lane.b32.xlu0 %v616, 96
  %v2216 = vpop.permute.xlu0 %2215
  %2217 = vrot.lane.b32.xlu0 %v621, 96
  %v2218 = vpop.permute.xlu0 %2217
  %2219 = vrot.lane.b32.xlu0 %v626, 96
  %v2220 = vpop.permute.xlu0 %2219
  %2221 = vrot.lane.b32.xlu0 %v631, 96
  %v2222 = vpop.permute.xlu0 %2221
  %2223 = vrot.lane.b32.xlu0 %v636, 96
  %v2224 = vpop.permute.xlu0 %2223
  %2225 = vrot.lane.b32.xlu0 %v641, 96
  %v2226 = vpop.permute.xlu0 %2225
  %2227 = vrot.lane.b32.xlu0 %v646, 96
  %v2228 = vpop.permute.xlu0 %2227
  %2229 = vrot.lane.b32.xlu0 %v651, 96
  %v2230 = vpop.permute.xlu0 %2229
  %2231 = vrot.lane.b32.xlu0 %v656, 96
  %v2232 = vpop.permute.xlu0 %2231
  %2233 = vrot.lane.b32.xlu0 %v661, 96
  %v2234 = vpop.permute.xlu0 %2233
  %2235 = vrot.lane.b32.xlu0 %v666, 96
  %v2236 = vpop.permute.xlu0 %2235
  %2237 = vrot.lane.b32.xlu0 %v671, 96
  %v2238 = vpop.permute.xlu0 %2237
  %2239 = vrot.lane.b32.xlu0 %v676, 96
  %v2240 = vpop.permute.xlu0 %2239
  %v2306 = vsel %vm93, %v2112, 0.0
  %2307 = vadd.xlane.f32.xlu0 %v2306
  %v2308 = vpop.xlane.xlu0 %2307
  %v2309 = vsel %vm93, %v2114, 0.0
  %2310 = vadd.xlane.f32.xlu0 %v2309
  %v2311 = vpop.xlane.xlu0 %2310
  %v2312 = vsel %vm93, %v2116, 0.0
  %2313 = vadd.xlane.f32.xlu0 %v2312
  %v2314 = vpop.xlane.xlu0 %2313
  %v2315 = vsel %vm93, %v2118, 0.0
  %2316 = vadd.xlane.f32.xlu0 %v2315
  %v2317 = vpop.xlane.xlu0 %2316
  %v2318 = vsel %vm93, %v2120, 0.0
  %2319 = vadd.xlane.f32.xlu0 %v2318
  %v2320 = vpop.xlane.xlu0 %2319
  %v2321 = vsel %vm93, %v2122, 0.0
  %2322 = vadd.xlane.f32.xlu0 %v2321
  %v2323 = vpop.xlane.xlu0 %2322
  %v2324 = vsel %vm93, %v2124, 0.0
  %2325 = vadd.xlane.f32.xlu0 %v2324
  %v2326 = vpop.xlane.xlu0 %2325
  %v2327 = vsel %vm93, %v2126, 0.0
  %2328 = vadd.xlane.f32.xlu0 %v2327
  %v2329 = vpop.xlane.xlu0 %2328
  %v2330 = vsel %vm93, %v2128, 0.0
  %2331 = vadd.xlane.f32.xlu0 %v2330
  %v2332 = vpop.xlane.xlu0 %2331
  %v2333 = vsel %vm93, %v2130, 0.0
  %2334 = vadd.xlane.f32.xlu0 %v2333
  %v2335 = vpop.xlane.xlu0 %2334
  %v2336 = vsel %vm93, %v2132, 0.0
  %2337 = vadd.xlane.f32.xlu0 %v2336
  %v2338 = vpop.xlane.xlu0 %2337
  %v2339 = vsel %vm93, %v2134, 0.0
  %2340 = vadd.xlane.f32.xlu0 %v2339
  %v2341 = vpop.xlane.xlu0 %2340
  %v2342 = vsel %vm93, %v2136, 0.0
  %2343 = vadd.xlane.f32.xlu0 %v2342
  %v2344 = vpop.xlane.xlu0 %2343
  %v2345 = vsel %vm93, %v2138, 0.0
  %2346 = vadd.xlane.f32.xlu0 %v2345
  %v2347 = vpop.xlane.xlu0 %2346
  %v2348 = vsel %vm93, %v2140, 0.0
  %2349 = vadd.xlane.f32.xlu0 %v2348
  %v2350 = vpop.xlane.xlu0 %2349
  %v2351 = vsel %vm93, %v2142, 0.0
  %2352 = vadd.xlane.f32.xlu0 %v2351
  %v2353 = vpop.xlane.xlu0 %2352
  %v2354 = vsel %vm93, %v2144, 0.0
  %2355 = vadd.xlane.f32.xlu0 %v2354
  %v2356 = vpop.xlane.xlu0 %2355
  %v2357 = vsel %vm93, %v2146, 0.0
  %2358 = vadd.xlane.f32.xlu0 %v2357
  %v2359 = vpop.xlane.xlu0 %2358
  %v2360 = vsel %vm93, %v2148, 0.0
  %2361 = vadd.xlane.f32.xlu0 %v2360
  %v2362 = vpop.xlane.xlu0 %2361
  %v2363 = vsel %vm93, %v2150, 0.0
  %2364 = vadd.xlane.f32.xlu0 %v2363
  %v2365 = vpop.xlane.xlu0 %2364
  %v2366 = vsel %vm93, %v2152, 0.0
  %2367 = vadd.xlane.f32.xlu0 %v2366
  %v2368 = vpop.xlane.xlu0 %2367
  %v2369 = vsel %vm93, %v2154, 0.0
  %2370 = vadd.xlane.f32.xlu0 %v2369
  %v2371 = vpop.xlane.xlu0 %2370
  %v2372 = vsel %vm93, %v2156, 0.0
  %2373 = vadd.xlane.f32.xlu0 %v2372
  %v2374 = vpop.xlane.xlu0 %2373
  %v2375 = vsel %vm93, %v2158, 0.0
  %2376 = vadd.xlane.f32.xlu0 %v2375
  %v2377 = vpop.xlane.xlu0 %2376
  %v2378 = vsel %vm93, %v2160, 0.0
  %2379 = vadd.xlane.f32.xlu0 %v2378
  %v2380 = vpop.xlane.xlu0 %2379
  %v2381 = vsel %vm93, %v2162, 0.0
  %2382 = vadd.xlane.f32.xlu0 %v2381
  %v2383 = vpop.xlane.xlu0 %2382
  %v2384 = vsel %vm93, %v2164, 0.0
  %2385 = vadd.xlane.f32.xlu0 %v2384
  %v2386 = vpop.xlane.xlu0 %2385
  %v2387 = vsel %vm93, %v2166, 0.0
  %2388 = vadd.xlane.f32.xlu0 %v2387
  %v2389 = vpop.xlane.xlu0 %2388
  %v2390 = vsel %vm93, %v2168, 0.0
  %2391 = vadd.xlane.f32.xlu0 %v2390
  %v2392 = vpop.xlane.xlu0 %2391
  %v2393 = vsel %vm93, %v2170, 0.0
  %2394 = vadd.xlane.f32.xlu0 %v2393
  %v2395 = vpop.xlane.xlu0 %2394
  %v2396 = vsel %vm93, %v2172, 0.0
  %2397 = vadd.xlane.f32.xlu0 %v2396
  %v2398 = vpop.xlane.xlu0 %2397
  %v2399 = vsel %vm93, %v2174, 0.0
  %2400 = vadd.xlane.f32.xlu0 %v2399
  %v2401 = vpop.xlane.xlu0 %2400
  %v2402 = vsel %vm93, %v2176, 0.0
  %2403 = vadd.xlane.f32.xlu0 %v2402
  %v2404 = vpop.xlane.xlu0 %2403
  %v2405 = vsel %vm93, %v2178, 0.0
  %2406 = vadd.xlane.f32.xlu0 %v2405
  %v2407 = vpop.xlane.xlu0 %2406
  %v2408 = vsel %vm93, %v2180, 0.0
  %2409 = vadd.xlane.f32.xlu0 %v2408
  %v2410 = vpop.xlane.xlu0 %2409
  %v2411 = vsel %vm93, %v2182, 0.0
  %2412 = vadd.xlane.f32.xlu0 %v2411
  %v2413 = vpop.xlane.xlu0 %2412
  %v2414 = vsel %vm93, %v2184, 0.0
  %2415 = vadd.xlane.f32.xlu0 %v2414
  %v2416 = vpop.xlane.xlu0 %2415
  %v2417 = vsel %vm93, %v2186, 0.0
  %2418 = vadd.xlane.f32.xlu0 %v2417
  %v2419 = vpop.xlane.xlu0 %2418
  %v2420 = vsel %vm93, %v2188, 0.0
  %2421 = vadd.xlane.f32.xlu0 %v2420
  %v2422 = vpop.xlane.xlu0 %2421
  %v2423 = vsel %vm93, %v2190, 0.0
  %2424 = vadd.xlane.f32.xlu0 %v2423
  %v2425 = vpop.xlane.xlu0 %2424
  %v2426 = vsel %vm93, %v2192, 0.0
  %2427 = vadd.xlane.f32.xlu0 %v2426
  %v2428 = vpop.xlane.xlu0 %2427
  %v2429 = vsel %vm93, %v2194, 0.0
  %2430 = vadd.xlane.f32.xlu0 %v2429
  %v2431 = vpop.xlane.xlu0 %2430
  %v2432 = vsel %vm93, %v2196, 0.0
  %2433 = vadd.xlane.f32.xlu0 %v2432
  %v2434 = vpop.xlane.xlu0 %2433
  %v2435 = vsel %vm93, %v2198, 0.0
  %2436 = vadd.xlane.f32.xlu0 %v2435
  %v2437 = vpop.xlane.xlu0 %2436
  %v2438 = vsel %vm93, %v2200, 0.0
  %2439 = vadd.xlane.f32.xlu0 %v2438
  %v2440 = vpop.xlane.xlu0 %2439
  %v2441 = vsel %vm93, %v2202, 0.0
  %2442 = vadd.xlane.f32.xlu0 %v2441
  %v2443 = vpop.xlane.xlu0 %2442
  %v2444 = vsel %vm93, %v2204, 0.0
  %2445 = vadd.xlane.f32.xlu0 %v2444
  %v2446 = vpop.xlane.xlu0 %2445
  %v2447 = vsel %vm93, %v2206, 0.0
  %2448 = vadd.xlane.f32.xlu0 %v2447
  %v2449 = vpop.xlane.xlu0 %2448
  %v2450 = vsel %vm93, %v2208, 0.0
  %2451 = vadd.xlane.f32.xlu0 %v2450
  %v2452 = vpop.xlane.xlu0 %2451
  %v2453 = vsel %vm93, %v2210, 0.0
  %2454 = vadd.xlane.f32.xlu0 %v2453
  %v2455 = vpop.xlane.xlu0 %2454
  %v2456 = vsel %vm93, %v2212, 0.0
  %2457 = vadd.xlane.f32.xlu0 %v2456
  %v2458 = vpop.xlane.xlu0 %2457
  %v2459 = vsel %vm93, %v2214, 0.0
  %2460 = vadd.xlane.f32.xlu0 %v2459
  %v2461 = vpop.xlane.xlu0 %2460
  %v2462 = vsel %vm93, %v2216, 0.0
  %2463 = vadd.xlane.f32.xlu0 %v2462
  %v2464 = vpop.xlane.xlu0 %2463
  %v2465 = vsel %vm93, %v2218, 0.0
  %2466 = vadd.xlane.f32.xlu0 %v2465
  %v2467 = vpop.xlane.xlu0 %2466
  %v2468 = vsel %vm93, %v2220, 0.0
  %2469 = vadd.xlane.f32.xlu0 %v2468
  %v2470 = vpop.xlane.xlu0 %2469
  %v2471 = vsel %vm93, %v2222, 0.0
  %2472 = vadd.xlane.f32.xlu0 %v2471
  %v2473 = vpop.xlane.xlu0 %2472
  %v2474 = vsel %vm93, %v2224, 0.0
  %2475 = vadd.xlane.f32.xlu0 %v2474
  %v2476 = vpop.xlane.xlu0 %2475
  %v2477 = vsel %vm93, %v2226, 0.0
  %2478 = vadd.xlane.f32.xlu0 %v2477
  %v2479 = vpop.xlane.xlu0 %2478
  %v2480 = vsel %vm93, %v2228, 0.0
  %2481 = vadd.xlane.f32.xlu0 %v2480
  %v2482 = vpop.xlane.xlu0 %2481
  %v2483 = vsel %vm93, %v2230, 0.0
  %2484 = vadd.xlane.f32.xlu0 %v2483
  %v2485 = vpop.xlane.xlu0 %2484
  %v2486 = vsel %vm93, %v2232, 0.0
  %2487 = vadd.xlane.f32.xlu0 %v2486
  %v2488 = vpop.xlane.xlu0 %2487
  %v2489 = vsel %vm93, %v2234, 0.0
  %2490 = vadd.xlane.f32.xlu0 %v2489
  %v2491 = vpop.xlane.xlu0 %2490
  %v2492 = vsel %vm93, %v2236, 0.0
  %2493 = vadd.xlane.f32.xlu0 %v2492
  %v2494 = vpop.xlane.xlu0 %2493
  %v2495 = vsel %vm93, %v2238, 0.0
  %2496 = vadd.xlane.f32.xlu0 %v2495
  %v2497 = vpop.xlane.xlu0 %2496
  %v2498 = vsel %vm1198, %v2240, 0.0
  %2499 = vadd.xlane.f32.xlu0 %v2498
  %v2500 = vpop.xlane.xlu0 %2499
  %v2501 = vmul.f32 %v2308, %v1395
  %v2502 = vmul.f32 %v2311, %v1395
  %v2503 = vmul.f32 %v2314, %v1395
  %v2504 = vmul.f32 %v2317, %v1395
  %v2505 = vmul.f32 %v2320, %v1395
  %v2506 = vmul.f32 %v2323, %v1395
  %v2507 = vmul.f32 %v2326, %v1395
  %v2508 = vmul.f32 %v2329, %v1395
  %v2509 = vmul.f32 %v2332, %v1395
  %v2510 = vmul.f32 %v2335, %v1395
  %v2511 = vmul.f32 %v2338, %v1395
  %v2512 = vmul.f32 %v2341, %v1395
  %v2513 = vmul.f32 %v2344, %v1395
  %v2514 = vmul.f32 %v2347, %v1395
  %v2515 = vmul.f32 %v2350, %v1395
  %v2516 = vmul.f32 %v2353, %v1395
  %v2517 = vmul.f32 %v2356, %v1395
  %v2518 = vmul.f32 %v2359, %v1395
  %v2519 = vmul.f32 %v2362, %v1395
  %v2520 = vmul.f32 %v2365, %v1395
  %v2521 = vmul.f32 %v2368, %v1395
  %v2522 = vmul.f32 %v2371, %v1395
  %v2523 = vmul.f32 %v2374, %v1395
  %v2524 = vmul.f32 %v2377, %v1395
  %v2525 = vmul.f32 %v2380, %v1395
  %v2526 = vmul.f32 %v2383, %v1395
  %v2527 = vmul.f32 %v2386, %v1395
  %v2528 = vmul.f32 %v2389, %v1395
  %v2529 = vmul.f32 %v2392, %v1395
  %v2530 = vmul.f32 %v2395, %v1395
  %v2531 = vmul.f32 %v2398, %v1395
  %v2532 = vmul.f32 %v2401, %v1395
  %v2533 = vmul.f32 %v2404, %v1395
  %v2534 = vmul.f32 %v2407, %v1395
  %v2535 = vmul.f32 %v2410, %v1395
  %v2536 = vmul.f32 %v2413, %v1395
  %v2537 = vmul.f32 %v2416, %v1395
  %v2538 = vmul.f32 %v2419, %v1395
  %v2539 = vmul.f32 %v2422, %v1395
  %v2540 = vmul.f32 %v2425, %v1395
  %v2541 = vmul.f32 %v2428, %v1395
  %v2542 = vmul.f32 %v2431, %v1395
  %v2543 = vmul.f32 %v2434, %v1395
  %v2544 = vmul.f32 %v2437, %v1395
  %v2545 = vmul.f32 %v2440, %v1395
  %v2546 = vmul.f32 %v2443, %v1395
  %v2547 = vmul.f32 %v2446, %v1395
  %v2548 = vmul.f32 %v2449, %v1395
  %v2549 = vmul.f32 %v2452, %v1395
  %v2550 = vmul.f32 %v2455, %v1395
  %v2551 = vmul.f32 %v2458, %v1395
  %v2552 = vmul.f32 %v2461, %v1395
  %v2553 = vmul.f32 %v2464, %v1395
  %v2554 = vmul.f32 %v2467, %v1395
  %v2555 = vmul.f32 %v2470, %v1395
  %v2556 = vmul.f32 %v2473, %v1395
  %v2557 = vmul.f32 %v2476, %v1395
  %v2558 = vmul.f32 %v2479, %v1395
  %v2559 = vmul.f32 %v2482, %v1395
  %v2560 = vmul.f32 %v2485, %v1395
  %v2561 = vmul.f32 %v2488, %v1395
  %v2562 = vmul.f32 %v2491, %v1395
  %v2563 = vmul.f32 %v2494, %v1395
  %v2564 = vmul.f32 %v2497, %v1395
  %v2565 = vmul.f32 %v2500, %v1395
  %v2566 = vsub.f32 %v356, %v2501
  %v2567 = vsub.f32 %v361, %v2502
  %v2568 = vsub.f32 %v366, %v2503
  %v2569 = vsub.f32 %v371, %v2504
  %v2570 = vsub.f32 %v376, %v2505
  %v2571 = vsub.f32 %v381, %v2506
  %v2572 = vsub.f32 %v386, %v2507
  %v2573 = vsub.f32 %v391, %v2508
  %v2574 = vsub.f32 %v396, %v2509
  %v2575 = vsub.f32 %v401, %v2510
  %v2576 = vsub.f32 %v406, %v2511
  %v2577 = vsub.f32 %v411, %v2512
  %v2578 = vsub.f32 %v416, %v2513
  %v2579 = vsub.f32 %v421, %v2514
  %v2580 = vsub.f32 %v426, %v2515
  %v2581 = vsub.f32 %v431, %v2516
  %v2582 = vsub.f32 %v436, %v2517
  %v2583 = vsub.f32 %v441, %v2518
  %v2584 = vsub.f32 %v446, %v2519
  %v2585 = vsub.f32 %v451, %v2520
  %v2586 = vsub.f32 %v456, %v2521
  %v2587 = vsub.f32 %v461, %v2522
  %v2588 = vsub.f32 %v466, %v2523
  %v2589 = vsub.f32 %v471, %v2524
  %v2590 = vsub.f32 %v476, %v2525
  %v2591 = vsub.f32 %v481, %v2526
  %v2592 = vsub.f32 %v486, %v2527
  %v2593 = vsub.f32 %v491, %v2528
  %v2594 = vsub.f32 %v496, %v2529
  %v2595 = vsub.f32 %v501, %v2530
  %v2596 = vsub.f32 %v506, %v2531
  %v2597 = vsub.f32 %v511, %v2532
  %v2598 = vsub.f32 %v516, %v2533
  %v2599 = vsub.f32 %v521, %v2534
  %v2600 = vsub.f32 %v526, %v2535
  %v2601 = vsub.f32 %v531, %v2536
  %v2602 = vsub.f32 %v536, %v2537
  %v2603 = vsub.f32 %v541, %v2538
  %v2604 = vsub.f32 %v546, %v2539
  %v2605 = vsub.f32 %v551, %v2540
  %v2606 = vsub.f32 %v556, %v2541
  %v2607 = vsub.f32 %v561, %v2542
  %v2608 = vsub.f32 %v566, %v2543
  %v2609 = vsub.f32 %v571, %v2544
  %v2610 = vsub.f32 %v576, %v2545
  %v2611 = vsub.f32 %v581, %v2546
  %v2612 = vsub.f32 %v586, %v2547
  %v2613 = vsub.f32 %v591, %v2548
  %v2614 = vsub.f32 %v596, %v2549
  %v2615 = vsub.f32 %v601, %v2550
  %v2616 = vsub.f32 %v606, %v2551
  %v2617 = vsub.f32 %v611, %v2552
  %v2618 = vsub.f32 %v616, %v2553
  %v2619 = vsub.f32 %v621, %v2554
  %v2620 = vsub.f32 %v626, %v2555
  %v2621 = vsub.f32 %v631, %v2556
  %v2622 = vsub.f32 %v636, %v2557
  %v2623 = vsub.f32 %v641, %v2558
  %v2624 = vsub.f32 %v646, %v2559
  %v2625 = vsub.f32 %v651, %v2560
  %v2626 = vsub.f32 %v656, %v2561
  %v2627 = vsub.f32 %v661, %v2562
  %v2628 = vsub.f32 %v666, %v2563
  %v2629 = vsub.f32 %v671, %v2564
  %v2630 = vsub.f32 %v676, %v2565
  %v2631 = vmul.f32 %v2566, %v2566
  %v2632 = vmul.f32 %v2567, %v2567
  %v2633 = vmul.f32 %v2568, %v2568
  %v2634 = vmul.f32 %v2569, %v2569
  %v2635 = vmul.f32 %v2570, %v2570
  %v2636 = vmul.f32 %v2571, %v2571
  %v2637 = vmul.f32 %v2572, %v2572
  %v2638 = vmul.f32 %v2573, %v2573
  %v2639 = vmul.f32 %v2574, %v2574
  %v2640 = vmul.f32 %v2575, %v2575
  %v2641 = vmul.f32 %v2576, %v2576
  %v2642 = vmul.f32 %v2577, %v2577
  %v2643 = vmul.f32 %v2578, %v2578
  %v2644 = vmul.f32 %v2579, %v2579
  %v2645 = vmul.f32 %v2580, %v2580
  %v2646 = vmul.f32 %v2581, %v2581
  %v2647 = vmul.f32 %v2582, %v2582
  %v2648 = vmul.f32 %v2583, %v2583
  %v2649 = vmul.f32 %v2584, %v2584
  %v2650 = vmul.f32 %v2585, %v2585
  %v2651 = vmul.f32 %v2586, %v2586
  %v2652 = vmul.f32 %v2587, %v2587
  %v2653 = vmul.f32 %v2588, %v2588
  %v2654 = vmul.f32 %v2589, %v2589
  %v2655 = vmul.f32 %v2590, %v2590
  %v2656 = vmul.f32 %v2591, %v2591
  %v2657 = vmul.f32 %v2592, %v2592
  %v2658 = vmul.f32 %v2593, %v2593
  %v2659 = vmul.f32 %v2594, %v2594
  %v2660 = vmul.f32 %v2595, %v2595
  %v2661 = vmul.f32 %v2596, %v2596
  %v2662 = vmul.f32 %v2597, %v2597
  %v2663 = vmul.f32 %v2598, %v2598
  %v2664 = vmul.f32 %v2599, %v2599
  %v2665 = vmul.f32 %v2600, %v2600
  %v2666 = vmul.f32 %v2601, %v2601
  %v2667 = vmul.f32 %v2602, %v2602
  %v2668 = vmul.f32 %v2603, %v2603
  %v2669 = vmul.f32 %v2604, %v2604
  %v2670 = vmul.f32 %v2605, %v2605
  %v2671 = vmul.f32 %v2606, %v2606
  %v2672 = vmul.f32 %v2607, %v2607
  %v2673 = vmul.f32 %v2608, %v2608
  %v2674 = vmul.f32 %v2609, %v2609
  %v2675 = vmul.f32 %v2610, %v2610
  %v2676 = vmul.f32 %v2611, %v2611
  %v2677 = vmul.f32 %v2612, %v2612
  %v2678 = vmul.f32 %v2613, %v2613
  %v2679 = vmul.f32 %v2614, %v2614
  %v2680 = vmul.f32 %v2615, %v2615
  %v2681 = vmul.f32 %v2616, %v2616
  %v2682 = vmul.f32 %v2617, %v2617
  %v2683 = vmul.f32 %v2618, %v2618
  %v2684 = vmul.f32 %v2619, %v2619
  %v2685 = vmul.f32 %v2620, %v2620
  %v2686 = vmul.f32 %v2621, %v2621
  %v2687 = vmul.f32 %v2622, %v2622
  %v2688 = vmul.f32 %v2623, %v2623
  %v2689 = vmul.f32 %v2624, %v2624
  %v2690 = vmul.f32 %v2625, %v2625
  %v2691 = vmul.f32 %v2626, %v2626
  %v2692 = vmul.f32 %v2627, %v2627
  %v2693 = vmul.f32 %v2628, %v2628
  %v2694 = vmul.f32 %v2629, %v2629
  %v2695 = vmul.f32 %v2630, %v2630
  %2761 = vrot.lane.b32.xlu0 %v2631, 96
  %v2762 = vpop.permute.xlu0 %2761
  %2763 = vrot.lane.b32.xlu0 %v2632, 96
  %v2764 = vpop.permute.xlu0 %2763
  %2765 = vrot.lane.b32.xlu0 %v2633, 96
  %v2766 = vpop.permute.xlu0 %2765
  %2767 = vrot.lane.b32.xlu0 %v2634, 96
  %v2768 = vpop.permute.xlu0 %2767
  %2769 = vrot.lane.b32.xlu0 %v2635, 96
  %v2770 = vpop.permute.xlu0 %2769
  %2771 = vrot.lane.b32.xlu0 %v2636, 96
  %v2772 = vpop.permute.xlu0 %2771
  %2773 = vrot.lane.b32.xlu0 %v2637, 96
  %v2774 = vpop.permute.xlu0 %2773
  %2775 = vrot.lane.b32.xlu0 %v2638, 96
  %v2776 = vpop.permute.xlu0 %2775
  %2777 = vrot.lane.b32.xlu0 %v2639, 96
  %v2778 = vpop.permute.xlu0 %2777
  %2779 = vrot.lane.b32.xlu0 %v2640, 96
  %v2780 = vpop.permute.xlu0 %2779
  %2781 = vrot.lane.b32.xlu0 %v2641, 96
  %v2782 = vpop.permute.xlu0 %2781
  %2783 = vrot.lane.b32.xlu0 %v2642, 96
  %v2784 = vpop.permute.xlu0 %2783
  %2785 = vrot.lane.b32.xlu0 %v2643, 96
  %v2786 = vpop.permute.xlu0 %2785
  %2787 = vrot.lane.b32.xlu0 %v2644, 96
  %v2788 = vpop.permute.xlu0 %2787
  %2789 = vrot.lane.b32.xlu0 %v2645, 96
  %v2790 = vpop.permute.xlu0 %2789
  %2791 = vrot.lane.b32.xlu0 %v2646, 96
  %v2792 = vpop.permute.xlu0 %2791
  %2793 = vrot.lane.b32.xlu0 %v2647, 96
  %v2794 = vpop.permute.xlu0 %2793
  %2795 = vrot.lane.b32.xlu0 %v2648, 96
  %v2796 = vpop.permute.xlu0 %2795
  %2797 = vrot.lane.b32.xlu0 %v2649, 96
  %v2798 = vpop.permute.xlu0 %2797
  %2799 = vrot.lane.b32.xlu0 %v2650, 96
  %v2800 = vpop.permute.xlu0 %2799
  %2801 = vrot.lane.b32.xlu0 %v2651, 96
  %v2802 = vpop.permute.xlu0 %2801
  %2803 = vrot.lane.b32.xlu0 %v2652, 96
  %v2804 = vpop.permute.xlu0 %2803
  %2805 = vrot.lane.b32.xlu0 %v2653, 96
  %v2806 = vpop.permute.xlu0 %2805
  %2807 = vrot.lane.b32.xlu0 %v2654, 96
  %v2808 = vpop.permute.xlu0 %2807
  %2809 = vrot.lane.b32.xlu0 %v2655, 96
  %v2810 = vpop.permute.xlu0 %2809
  %2811 = vrot.lane.b32.xlu0 %v2656, 96
  %v2812 = vpop.permute.xlu0 %2811
  %2813 = vrot.lane.b32.xlu0 %v2657, 96
  %v2814 = vpop.permute.xlu0 %2813
  %2815 = vrot.lane.b32.xlu0 %v2658, 96
  %v2816 = vpop.permute.xlu0 %2815
  %2817 = vrot.lane.b32.xlu0 %v2659, 96
  %v2818 = vpop.permute.xlu0 %2817
  %2819 = vrot.lane.b32.xlu0 %v2660, 96
  %v2820 = vpop.permute.xlu0 %2819
  %2821 = vrot.lane.b32.xlu0 %v2661, 96
  %v2822 = vpop.permute.xlu0 %2821
  %2823 = vrot.lane.b32.xlu0 %v2662, 96
  %v2824 = vpop.permute.xlu0 %2823
  %2825 = vrot.lane.b32.xlu0 %v2663, 96
  %v2826 = vpop.permute.xlu0 %2825
  %2827 = vrot.lane.b32.xlu0 %v2664, 96
  %v2828 = vpop.permute.xlu0 %2827
  %2829 = vrot.lane.b32.xlu0 %v2665, 96
  %v2830 = vpop.permute.xlu0 %2829
  %2831 = vrot.lane.b32.xlu0 %v2666, 96
  %v2832 = vpop.permute.xlu0 %2831
  %2833 = vrot.lane.b32.xlu0 %v2667, 96
  %v2834 = vpop.permute.xlu0 %2833
  %2835 = vrot.lane.b32.xlu0 %v2668, 96
  %v2836 = vpop.permute.xlu0 %2835
  %2837 = vrot.lane.b32.xlu0 %v2669, 96
  %v2838 = vpop.permute.xlu0 %2837
  %2839 = vrot.lane.b32.xlu0 %v2670, 96
  %v2840 = vpop.permute.xlu0 %2839
  %2841 = vrot.lane.b32.xlu0 %v2671, 96
  %v2842 = vpop.permute.xlu0 %2841
  %2843 = vrot.lane.b32.xlu0 %v2672, 96
  %v2844 = vpop.permute.xlu0 %2843
  %2845 = vrot.lane.b32.xlu0 %v2673, 96
  %v2846 = vpop.permute.xlu0 %2845
  %2847 = vrot.lane.b32.xlu0 %v2674, 96
  %v2848 = vpop.permute.xlu0 %2847
  %2849 = vrot.lane.b32.xlu0 %v2675, 96
  %v2850 = vpop.permute.xlu0 %2849
  %2851 = vrot.lane.b32.xlu0 %v2676, 96
  %v2852 = vpop.permute.xlu0 %2851
  %2853 = vrot.lane.b32.xlu0 %v2677, 96
  %v2854 = vpop.permute.xlu0 %2853
  %2855 = vrot.lane.b32.xlu0 %v2678, 96
  %v2856 = vpop.permute.xlu0 %2855
  %2857 = vrot.lane.b32.xlu0 %v2679, 96
  %v2858 = vpop.permute.xlu0 %2857
  %2859 = vrot.lane.b32.xlu0 %v2680, 96
  %v2860 = vpop.permute.xlu0 %2859
  %2861 = vrot.lane.b32.xlu0 %v2681, 96
  %v2862 = vpop.permute.xlu0 %2861
  %2863 = vrot.lane.b32.xlu0 %v2682, 96
  %v2864 = vpop.permute.xlu0 %2863
  %2865 = vrot.lane.b32.xlu0 %v2683, 96
  %v2866 = vpop.permute.xlu0 %2865
  %2867 = vrot.lane.b32.xlu0 %v2684, 96
  %v2868 = vpop.permute.xlu0 %2867
  %2869 = vrot.lane.b32.xlu0 %v2685, 96
  %v2870 = vpop.permute.xlu0 %2869
  %2871 = vrot.lane.b32.xlu0 %v2686, 96
  %v2872 = vpop.permute.xlu0 %2871
  %2873 = vrot.lane.b32.xlu0 %v2687, 96
  %v2874 = vpop.permute.xlu0 %2873
  %2875 = vrot.lane.b32.xlu0 %v2688, 96
  %v2876 = vpop.permute.xlu0 %2875
  %2877 = vrot.lane.b32.xlu0 %v2689, 96
  %v2878 = vpop.permute.xlu0 %2877
  %2879 = vrot.lane.b32.xlu0 %v2690, 96
  %v2880 = vpop.permute.xlu0 %2879
  %2881 = vrot.lane.b32.xlu0 %v2691, 96
  %v2882 = vpop.permute.xlu0 %2881
  %2883 = vrot.lane.b32.xlu0 %v2692, 96
  %v2884 = vpop.permute.xlu0 %2883
  %2885 = vrot.lane.b32.xlu0 %v2693, 96
  %v2886 = vpop.permute.xlu0 %2885
  %2887 = vrot.lane.b32.xlu0 %v2694, 96
  %v2888 = vpop.permute.xlu0 %2887
  %2889 = vrot.lane.b32.xlu0 %v2695, 96
  %v2890 = vpop.permute.xlu0 %2889
  %v2956 = vsel %vm93, %v2762, 0.0
  %2957 = vadd.xlane.f32.xlu0 %v2956
  %v2958 = vpop.xlane.xlu0 %2957
  %v2959 = vsel %vm93, %v2764, 0.0
  %2960 = vadd.xlane.f32.xlu0 %v2959
  %v2961 = vpop.xlane.xlu0 %2960
  %v2962 = vsel %vm93, %v2766, 0.0
  %2963 = vadd.xlane.f32.xlu0 %v2962
  %v2964 = vpop.xlane.xlu0 %2963
  %v2965 = vsel %vm93, %v2768, 0.0
  %2966 = vadd.xlane.f32.xlu0 %v2965
  %v2967 = vpop.xlane.xlu0 %2966
  %v2968 = vsel %vm93, %v2770, 0.0
  %2969 = vadd.xlane.f32.xlu0 %v2968
  %v2970 = vpop.xlane.xlu0 %2969
  %v2971 = vsel %vm93, %v2772, 0.0
  %2972 = vadd.xlane.f32.xlu0 %v2971
  %v2973 = vpop.xlane.xlu0 %2972
  %v2974 = vsel %vm93, %v2774, 0.0
  %2975 = vadd.xlane.f32.xlu0 %v2974
  %v2976 = vpop.xlane.xlu0 %2975
  %v2977 = vsel %vm93, %v2776, 0.0
  %2978 = vadd.xlane.f32.xlu0 %v2977
  %v2979 = vpop.xlane.xlu0 %2978
  %v2980 = vsel %vm93, %v2778, 0.0
  %2981 = vadd.xlane.f32.xlu0 %v2980
  %v2982 = vpop.xlane.xlu0 %2981
  %v2983 = vsel %vm93, %v2780, 0.0
  %2984 = vadd.xlane.f32.xlu0 %v2983
  %v2985 = vpop.xlane.xlu0 %2984
  %v2986 = vsel %vm93, %v2782, 0.0
  %2987 = vadd.xlane.f32.xlu0 %v2986
  %v2988 = vpop.xlane.xlu0 %2987
  %v2989 = vsel %vm93, %v2784, 0.0
  %2990 = vadd.xlane.f32.xlu0 %v2989
  %v2991 = vpop.xlane.xlu0 %2990
  %v2992 = vsel %vm93, %v2786, 0.0
  %2993 = vadd.xlane.f32.xlu0 %v2992
  %v2994 = vpop.xlane.xlu0 %2993
  %v2995 = vsel %vm93, %v2788, 0.0
  %2996 = vadd.xlane.f32.xlu0 %v2995
  %v2997 = vpop.xlane.xlu0 %2996
  %v2998 = vsel %vm93, %v2790, 0.0
  %2999 = vadd.xlane.f32.xlu0 %v2998
  %v3000 = vpop.xlane.xlu0 %2999
  %v3001 = vsel %vm93, %v2792, 0.0
  %3002 = vadd.xlane.f32.xlu0 %v3001
  %v3003 = vpop.xlane.xlu0 %3002
  %v3004 = vsel %vm93, %v2794, 0.0
  %3005 = vadd.xlane.f32.xlu0 %v3004
  %v3006 = vpop.xlane.xlu0 %3005
  %v3007 = vsel %vm93, %v2796, 0.0
  %3008 = vadd.xlane.f32.xlu0 %v3007
  %v3009 = vpop.xlane.xlu0 %3008
  %v3010 = vsel %vm93, %v2798, 0.0
  %3011 = vadd.xlane.f32.xlu0 %v3010
  %v3012 = vpop.xlane.xlu0 %3011
  %v3013 = vsel %vm93, %v2800, 0.0
  %3014 = vadd.xlane.f32.xlu0 %v3013
  %v3015 = vpop.xlane.xlu0 %3014
  %v3016 = vsel %vm93, %v2802, 0.0
  %3017 = vadd.xlane.f32.xlu0 %v3016
  %v3018 = vpop.xlane.xlu0 %3017
  %v3019 = vsel %vm93, %v2804, 0.0
  %3020 = vadd.xlane.f32.xlu0 %v3019
  %v3021 = vpop.xlane.xlu0 %3020
  %v3022 = vsel %vm93, %v2806, 0.0
  %3023 = vadd.xlane.f32.xlu0 %v3022
  %v3024 = vpop.xlane.xlu0 %3023
  %v3025 = vsel %vm93, %v2808, 0.0
  %3026 = vadd.xlane.f32.xlu0 %v3025
  %v3027 = vpop.xlane.xlu0 %3026
  %v3028 = vsel %vm93, %v2810, 0.0
  %3029 = vadd.xlane.f32.xlu0 %v3028
  %v3030 = vpop.xlane.xlu0 %3029
  %v3031 = vsel %vm93, %v2812, 0.0
  %3032 = vadd.xlane.f32.xlu0 %v3031
  %v3033 = vpop.xlane.xlu0 %3032
  %v3034 = vsel %vm93, %v2814, 0.0
  %3035 = vadd.xlane.f32.xlu0 %v3034
  %v3036 = vpop.xlane.xlu0 %3035
  %v3037 = vsel %vm93, %v2816, 0.0
  %3038 = vadd.xlane.f32.xlu0 %v3037
  %v3039 = vpop.xlane.xlu0 %3038
  %v3040 = vsel %vm93, %v2818, 0.0
  %3041 = vadd.xlane.f32.xlu0 %v3040
  %v3042 = vpop.xlane.xlu0 %3041
  %v3043 = vsel %vm93, %v2820, 0.0
  %3044 = vadd.xlane.f32.xlu0 %v3043
  %v3045 = vpop.xlane.xlu0 %3044
  %v3046 = vsel %vm93, %v2822, 0.0
  %3047 = vadd.xlane.f32.xlu0 %v3046
  %v3048 = vpop.xlane.xlu0 %3047
  %v3049 = vsel %vm93, %v2824, 0.0
  %3050 = vadd.xlane.f32.xlu0 %v3049
  %v3051 = vpop.xlane.xlu0 %3050
  %v3052 = vsel %vm93, %v2826, 0.0
  %3053 = vadd.xlane.f32.xlu0 %v3052
  %v3054 = vpop.xlane.xlu0 %3053
  %v3055 = vsel %vm93, %v2828, 0.0
  %3056 = vadd.xlane.f32.xlu0 %v3055
  %v3057 = vpop.xlane.xlu0 %3056
  %v3058 = vsel %vm93, %v2830, 0.0
  %3059 = vadd.xlane.f32.xlu0 %v3058
  %v3060 = vpop.xlane.xlu0 %3059
  %v3061 = vsel %vm93, %v2832, 0.0
  %3062 = vadd.xlane.f32.xlu0 %v3061
  %v3063 = vpop.xlane.xlu0 %3062
  %v3064 = vsel %vm93, %v2834, 0.0
  %3065 = vadd.xlane.f32.xlu0 %v3064
  %v3066 = vpop.xlane.xlu0 %3065
  %v3067 = vsel %vm93, %v2836, 0.0
  %3068 = vadd.xlane.f32.xlu0 %v3067
  %v3069 = vpop.xlane.xlu0 %3068
  %v3070 = vsel %vm93, %v2838, 0.0
  %3071 = vadd.xlane.f32.xlu0 %v3070
  %v3072 = vpop.xlane.xlu0 %3071
  %v3073 = vsel %vm93, %v2840, 0.0
  %3074 = vadd.xlane.f32.xlu0 %v3073
  %v3075 = vpop.xlane.xlu0 %3074
  %v3076 = vsel %vm93, %v2842, 0.0
  %3077 = vadd.xlane.f32.xlu0 %v3076
  %v3078 = vpop.xlane.xlu0 %3077
  %v3079 = vsel %vm93, %v2844, 0.0
  %3080 = vadd.xlane.f32.xlu0 %v3079
  %v3081 = vpop.xlane.xlu0 %3080
  %v3082 = vsel %vm93, %v2846, 0.0
  %3083 = vadd.xlane.f32.xlu0 %v3082
  %v3084 = vpop.xlane.xlu0 %3083
  %v3085 = vsel %vm93, %v2848, 0.0
  %3086 = vadd.xlane.f32.xlu0 %v3085
  %v3087 = vpop.xlane.xlu0 %3086
  %v3088 = vsel %vm93, %v2850, 0.0
  %3089 = vadd.xlane.f32.xlu0 %v3088
  %v3090 = vpop.xlane.xlu0 %3089
  %v3091 = vsel %vm93, %v2852, 0.0
  %3092 = vadd.xlane.f32.xlu0 %v3091
  %v3093 = vpop.xlane.xlu0 %3092
  %v3094 = vsel %vm93, %v2854, 0.0
  %3095 = vadd.xlane.f32.xlu0 %v3094
  %v3096 = vpop.xlane.xlu0 %3095
  %v3097 = vsel %vm93, %v2856, 0.0
  %3098 = vadd.xlane.f32.xlu0 %v3097
  %v3099 = vpop.xlane.xlu0 %3098
  %v3100 = vsel %vm93, %v2858, 0.0
  %3101 = vadd.xlane.f32.xlu0 %v3100
  %v3102 = vpop.xlane.xlu0 %3101
  %v3103 = vsel %vm93, %v2860, 0.0
  %3104 = vadd.xlane.f32.xlu0 %v3103
  %v3105 = vpop.xlane.xlu0 %3104
  %v3106 = vsel %vm93, %v2862, 0.0
  %3107 = vadd.xlane.f32.xlu0 %v3106
  %v3108 = vpop.xlane.xlu0 %3107
  %v3109 = vsel %vm93, %v2864, 0.0
  %3110 = vadd.xlane.f32.xlu0 %v3109
  %v3111 = vpop.xlane.xlu0 %3110
  %v3112 = vsel %vm93, %v2866, 0.0
  %3113 = vadd.xlane.f32.xlu0 %v3112
  %v3114 = vpop.xlane.xlu0 %3113
  %v3115 = vsel %vm93, %v2868, 0.0
  %3116 = vadd.xlane.f32.xlu0 %v3115
  %v3117 = vpop.xlane.xlu0 %3116
  %v3118 = vsel %vm93, %v2870, 0.0
  %3119 = vadd.xlane.f32.xlu0 %v3118
  %v3120 = vpop.xlane.xlu0 %3119
  %v3121 = vsel %vm93, %v2872, 0.0
  %3122 = vadd.xlane.f32.xlu0 %v3121
  %v3123 = vpop.xlane.xlu0 %3122
  %v3124 = vsel %vm93, %v2874, 0.0
  %3125 = vadd.xlane.f32.xlu0 %v3124
  %v3126 = vpop.xlane.xlu0 %3125
  %v3127 = vsel %vm93, %v2876, 0.0
  %3128 = vadd.xlane.f32.xlu0 %v3127
  %v3129 = vpop.xlane.xlu0 %3128
  %v3130 = vsel %vm93, %v2878, 0.0
  %3131 = vadd.xlane.f32.xlu0 %v3130
  %v3132 = vpop.xlane.xlu0 %3131
  %v3133 = vsel %vm93, %v2880, 0.0
  %3134 = vadd.xlane.f32.xlu0 %v3133
  %v3135 = vpop.xlane.xlu0 %3134
  %v3136 = vsel %vm93, %v2882, 0.0
  %3137 = vadd.xlane.f32.xlu0 %v3136
  %v3138 = vpop.xlane.xlu0 %3137
  %v3139 = vsel %vm93, %v2884, 0.0
  %3140 = vadd.xlane.f32.xlu0 %v3139
  %v3141 = vpop.xlane.xlu0 %3140
  %v3142 = vsel %vm93, %v2886, 0.0
  %3143 = vadd.xlane.f32.xlu0 %v3142
  %v3144 = vpop.xlane.xlu0 %3143
  %v3145 = vsel %vm93, %v2888, 0.0
  %3146 = vadd.xlane.f32.xlu0 %v3145
  %v3147 = vpop.xlane.xlu0 %3146
  %v3148 = vsel %vm1198, %v2890, 0.0
  %3149 = vadd.xlane.f32.xlu0 %v3148
  %v3150 = vpop.xlane.xlu0 %3149
  %v3151 = vmul.f32 %v2958, %v1395
  %v3152 = vmul.f32 %v2961, %v1395
  %v3153 = vmul.f32 %v2964, %v1395
  %v3154 = vmul.f32 %v2967, %v1395
  %v3155 = vmul.f32 %v2970, %v1395
  %v3156 = vmul.f32 %v2973, %v1395
  %v3157 = vmul.f32 %v2976, %v1395
  %v3158 = vmul.f32 %v2979, %v1395
  %v3159 = vmul.f32 %v2982, %v1395
  %v3160 = vmul.f32 %v2985, %v1395
  %v3161 = vmul.f32 %v2988, %v1395
  %v3162 = vmul.f32 %v2991, %v1395
  %v3163 = vmul.f32 %v2994, %v1395
  %v3164 = vmul.f32 %v2997, %v1395
  %v3165 = vmul.f32 %v3000, %v1395
  %v3166 = vmul.f32 %v3003, %v1395
  %v3167 = vmul.f32 %v3006, %v1395
  %v3168 = vmul.f32 %v3009, %v1395
  %v3169 = vmul.f32 %v3012, %v1395
  %v3170 = vmul.f32 %v3015, %v1395
  %v3171 = vmul.f32 %v3018, %v1395
  %v3172 = vmul.f32 %v3021, %v1395
  %v3173 = vmul.f32 %v3024, %v1395
  %v3174 = vmul.f32 %v3027, %v1395
  %v3175 = vmul.f32 %v3030, %v1395
  %v3176 = vmul.f32 %v3033, %v1395
  %v3177 = vmul.f32 %v3036, %v1395
  %v3178 = vmul.f32 %v3039, %v1395
  %v3179 = vmul.f32 %v3042, %v1395
  %v3180 = vmul.f32 %v3045, %v1395
  %v3181 = vmul.f32 %v3048, %v1395
  %v3182 = vmul.f32 %v3051, %v1395
  %v3183 = vmul.f32 %v3054, %v1395
  %v3184 = vmul.f32 %v3057, %v1395
  %v3185 = vmul.f32 %v3060, %v1395
  %v3186 = vmul.f32 %v3063, %v1395
  %v3187 = vmul.f32 %v3066, %v1395
  %v3188 = vmul.f32 %v3069, %v1395
  %v3189 = vmul.f32 %v3072, %v1395
  %v3190 = vmul.f32 %v3075, %v1395
  %v3191 = vmul.f32 %v3078, %v1395
  %v3192 = vmul.f32 %v3081, %v1395
  %v3193 = vmul.f32 %v3084, %v1395
  %v3194 = vmul.f32 %v3087, %v1395
  %v3195 = vmul.f32 %v3090, %v1395
  %v3196 = vmul.f32 %v3093, %v1395
  %v3197 = vmul.f32 %v3096, %v1395
  %v3198 = vmul.f32 %v3099, %v1395
  %v3199 = vmul.f32 %v3102, %v1395
  %v3200 = vmul.f32 %v3105, %v1395
  %v3201 = vmul.f32 %v3108, %v1395
  %v3202 = vmul.f32 %v3111, %v1395
  %v3203 = vmul.f32 %v3114, %v1395
  %v3204 = vmul.f32 %v3117, %v1395
  %v3205 = vmul.f32 %v3120, %v1395
  %v3206 = vmul.f32 %v3123, %v1395
  %v3207 = vmul.f32 %v3126, %v1395
  %v3208 = vmul.f32 %v3129, %v1395
  %v3209 = vmul.f32 %v3132, %v1395
  %v3210 = vmul.f32 %v3135, %v1395
  %v3211 = vmul.f32 %v3138, %v1395
  %v3212 = vmul.f32 %v3141, %v1395
  %v3213 = vmul.f32 %v3144, %v1395
  %v3214 = vmul.f32 %v3147, %v1395
  %v3215 = vmul.f32 %v3150, %v1395
  %v3216 = vadd.f32 %v3151, 1e-06
  %v3217 = vadd.f32 %v3152, 1e-06
  %v3218 = vadd.f32 %v3153, 1e-06
  %v3219 = vadd.f32 %v3154, 1e-06
  %v3220 = vadd.f32 %v3155, 1e-06
  %v3221 = vadd.f32 %v3156, 1e-06
  %v3222 = vadd.f32 %v3157, 1e-06
  %v3223 = vadd.f32 %v3158, 1e-06
  %v3224 = vadd.f32 %v3159, 1e-06
  %v3225 = vadd.f32 %v3160, 1e-06
  %v3226 = vadd.f32 %v3161, 1e-06
  %v3227 = vadd.f32 %v3162, 1e-06
  %v3228 = vadd.f32 %v3163, 1e-06
  %v3229 = vadd.f32 %v3164, 1e-06
  %v3230 = vadd.f32 %v3165, 1e-06
  %v3231 = vadd.f32 %v3166, 1e-06
  %v3232 = vadd.f32 %v3167, 1e-06
  %v3233 = vadd.f32 %v3168, 1e-06
  %v3234 = vadd.f32 %v3169, 1e-06
  %v3235 = vadd.f32 %v3170, 1e-06
  %v3236 = vadd.f32 %v3171, 1e-06
  %v3237 = vadd.f32 %v3172, 1e-06
  %v3238 = vadd.f32 %v3173, 1e-06
  %v3239 = vadd.f32 %v3174, 1e-06
  %v3240 = vadd.f32 %v3175, 1e-06
  %v3241 = vadd.f32 %v3176, 1e-06
  %v3242 = vadd.f32 %v3177, 1e-06
  %v3243 = vadd.f32 %v3178, 1e-06
  %v3244 = vadd.f32 %v3179, 1e-06
  %v3245 = vadd.f32 %v3180, 1e-06
  %v3246 = vadd.f32 %v3181, 1e-06
  %v3247 = vadd.f32 %v3182, 1e-06
  %v3248 = vadd.f32 %v3183, 1e-06
  %v3249 = vadd.f32 %v3184, 1e-06
  %v3250 = vadd.f32 %v3185, 1e-06
  %v3251 = vadd.f32 %v3186, 1e-06
  %v3252 = vadd.f32 %v3187, 1e-06
  %v3253 = vadd.f32 %v3188, 1e-06
  %v3254 = vadd.f32 %v3189, 1e-06
  %v3255 = vadd.f32 %v3190, 1e-06
  %v3256 = vadd.f32 %v3191, 1e-06
  %v3257 = vadd.f32 %v3192, 1e-06
  %v3258 = vadd.f32 %v3193, 1e-06
  %v3259 = vadd.f32 %v3194, 1e-06
  %v3260 = vadd.f32 %v3195, 1e-06
  %v3261 = vadd.f32 %v3196, 1e-06
  %v3262 = vadd.f32 %v3197, 1e-06
  %v3263 = vadd.f32 %v3198, 1e-06
  %v3264 = vadd.f32 %v3199, 1e-06
  %v3265 = vadd.f32 %v3200, 1e-06
  %v3266 = vadd.f32 %v3201, 1e-06
  %v3267 = vadd.f32 %v3202, 1e-06
  %v3268 = vadd.f32 %v3203, 1e-06
  %v3269 = vadd.f32 %v3204, 1e-06
  %v3270 = vadd.f32 %v3205, 1e-06
  %v3271 = vadd.f32 %v3206, 1e-06
  %v3272 = vadd.f32 %v3207, 1e-06
  %v3273 = vadd.f32 %v3208, 1e-06
  %v3274 = vadd.f32 %v3209, 1e-06
  %v3275 = vadd.f32 %v3210, 1e-06
  %v3276 = vadd.f32 %v3211, 1e-06
  %v3277 = vadd.f32 %v3212, 1e-06
  %v3278 = vadd.f32 %v3213, 1e-06
  %v3279 = vadd.f32 %v3214, 1e-06
  %v3280 = vadd.f32 %v3215, 1e-06
  %v3281 = vrsqrt.pop %v3216
  %v3282 = vrsqrt.pop %v3217
  %v3283 = vrsqrt.pop %v3218
  %v3284 = vrsqrt.pop %v3219
  %v3285 = vrsqrt.pop %v3220
  %v3286 = vrsqrt.pop %v3221
  %v3287 = vrsqrt.pop %v3222
  %v3288 = vrsqrt.pop %v3223
  %v3289 = vrsqrt.pop %v3224
  %v3290 = vrsqrt.pop %v3225
  %v3291 = vrsqrt.pop %v3226
  %v3292 = vrsqrt.pop %v3227
  %v3293 = vrsqrt.pop %v3228
  %v3294 = vrsqrt.pop %v3229
  %v3295 = vrsqrt.pop %v3230
  %v3296 = vrsqrt.pop %v3231
  %v3297 = vrsqrt.pop %v3232
  %v3298 = vrsqrt.pop %v3233
  %v3299 = vrsqrt.pop %v3234
  %v3300 = vrsqrt.pop %v3235
  %v3301 = vrsqrt.pop %v3236
  %v3302 = vrsqrt.pop %v3237
  %v3303 = vrsqrt.pop %v3238
  %v3304 = vrsqrt.pop %v3239
  %v3305 = vrsqrt.pop %v3240
  %v3306 = vrsqrt.pop %v3241
  %v3307 = vrsqrt.pop %v3242
  %v3308 = vrsqrt.pop %v3243
  %v3309 = vrsqrt.pop %v3244
  %v3310 = vrsqrt.pop %v3245
  %v3311 = vrsqrt.pop %v3246
  %v3312 = vrsqrt.pop %v3247
  %v3313 = vrsqrt.pop %v3248
  %v3314 = vrsqrt.pop %v3249
  %v3315 = vrsqrt.pop %v3250
  %v3316 = vrsqrt.pop %v3251
  %v3317 = vrsqrt.pop %v3252
  %v3318 = vrsqrt.pop %v3253
  %v3319 = vrsqrt.pop %v3254
  %v3320 = vrsqrt.pop %v3255
  %v3321 = vrsqrt.pop %v3256
  %v3322 = vrsqrt.pop %v3257
  %v3323 = vrsqrt.pop %v3258
  %v3324 = vrsqrt.pop %v3259
  %v3325 = vrsqrt.pop %v3260
  %v3326 = vrsqrt.pop %v3261
  %v3327 = vrsqrt.pop %v3262
  %v3328 = vrsqrt.pop %v3263
  %v3329 = vrsqrt.pop %v3264
  %v3330 = vrsqrt.pop %v3265
  %v3331 = vrsqrt.pop %v3266
  %v3332 = vrsqrt.pop %v3267
  %v3333 = vrsqrt.pop %v3268
  %v3334 = vrsqrt.pop %v3269
  %v3335 = vrsqrt.pop %v3270
  %v3336 = vrsqrt.pop %v3271
  %v3337 = vrsqrt.pop %v3272
  %v3338 = vrsqrt.pop %v3273
  %v3339 = vrsqrt.pop %v3274
  %v3340 = vrsqrt.pop %v3275
  %v3341 = vrsqrt.pop %v3276
  %v3342 = vrsqrt.pop %v3277
  %v3343 = vrsqrt.pop %v3278
  %v3344 = vrsqrt.pop %v3279
  %v3345 = vrsqrt.pop %v3280
  %v3346 = vmul.f32 %v2566, %v3281
  %v3347 = vmul.f32 %v2567, %v3282
  %v3348 = vmul.f32 %v2568, %v3283
  %v3349 = vmul.f32 %v2569, %v3284
  %v3350 = vmul.f32 %v2570, %v3285
  %v3351 = vmul.f32 %v2571, %v3286
  %v3352 = vmul.f32 %v2572, %v3287
  %v3353 = vmul.f32 %v2573, %v3288
  %v3354 = vmul.f32 %v2574, %v3289
  %v3355 = vmul.f32 %v2575, %v3290
  %v3356 = vmul.f32 %v2576, %v3291
  %v3357 = vmul.f32 %v2577, %v3292
  %v3358 = vmul.f32 %v2578, %v3293
  %v3359 = vmul.f32 %v2579, %v3294
  %v3360 = vmul.f32 %v2580, %v3295
  %v3361 = vmul.f32 %v2581, %v3296
  %v3362 = vmul.f32 %v2582, %v3297
  %v3363 = vmul.f32 %v2583, %v3298
  %v3364 = vmul.f32 %v2584, %v3299
  %v3365 = vmul.f32 %v2585, %v3300
  %v3366 = vmul.f32 %v2586, %v3301
  %v3367 = vmul.f32 %v2587, %v3302
  %v3368 = vmul.f32 %v2588, %v3303
  %v3369 = vmul.f32 %v2589, %v3304
  %v3370 = vmul.f32 %v2590, %v3305
  %v3371 = vmul.f32 %v2591, %v3306
  %v3372 = vmul.f32 %v2592, %v3307
  %v3373 = vmul.f32 %v2593, %v3308
  %v3374 = vmul.f32 %v2594, %v3309
  %v3375 = vmul.f32 %v2595, %v3310
  %v3376 = vmul.f32 %v2596, %v3311
  %v3377 = vmul.f32 %v2597, %v3312
  %v3378 = vmul.f32 %v2598, %v3313
  %v3379 = vmul.f32 %v2599, %v3314
  %v3380 = vmul.f32 %v2600, %v3315
  %v3381 = vmul.f32 %v2601, %v3316
  %v3382 = vmul.f32 %v2602, %v3317
  %v3383 = vmul.f32 %v2603, %v3318
  %v3384 = vmul.f32 %v2604, %v3319
  %v3385 = vmul.f32 %v2605, %v3320
  %v3386 = vmul.f32 %v2606, %v3321
  %v3387 = vmul.f32 %v2607, %v3322
  %v3388 = vmul.f32 %v2608, %v3323
  %v3389 = vmul.f32 %v2609, %v3324
  %v3390 = vmul.f32 %v2610, %v3325
  %v3391 = vmul.f32 %v2611, %v3326
  %v3392 = vmul.f32 %v2612, %v3327
  %v3393 = vmul.f32 %v2613, %v3328
  %v3394 = vmul.f32 %v2614, %v3329
  %v3395 = vmul.f32 %v2615, %v3330
  %v3396 = vmul.f32 %v2616, %v3331
  %v3397 = vmul.f32 %v2617, %v3332
  %v3398 = vmul.f32 %v2618, %v3333
  %v3399 = vmul.f32 %v2619, %v3334
  %v3400 = vmul.f32 %v2620, %v3335
  %v3401 = vmul.f32 %v2621, %v3336
  %v3402 = vmul.f32 %v2622, %v3337
  %v3403 = vmul.f32 %v2623, %v3338
  %v3404 = vmul.f32 %v2624, %v3339
  %v3405 = vmul.f32 %v2625, %v3340
  %v3406 = vmul.f32 %v2626, %v3341
  %v3407 = vmul.f32 %v2627, %v3342
  %v3408 = vmul.f32 %v2628, %v3343
  %v3409 = vmul.f32 %v2629, %v3344
  %v3410 = vmul.f32 %v2630, %v3345
  %v3411 = vsel %vm93, %v1981, %v3346
  %v3412 = vsel %vm93, %v1982, %v3347
  %v3413 = vsel %vm93, %v1983, %v3348
  %v3414 = vsel %vm93, %v1984, %v3349
  %v3415 = vsel %vm93, %v1985, %v3350
  %v3416 = vsel %vm93, %v1986, %v3351
  %v3417 = vsel %vm93, %v1987, %v3352
  %v3418 = vsel %vm93, %v1988, %v3353
  %v3419 = vsel %vm93, %v1989, %v3354
  %v3420 = vsel %vm93, %v1990, %v3355
  %v3421 = vsel %vm93, %v1991, %v3356
  %v3422 = vsel %vm93, %v1992, %v3357
  %v3423 = vsel %vm93, %v1993, %v3358
  %v3424 = vsel %vm93, %v1994, %v3359
  %v3425 = vsel %vm93, %v1995, %v3360
  %v3426 = vsel %vm93, %v1996, %v3361
  %v3427 = vsel %vm93, %v1997, %v3362
  %v3428 = vsel %vm93, %v1998, %v3363
  %v3429 = vsel %vm93, %v1999, %v3364
  %v3430 = vsel %vm93, %v2000, %v3365
  %v3431 = vsel %vm93, %v2001, %v3366
  %v3432 = vsel %vm93, %v2002, %v3367
  %v3433 = vsel %vm93, %v2003, %v3368
  %v3434 = vsel %vm93, %v2004, %v3369
  %v3435 = vsel %vm93, %v2005, %v3370
  %v3436 = vsel %vm93, %v2006, %v3371
  %v3437 = vsel %vm93, %v2007, %v3372
  %v3438 = vsel %vm93, %v2008, %v3373
  %v3439 = vsel %vm93, %v2009, %v3374
  %v3440 = vsel %vm93, %v2010, %v3375
  %v3441 = vsel %vm93, %v2011, %v3376
  %v3442 = vsel %vm93, %v2012, %v3377
  %v3443 = vsel %vm93, %v2013, %v3378
  %v3444 = vsel %vm93, %v2014, %v3379
  %v3445 = vsel %vm93, %v2015, %v3380
  %v3446 = vsel %vm93, %v2016, %v3381
  %v3447 = vsel %vm93, %v2017, %v3382
  %v3448 = vsel %vm93, %v2018, %v3383
  %v3449 = vsel %vm93, %v2019, %v3384
  %v3450 = vsel %vm93, %v2020, %v3385
  %v3451 = vsel %vm93, %v2021, %v3386
  %v3452 = vsel %vm93, %v2022, %v3387
  %v3453 = vsel %vm93, %v2023, %v3388
  %v3454 = vsel %vm93, %v2024, %v3389
  %v3455 = vsel %vm93, %v2025, %v3390
  %v3456 = vsel %vm93, %v2026, %v3391
  %v3457 = vsel %vm93, %v2027, %v3392
  %v3458 = vsel %vm93, %v2028, %v3393
  %v3459 = vsel %vm93, %v2029, %v3394
  %v3460 = vsel %vm93, %v2030, %v3395
  %v3461 = vsel %vm93, %v2031, %v3396
  %v3462 = vsel %vm93, %v2032, %v3397
  %v3463 = vsel %vm93, %v2033, %v3398
  %v3464 = vsel %vm93, %v2034, %v3399
  %v3465 = vsel %vm93, %v2035, %v3400
  %v3466 = vsel %vm93, %v2036, %v3401
  %v3467 = vsel %vm93, %v2037, %v3402
  %v3468 = vsel %vm93, %v2038, %v3403
  %v3469 = vsel %vm93, %v2039, %v3404
  %v3470 = vsel %vm93, %v2040, %v3405
  %v3471 = vsel %vm93, %v2041, %v3406
  %v3472 = vsel %vm93, %v2042, %v3407
  %v3473 = vsel %vm93, %v2043, %v3408
  %v3474 = vsel %vm93, %v2044, %v3409
  %v3475 = vsel %vm93, %v2045, %v3410
  %v3479 = vcombine.high %v86, %v86
  %v3480 = vcombine.high %v87, %v87
  %vm3483 = vcmask 15360
  %v3484 = vsel %vm3483, %v88, 0
  %vm3486 = vcmask 1041408
  %v3488 = vsel %vm3486, %v3475, 0
  %3490 = vmatprep.subr.mxu0 0.0
  %3491 = vmatpush1.msra.mxu0 %v3411
  %3492 = vmatprep.subr.mxu0 0.0
  %3493 = vmatpush1.msra.mxu0 %v3412
  %3494 = vmatprep.subr.mxu0 0.0
  %3495 = vmatpush1.msra.mxu0 %v3413
  %3496 = vmatprep.subr.mxu0 0.0
  %3497 = vmatpush1.msra.mxu0 %v3414
  %3498 = vmatprep.subr.mxu0 0.0
  %3499 = vmatpush1.msra.mxu0 %v3415
  %3500 = vmatprep.subr.mxu0 0.0
  %3501 = vmatpush1.msra.mxu0 %v3416
  %3502 = vmatprep.subr.mxu0 0.0
  %3503 = vmatpush1.msra.mxu0 %v3417
  %3504 = vmatprep.subr.mxu0 0.0
  %3505 = vmatpush1.msra.mxu0 %v3418
  %3506 = vmatprep.subr.mxu0 0.0
  %3507 = vmatpush1.msra.mxu0 %v3419
  %3508 = vmatprep.subr.mxu0 0.0
  %3509 = vmatpush1.msra.mxu0 %v3420
  %3510 = vmatprep.subr.mxu0 0.0
  %3511 = vmatpush1.msra.mxu0 %v3421
  %3512 = vmatprep.subr.mxu0 0.0
  %3513 = vmatpush1.msra.mxu0 %v3422
  %3514 = vmatprep.subr.mxu0 0.0
  %3515 = vmatpush1.msra.mxu0 %v3423
  %3516 = vmatprep.subr.mxu0 0.0
  %3517 = vmatpush1.msra.mxu0 %v3424
  %3518 = vmatprep.subr.mxu0 0.0
  %3519 = vmatpush1.msra.mxu0 %v3425
  %3520 = vmatprep.subr.mxu0 0.0
  %3521 = vmatpush1.msra.mxu0 %v3426
  %3522 = vmatprep.subr.mxu0 0.0
  %3523 = vmatpush1.msra.mxu0 %v3427
  %3524 = vmatprep.subr.mxu0 0.0
  %3525 = vmatpush1.msra.mxu0 %v3428
  %3526 = vmatprep.subr.mxu0 0.0
  %3527 = vmatpush1.msra.mxu0 %v3429
  %3528 = vmatprep.subr.mxu0 0.0
  %3529 = vmatpush1.msra.mxu0 %v3430
  %3530 = vmatprep.subr.mxu0 0.0
  %3531 = vmatpush1.msra.mxu0 %v3431
  %3532 = vmatprep.subr.mxu0 0.0
  %3533 = vmatpush1.msra.mxu0 %v3432
  %3534 = vmatprep.subr.mxu0 0.0
  %3535 = vmatpush1.msra.mxu0 %v3433
  %3536 = vmatprep.subr.mxu0 0.0
  %3537 = vmatpush1.msra.mxu0 %v3434
  %3538 = vmatprep.subr.mxu0 0.0
  %3539 = vmatpush1.msra.mxu0 %v3435
  %3540 = vmatprep.subr.mxu0 0.0
  %3541 = vmatpush1.msra.mxu0 %v3436
  %3542 = vmatprep.subr.mxu0 0.0
  %3543 = vmatpush1.msra.mxu0 %v3437
  %3544 = vmatprep.subr.mxu0 0.0
  %3545 = vmatpush1.msra.mxu0 %v3438
  %3546 = vmatprep.subr.mxu0 0.0
  %3547 = vmatpush1.msra.mxu0 %v3439
  %3548 = vmatprep.subr.mxu0 0.0
  %3549 = vmatpush1.msra.mxu0 %v3440
  %3550 = vmatprep.subr.mxu0 0.0
  %3551 = vmatpush1.msra.mxu0 %v3441
  %3552 = vmatprep.subr.mxu0 0.0
  %3553 = vmatpush1.msra.mxu0 %v3442
  %3554 = vmatprep.mubr.f32.mxu0 %v3479
  %3555 = vmatmul.mubr.f32.gmra.mrb[0].mxu0 %v86
  %v3556 = vpop.f32.mrb[0].mxu0
  %v3557 = vadd.f32 0.0, %v3556
  %v3558 = vpop.f32.mrb[0].mxu0
  %3559 = vdwg.mxu0
  %3560 = vmatprep.subr.mxu0 0.0
  %3561 = vmatpush1.msra.mxu0 %v3443
  %3562 = vmatprep.subr.mxu0 0.0
  %3563 = vmatpush1.msra.mxu0 %v3444
  %3564 = vmatprep.subr.mxu0 0.0
  %3565 = vmatpush1.msra.mxu0 %v3445
  %3566 = vmatprep.subr.mxu0 0.0
  %3567 = vmatpush1.msra.mxu0 %v3446
  %3568 = vmatprep.subr.mxu0 0.0
  %3569 = vmatpush1.msra.mxu0 %v3447
  %3570 = vmatprep.subr.mxu0 0.0
  %3571 = vmatpush1.msra.mxu0 %v3448
  %3572 = vmatprep.subr.mxu0 0.0
  %3573 = vmatpush1.msra.mxu0 %v3449
  %3574 = vmatprep.subr.mxu0 0.0
  %3575 = vmatpush1.msra.mxu0 %v3450
  %3576 = vmatprep.subr.mxu0 0.0
  %3577 = vmatpush1.msra.mxu0 %v3451
  %3578 = vmatprep.subr.mxu0 0.0
  %3579 = vmatpush1.msra.mxu0 %v3452
  %3580 = vmatprep.subr.mxu0 0.0
  %3581 = vmatpush1.msra.mxu0 %v3453
  %3582 = vmatprep.subr.mxu0 0.0
  %3583 = vmatpush1.msra.mxu0 %v3454
  %3584 = vmatprep.subr.mxu0 0.0
  %3585 = vmatpush1.msra.mxu0 %v3455
  %3586 = vmatprep.subr.mxu0 0.0
  %3587 = vmatpush1.msra.mxu0 %v3456
  %3588 = vmatprep.subr.mxu0 0.0
  %3589 = vmatpush1.msra.mxu0 %v3457
  %3590 = vmatprep.subr.mxu0 0.0
  %3591 = vmatpush1.msra.mxu0 %v3458
  %3592 = vmatprep.subr.mxu0 0.0
  %3593 = vmatpush1.msra.mxu0 %v3459
  %3594 = vmatprep.subr.mxu0 0.0
  %3595 = vmatpush1.msra.mxu0 %v3460
  %3596 = vmatprep.subr.mxu0 0.0
  %3597 = vmatpush1.msra.mxu0 %v3461
  %3598 = vmatprep.subr.mxu0 0.0
  %3599 = vmatpush1.msra.mxu0 %v3462
  %3600 = vmatprep.subr.mxu0 0.0
  %3601 = vmatpush1.msra.mxu0 %v3463
  %3602 = vmatprep.subr.mxu0 0.0
  %3603 = vmatpush1.msra.mxu0 %v3464
  %3604 = vmatprep.subr.mxu0 0.0
  %3605 = vmatpush1.msra.mxu0 %v3465
  %3606 = vmatprep.subr.mxu0 0.0
  %3607 = vmatpush1.msra.mxu0 %v3466
  %3608 = vmatprep.subr.mxu0 0.0
  %3609 = vmatpush1.msra.mxu0 %v3467
  %3610 = vmatprep.subr.mxu0 0.0
  %3611 = vmatpush1.msra.mxu0 %v3468
  %3612 = vmatprep.subr.mxu0 0.0
  %3613 = vmatpush1.msra.mxu0 %v3469
  %3614 = vmatprep.subr.mxu0 0.0
  %3615 = vmatpush1.msra.mxu0 %v3470
  %3616 = vmatprep.subr.mxu0 0.0
  %3617 = vmatpush1.msra.mxu0 %v3471
  %3618 = vmatprep.subr.mxu0 0.0
  %3619 = vmatpush1.msra.mxu0 %v3472
  %3620 = vmatprep.subr.mxu0 0.0
  %3621 = vmatpush1.msra.mxu0 %v3473
  %3622 = vmatprep.subr.mxu0 0.0
  %3623 = vmatpush1.msra.mxu0 %v3474
  %3624 = vmatprep.mubr.f32.mxu0 %v3480
  %3625 = vmatmul.mubr.f32.gmra.mrb[0].mxu0 %v87
  %v3626 = vpop.f32.mrb[0].mxu0
  %v3627 = vadd.f32 %v3557, %v3626
  %v3628 = vpop.f32.mrb[0].mxu0
  %3629 = vdwg.mxu0
  %3630 = vmatprep.subr.mxu0 0.0
  %3631 = vmatpush1.msra.mxu0 %v3488
  %3632 = vmatprep.subr.mxu0 0.0
  %3633 = vmatpush1.msra.mxu0 0.0
  %3634 = vmatprep.subr.mxu0 0.0
  %3635 = vmatpush1.msra.mxu0 0.0
  %3636 = vmatprep.subr.mxu0 0.0
  %3637 = vmatpush1.msra.mxu0 0.0
  %3638 = vmatprep.subr.mxu0 0.0
  %3639 = vmatpush1.msra.mxu0 0.0
  %3640 = vmatprep.subr.mxu0 0.0
  %3641 = vmatpush1.msra.mxu0 0.0
  %3642 = vmatprep.subr.mxu0 0.0
  %3643 = vmatpush1.msra.mxu0 0.0
  %3644 = vmatprep.subr.mxu0 0.0
  %3645 = vmatpush1.msra.mxu0 0.0
  %3646 = vmatprep.subr.mxu0 0.0
  %3647 = vmatpush1.msra.mxu0 0.0
  %3648 = vmatprep.subr.mxu0 0.0
  %3649 = vmatpush1.msra.mxu0 0.0
  %3650 = vmatprep.subr.mxu0 0.0
  %3651 = vmatpush1.msra.mxu0 0.0
  %3652 = vmatprep.subr.mxu0 0.0
  %3653 = vmatpush1.msra.mxu0 0.0
  %3654 = vmatprep.subr.mxu0 0.0
  %3655 = vmatpush1.msra.mxu0 0.0
  %3656 = vmatprep.subr.mxu0 0.0
  %3657 = vmatpush1.msra.mxu0 0.0
  %3658 = vmatprep.subr.mxu0 0.0
  %3659 = vmatpush1.msra.mxu0 0.0
  %3660 = vmatprep.subr.mxu0 0.0
  %3661 = vmatpush1.msra.mxu0 0.0
  %3662 = vmatprep.subr.mxu0 0.0
  %3663 = vmatpush1.msra.mxu0 0.0
  %3664 = vmatprep.subr.mxu0 0.0
  %3665 = vmatpush1.msra.mxu0 0.0
  %3666 = vmatprep.subr.mxu0 0.0
  %3667 = vmatpush1.msra.mxu0 0.0
  %3668 = vmatprep.subr.mxu0 0.0
  %3669 = vmatpush1.msra.mxu0 0.0
  %3670 = vmatprep.subr.mxu0 0.0
  %3671 = vmatpush1.msra.mxu0 0.0
  %3672 = vmatprep.subr.mxu0 0.0
  %3673 = vmatpush1.msra.mxu0 0.0
  %3674 = vmatprep.subr.mxu0 0.0
  %3675 = vmatpush1.msra.mxu0 0.0
  %3676 = vmatprep.subr.mxu0 0.0
  %3677 = vmatpush1.msra.mxu0 0.0
  %3678 = vmatprep.subr.mxu0 0.0
  %3679 = vmatpush1.msra.mxu0 0.0
  %3680 = vmatprep.subr.mxu0 0.0
  %3681 = vmatpush1.msra.mxu0 0.0
  %3682 = vmatprep.subr.mxu0 0.0
  %3683 = vmatpush1.msra.mxu0 0.0
  %3684 = vmatprep.subr.mxu0 0.0
  %3685 = vmatpush1.msra.mxu0 0.0
  %3686 = vmatprep.subr.mxu0 0.0
  %3687 = vmatpush1.msra.mxu0 0.0
  %3688 = vmatprep.subr.mxu0 0.0
  %3689 = vmatpush1.msra.mxu0 0.0
  %3690 = vmatprep.subr.mxu0 0.0
  %3691 = vmatpush1.msra.mxu0 0.0
  %3692 = vmatprep.subr.mxu0 0.0
  %3693 = vmatpush1.msra.mxu0 0.0
  %3694 = vmatprep.mubr.f32.mxu0 0.0
  %3695 = vmatmul.mubr.f32.gmra.mrb[0].mxu0 %v3484
  %v3696 = vpop.f32.mrb[0].mxu0
  %v3697 = vadd.f32 %v3627, %v3696
  %v3698 = vpop.f32.mrb[0].mxu0
  %3699 = vdwg.mxu0
  %v3700 = vlaneseq
  %v3701 = vshrl.u32 %v3700, 7
  %v3702 = vsub.s32 1, %v3701
  %v3703 = vrot.slane %v85, %v3702
  %v3704 = vmul.f32 %v3697, %v3703
  %v3705 = vlaneseq
  %v3706 = vshrl.u32 %v3705, 7
  %v3707 = vsub.s32 2, %v3706
  %v3708 = vrot.slane %v85, %v3707
  %v3709 = vadd.f32 %v3704, %v3708
  %3711 = vrot.lane.b32.xlu0 %v3709, 96
  %v3712 = vpop.permute.xlu0 %3711
  %v3714 = vsel %vm3486, %v3709, %v3712
  %vm3715 = vcmask 257024
  %3716 = vst.msk [vmem:[%s4] sm:$0xf] %vm3715, %v3714
  // Predicated region
  $region14: #{adapter_ao_forward.1} parent=0 // pred_check
    _
  $region15: #{adapter_ao_forward.1} parent=0 // pred_check_branch
    %3718 = sbr.rel (0) target = $region17
  $region16: #{adapter_ao_forward.1} parent=0 // pred_region
    _
  $region17: #{adapter_ao_forward.1} parent=0 // pred_fallthru
    _
  // Predicated region
  $region18: #{adapter_ao_forward.1} parent=0 // pred_check
    _
  $region19: #{adapter_ao_forward.1} parent=0 // pred_check_branch
    %3720 = sbr.rel (0) target = $region21
  $region20: #{adapter_ao_forward.1} parent=0 // pred_region
    _
  $region21: #{adapter_ao_forward.1} parent=0 // pred_fallthru
    _
  // Predicated region
  $region22: #{adapter_ao_forward.1} parent=0 // pred_check
    _
  $region23: #{adapter_ao_forward.1} parent=0 // pred_check_branch
    %3722 = sbr.rel (0) target = $region25
  $region24: #{adapter_ao_forward.1} parent=0 // pred_region
    _
  $region25: #{adapter_ao_forward.1} parent=0 // pred_fallthru
    _
  // Predicated region
  $region26: #{adapter_ao_forward.1} parent=0 // pred_check
    _
  $region27: #{adapter_ao_forward.1} parent=0 // pred_check_branch
    %3724 = sbr.rel (0) target = $region29
  $region28: #{adapter_ao_forward.1} parent=0 // pred_region
    _
  $region29: #{adapter_ao_forward.1} parent=0 // pred_fallthru
    _

</llo_original>
